<compile_context>
chip_gen: v7x
topology: tpu7x:2x2x1
jax: 0.10.0
libtpu: 0.0.40
codegen_flags: <defaults>
</compile_context>

<pallas_src>
import math
import jax
import jax.numpy as jnp
from jax import lax
from jax.experimental import pallas as pl

# --- configuration (small, consistent with the module) -----------------------
N_HEAD = 4
D_MODEL = 32            # d_model == d_k == d_v (required by the reference math)
D_K = D_MODEL
D_V = D_MODEL
B = 2                   # batch
L = 8                   # len_q == len_k == len_v
LN_EPS = 1e-6
SCALE = 1.0 / math.sqrt(D_MODEL)

BH = B * N_HEAD         # collapsed (batch, head) leading dim -> 8


# --- fused kernel: projections + attention + out-proj + residual + LayerNorm -
def mha_kernel(q_ref, k_ref, v_ref,
               w1_ref, w2_ref, w3_ref, w4_ref,
               gamma_ref, beta_ref,
               out_ref, attn_ref):
    q3 = q_ref[...]                                   # (B, L, D) f32
    k3 = k_ref[...]                                   # (B, L, D_K)
    v3 = v_ref[...]                                   # (B, L, D_V)

    def project(x3, wh):
        # x3: (B, L, Din); wh: (H, Din, Dout) head-major weight.
        # One batched MXU pass over the collapsed (b, h) batch dim; all
        # reshapes/broadcasts only touch leading dims (layout no-ops).
        din, dout = x3.shape[-1], wh.shape[-1]
        xb = jnp.broadcast_to(x3[:, None], (B, N_HEAD, L, din)).reshape(BH, L, din)
        wb = jnp.broadcast_to(wh[None], (B, N_HEAD, din, dout)).reshape(BH, din, dout)
        return lax.dot_general(xb, wb, (((2,), (1,)), ((0,), (0,))),
                               preferred_element_type=jnp.float32)

    qp = project(q3, w1_ref[...]) * SCALE             # (BH, L, D), scaled once
    kp = project(k3, w2_ref[...])                     # (BH, L, D_K)
    vp = project(v3, w3_ref[...])                     # (BH, L, D_V)

    # Scores for all (b, h) pairs in one batched dot: (BH, L, L).
    logits = lax.dot_general(qp, kp, (((2,), (2,)), ((0,), (0,))),
                             preferred_element_type=jnp.float32)

    # Softmax over the last axis (EUP exp + XLU reduces + EUP reciprocal).
    m = jnp.max(logits, axis=-1, keepdims=True)
    e = jnp.exp(logits - m)
    s = jnp.sum(e, axis=-1, keepdims=True)
    attn = e * pl.reciprocal(s, approx=False)         # exact; keeps 1e-5 tol

    attn_ref[...] = attn                              # one full-block store

    # attention @ V, batched: (BH, L, D_V).
    o = lax.dot_general(attn, vp, (((2,), (1,)), ((0,), (0,))),
                        preferred_element_type=jnp.float32)

    # fc4 as per-head batched matmul + head-sum (no lane concat, no staging).
    w4b = jnp.broadcast_to(w4_ref[...][None],
                           (B, N_HEAD, D_V, D_MODEL)).reshape(BH, D_V, D_MODEL)
    projh = lax.dot_general(o, w4b, (((2,), (1,)), ((0,), (0,))),
                            preferred_element_type=jnp.float32)      # (BH, L, Dm)
    proj = jnp.sum(projh.reshape(B, N_HEAD, L, D_MODEL), axis=1)      # (B, L, Dm)

    # dropout (eval mode -> identity), residual, LayerNorm(d_model).
    x = proj + q3
    mean = jnp.mean(x, axis=-1, keepdims=True)
    var = jnp.mean((x - mean) ** 2, axis=-1, keepdims=True)
    y = (x - mean) * lax.rsqrt(var + LN_EPS)
    out_ref[...] = y * gamma_ref[...] + beta_ref[...]                 # (B, L, Dm)

    # TODO(synk): optional `mask` argument (masked_fill with -1e6 pre-softmax)
    # and training-mode dropout are not wired in; this is the mask=None eval path.


def multi_head_attention(q, k, v, w1, w2, w3, w4, gamma, beta):
    """q, k, v: (B, L, D). Weights pre-transposed to (in_features, out_features)."""
    assert q.shape == (B, L, D_MODEL)
    assert k.shape == (B, L, D_K) and v.shape == (B, L, D_V)

    # Wrapper-side layout plumbing (free): head-major weight splits so every
    # in-kernel weight access is a whole-value batched operand (no lane slices).
    #   w1h[h] == w1[:, h*D:(h+1)*D]   (same for w2h, w3h)
    #   w4h[h] == w4[h*Dv:(h+1)*Dv, :]
    w1h = w1.reshape(D_MODEL, N_HEAD, D_MODEL).transpose(1, 0, 2)
    w2h = w2.reshape(D_K, N_HEAD, D_K).transpose(1, 0, 2)
    w3h = w3.reshape(D_V, N_HEAD, D_V).transpose(1, 0, 2)
    w4h = w4.reshape(N_HEAD, D_V, D_MODEL)
    g = gamma.reshape(1, 1, D_MODEL)
    bb = beta.reshape(1, 1, D_MODEL)

    # Single-step launch, everything resident in VMEM (total footprint ~50 KiB).
    # NOTE(v7x): keep single-TensorCore at this size; only shard a batch grid
    # axis ("parallel") once per-batch work grows well past ~10 us.
    out, attn_flat = pl.pallas_call(
        mha_kernel,
        out_shape=(jax.ShapeDtypeStruct((B, L, D_MODEL), jnp.float32),
                   jax.ShapeDtypeStruct((BH, L, L), jnp.float32)),
    )(q, k, v, w1h, w2h, w3h, w4h, g, bb)

    # Wrapper-side reshape (contiguous, free): restore the module's attn shape.
    attn = attn_flat.reshape(B, N_HEAD, L, L)
    return out, attn


# --- pure-JAX reference for correctness check --------------------------------
def reference(q, k, v, w1, w2, w3, w4, gamma, beta):
    Bb, Lq, _ = q.shape
    qp = (q @ w1).reshape(Bb, Lq, N_HEAD, D_MODEL).transpose(0, 2, 1, 3)
    kp = (k @ w2).reshape(Bb, -1, N_HEAD, D_K).transpose(0, 2, 1, 3)
    vp = (v @ w3).reshape(Bb, -1, N_HEAD, D_V).transpose(0, 2, 1, 3)
    logits = jnp.einsum('bhqd,bhkd->bhqk', qp * SCALE, kp)
    attn = jax.nn.softmax(logits, axis=-1)
    out = jnp.einsum('bhqk,bhkd->bhqd', attn, vp)
    out = out.transpose(0, 2, 1, 3).reshape(Bb, Lq, -1)
    out = out @ w4 + q
    mean = out.mean(-1, keepdims=True)
    var = ((out - mean) ** 2).mean(-1, keepdims=True)
    out = (out - mean) / jnp.sqrt(var + LN_EPS) * gamma[0] + beta[0]
    return out, attn


if __name__ == "__main__":
    key = jax.random.PRNGKey(0)
    ks = jax.random.split(key, 8)

    q = jax.random.normal(ks[0], (B, L, D_MODEL), jnp.float32)
    k = jax.random.normal(ks[1], (B, L, D_K), jnp.float32)
    v = jax.random.normal(ks[2], (B, L, D_V), jnp.float32)

    # Deterministic parameter init (nn.Linear weights, pre-transposed to x @ W).
    w1 = jax.random.normal(ks[3], (D_MODEL, N_HEAD * D_MODEL), jnp.float32) * 0.05
    w2 = jax.random.normal(ks[4], (D_K, N_HEAD * D_K), jnp.float32) * 0.05
    w3 = jax.random.normal(ks[5], (D_V, N_HEAD * D_V), jnp.float32) * 0.05
    w4 = jax.random.normal(ks[6], (N_HEAD * D_V, D_MODEL), jnp.float32) * 0.05
    gamma = jnp.ones((1, D_MODEL), jnp.float32)   # nn.LayerNorm default init
    beta = jnp.zeros((1, D_MODEL), jnp.float32)

    out, attn = multi_head_attention(q, k, v, w1, w2, w3, w4, gamma, beta)
    jax.block_until_ready((out, attn))

    out_ref, attn_ref = reference(q, k, v, w1, w2, w3, w4, gamma, beta)
    assert jnp.allclose(out, out_ref, atol=1e-4, rtol=1e-4), "output mismatch"
    assert jnp.allclose(attn, attn_ref, atol=1e-5, rtol=1e-5), "attn mismatch"

    print("KERNEL_OK")
</pallas_src>

<mosaic_0001>
module attributes {stable_mosaic.version = 11 : i64} {
  func.func @mha_kernel(%arg0: memref<2x8x32xf32, #tpu.memory_space<vmem>>, %arg1: memref<2x8x32xf32, #tpu.memory_space<vmem>>, %arg2: memref<2x8x32xf32, #tpu.memory_space<vmem>>, %arg3: memref<4x32x32xf32, #tpu.memory_space<vmem>>, %arg4: memref<4x32x32xf32, #tpu.memory_space<vmem>>, %arg5: memref<4x32x32xf32, #tpu.memory_space<vmem>>, %arg6: memref<4x32x32xf32, #tpu.memory_space<vmem>>, %arg7: memref<1x1x32xf32, #tpu.memory_space<vmem>>, %arg8: memref<1x1x32xf32, #tpu.memory_space<vmem>>, %arg9: memref<2x8x32xf32, #tpu.memory_space<vmem>>, %arg10: memref<8x8x8xf32, #tpu.memory_space<vmem>>) attributes {dimension_semantics = [], scalar_prefetch = 0 : i64, scratch_operands = 0 : i64, tpu.core_type = #tpu.core_type<tc>} {
    %c0 = arith.constant 0 : index
    %c0_0 = arith.constant 0 : index
    %c0_1 = arith.constant 0 : index
    %0 = vector.load %arg0[%c0, %c0_0, %c0_1] : memref<2x8x32xf32, #tpu.memory_space<vmem>>, vector<2x8x32xf32>
    %c0_2 = arith.constant 0 : index
    %c0_3 = arith.constant 0 : index
    %c0_4 = arith.constant 0 : index
    %1 = vector.load %arg1[%c0_2, %c0_3, %c0_4] : memref<2x8x32xf32, #tpu.memory_space<vmem>>, vector<2x8x32xf32>
    %c0_5 = arith.constant 0 : index
    %c0_6 = arith.constant 0 : index
    %c0_7 = arith.constant 0 : index
    %2 = vector.load %arg2[%c0_5, %c0_6, %c0_7] : memref<2x8x32xf32, #tpu.memory_space<vmem>>, vector<2x8x32xf32>
    %c0_8 = arith.constant 0 : index
    %c0_9 = arith.constant 0 : index
    %c0_10 = arith.constant 0 : index
    %3 = vector.load %arg3[%c0_8, %c0_9, %c0_10] : memref<4x32x32xf32, #tpu.memory_space<vmem>>, vector<4x32x32xf32>
    %4 = vector.shape_cast %0 : vector<2x8x32xf32> to vector<2x1x8x32xf32>
    %5 = vector.shape_cast %4 : vector<2x1x8x32xf32> to vector<2x1x8x32xf32>
    %6 = vector.broadcast %5 : vector<2x1x8x32xf32> to vector<2x4x8x32xf32>
    %7 = vector.shape_cast %6 : vector<2x4x8x32xf32> to vector<8x8x32xf32>
    %8 = vector.shape_cast %3 : vector<4x32x32xf32> to vector<1x4x32x32xf32>
    %9 = vector.shape_cast %8 : vector<1x4x32x32xf32> to vector<1x4x32x32xf32>
    %10 = vector.broadcast %9 : vector<1x4x32x32xf32> to vector<2x4x32x32xf32>
    %11 = vector.shape_cast %10 : vector<2x4x32x32xf32> to vector<8x32x32xf32>
    %cst = arith.constant dense<0.000000e+00> : vector<8x8x32xf32>
    %12 = tpu.matmul %7, %11, %cst {dimension_numbers = #tpu.dot_dimension_numbers<[2], [1], [1], [2], [0, 0, 0, 1, 1, 2], [0], [0]>} : vector<8x8x32xf32>, vector<8x32x32xf32>, vector<8x8x32xf32> -> vector<8x8x32xf32>
    %cst_11 = arith.constant 0.176776692 : f32
    %13 = vector.broadcast %cst_11 : f32 to vector<8x8x32xf32>
    %14 = arith.mulf %12, %13 : vector<8x8x32xf32>
    %c0_12 = arith.constant 0 : index
    %c0_13 = arith.constant 0 : index
    %c0_14 = arith.constant 0 : index
    %15 = vector.load %arg4[%c0_12, %c0_13, %c0_14] : memref<4x32x32xf32, #tpu.memory_space<vmem>>, vector<4x32x32xf32>
    %16 = vector.shape_cast %1 : vector<2x8x32xf32> to vector<2x1x8x32xf32>
    %17 = vector.shape_cast %16 : vector<2x1x8x32xf32> to vector<2x1x8x32xf32>
    %18 = vector.broadcast %17 : vector<2x1x8x32xf32> to vector<2x4x8x32xf32>
    %19 = vector.shape_cast %18 : vector<2x4x8x32xf32> to vector<8x8x32xf32>
    %20 = vector.shape_cast %15 : vector<4x32x32xf32> to vector<1x4x32x32xf32>
    %21 = vector.shape_cast %20 : vector<1x4x32x32xf32> to vector<1x4x32x32xf32>
    %22 = vector.broadcast %21 : vector<1x4x32x32xf32> to vector<2x4x32x32xf32>
    %23 = vector.shape_cast %22 : vector<2x4x32x32xf32> to vector<8x32x32xf32>
    %cst_15 = arith.constant dense<0.000000e+00> : vector<8x8x32xf32>
    %24 = tpu.matmul %19, %23, %cst_15 {dimension_numbers = #tpu.dot_dimension_numbers<[2], [1], [1], [2], [0, 0, 0, 1, 1, 2], [0], [0]>} : vector<8x8x32xf32>, vector<8x32x32xf32>, vector<8x8x32xf32> -> vector<8x8x32xf32>
    %c0_16 = arith.constant 0 : index
    %c0_17 = arith.constant 0 : index
    %c0_18 = arith.constant 0 : index
    %25 = vector.load %arg5[%c0_16, %c0_17, %c0_18] : memref<4x32x32xf32, #tpu.memory_space<vmem>>, vector<4x32x32xf32>
    %26 = vector.shape_cast %2 : vector<2x8x32xf32> to vector<2x1x8x32xf32>
    %27 = vector.shape_cast %26 : vector<2x1x8x32xf32> to vector<2x1x8x32xf32>
    %28 = vector.broadcast %27 : vector<2x1x8x32xf32> to vector<2x4x8x32xf32>
    %29 = vector.shape_cast %28 : vector<2x4x8x32xf32> to vector<8x8x32xf32>
    %30 = vector.shape_cast %25 : vector<4x32x32xf32> to vector<1x4x32x32xf32>
    %31 = vector.shape_cast %30 : vector<1x4x32x32xf32> to vector<1x4x32x32xf32>
    %32 = vector.broadcast %31 : vector<1x4x32x32xf32> to vector<2x4x32x32xf32>
    %33 = vector.shape_cast %32 : vector<2x4x32x32xf32> to vector<8x32x32xf32>
    %cst_19 = arith.constant dense<0.000000e+00> : vector<8x8x32xf32>
    %34 = tpu.matmul %29, %33, %cst_19 {dimension_numbers = #tpu.dot_dimension_numbers<[2], [1], [1], [2], [0, 0, 0, 1, 1, 2], [0], [0]>} : vector<8x8x32xf32>, vector<8x32x32xf32>, vector<8x8x32xf32> -> vector<8x8x32xf32>
    %cst_20 = arith.constant dense<0.000000e+00> : vector<8x8x8xf32>
    %35 = tpu.matmul %14, %24, %cst_20 {dimension_numbers = #tpu.dot_dimension_numbers<[2], [2], [1], [1], [0, 0, 0, 1, 1, 1], [0], [0]>} : vector<8x8x32xf32>, vector<8x8x32xf32>, vector<8x8x8xf32> -> vector<8x8x8xf32>
    %cst_21 = arith.constant dense<0xFF800000> : vector<8x8xf32>
    %36 = vector.multi_reduction <maximumf>, %35, %cst_21 [2] : vector<8x8x8xf32> to vector<8x8xf32>
    %37 = vector.shape_cast %36 : vector<8x8xf32> to vector<8x8x1xf32>
    %38 = vector.broadcast %37 : vector<8x8x1xf32> to vector<8x8x8xf32>
    %39 = arith.subf %35, %38 : vector<8x8x8xf32>
    %40 = math.exp %39 : vector<8x8x8xf32>
    %cst_22 = arith.constant dense<0.000000e+00> : vector<8x8xf32>
    %41 = vector.multi_reduction <add>, %40, %cst_22 [2] : vector<8x8x8xf32> to vector<8x8xf32>
    %42 = vector.shape_cast %41 : vector<8x8xf32> to vector<8x8x1xf32>
    %43 = tpu.reciprocal %42 : vector<8x8x1xf32> -> vector<8x8x1xf32>
    %44 = vector.broadcast %43 : vector<8x8x1xf32> to vector<8x8x8xf32>
    %45 = arith.mulf %40, %44 : vector<8x8x8xf32>
    %c0_23 = arith.constant 0 : index
    %c0_24 = arith.constant 0 : index
    %c0_25 = arith.constant 0 : index
    %46 = vector.load %arg10[%c0_23, %c0_24, %c0_25] : memref<8x8x8xf32, #tpu.memory_space<vmem>>, vector<8x8x8xf32>
    tpu.vector_store %arg10[%c0_23, %c0_24, %c0_25], %45 {strides = array<i32>} : memref<8x8x8xf32, #tpu.memory_space<vmem>>, vector<8x8x8xf32>,
    %cst_26 = arith.constant dense<0.000000e+00> : vector<8x8x32xf32>
    %47 = tpu.matmul %45, %34, %cst_26 {dimension_numbers = #tpu.dot_dimension_numbers<[2], [1], [1], [2], [0, 0, 0, 1, 1, 2], [0], [0]>} : vector<8x8x8xf32>, vector<8x8x32xf32>, vector<8x8x32xf32> -> vector<8x8x32xf32>
    %c0_27 = arith.constant 0 : index
    %c0_28 = arith.constant 0 : index
    %c0_29 = arith.constant 0 : index
    %48 = vector.load %arg6[%c0_27, %c0_28, %c0_29] : memref<4x32x32xf32, #tpu.memory_space<vmem>>, vector<4x32x32xf32>
    %49 = vector.shape_cast %48 : vector<4x32x32xf32> to vector<1x4x32x32xf32>
    %50 = vector.shape_cast %49 : vector<1x4x32x32xf32> to vector<1x4x32x32xf32>
    %51 = vector.broadcast %50 : vector<1x4x32x32xf32> to vector<2x4x32x32xf32>
    %52 = vector.shape_cast %51 : vector<2x4x32x32xf32> to vector<8x32x32xf32>
    %cst_30 = arith.constant dense<0.000000e+00> : vector<8x8x32xf32>
    %53 = tpu.matmul %47, %52, %cst_30 {dimension_numbers = #tpu.dot_dimension_numbers<[2], [1], [1], [2], [0, 0, 0, 1, 1, 2], [0], [0]>} : vector<8x8x32xf32>, vector<8x32x32xf32>, vector<8x8x32xf32> -> vector<8x8x32xf32>
    %54 = vector.shape_cast %53 : vector<8x8x32xf32> to vector<2x4x8x32xf32>
    %cst_31 = arith.constant dense<0.000000e+00> : vector<2x8x32xf32>
    %55 = vector.multi_reduction <add>, %54, %cst_31 [1] : vector<2x4x8x32xf32> to vector<2x8x32xf32>
    %56 = arith.addf %55, %0 : vector<2x8x32xf32>
    %cst_32 = arith.constant dense<0.000000e+00> : vector<2x8xf32>
    %57 = vector.multi_reduction <add>, %56, %cst_32 [2] : vector<2x8x32xf32> to vector<2x8xf32>
    %58 = vector.shape_cast %57 : vector<2x8xf32> to vector<2x8x1xf32>
    %cst_33 = arith.constant 3.200000e+01 : f32
    %59 = vector.broadcast %cst_33 : f32 to vector<2x8x1xf32>
    %60 = arith.divf %58, %59 : vector<2x8x1xf32>
    %61 = vector.broadcast %60 : vector<2x8x1xf32> to vector<2x8x32xf32>
    %62 = arith.subf %56, %61 : vector<2x8x32xf32>
    %63 = arith.mulf %62, %62 : vector<2x8x32xf32>
    %cst_34 = arith.constant dense<0.000000e+00> : vector<2x8xf32>
    %64 = vector.multi_reduction <add>, %63, %cst_34 [2] : vector<2x8x32xf32> to vector<2x8xf32>
    %65 = vector.shape_cast %64 : vector<2x8xf32> to vector<2x8x1xf32>
    %cst_35 = arith.constant 3.200000e+01 : f32
    %66 = vector.broadcast %cst_35 : f32 to vector<2x8x1xf32>
    %67 = arith.divf %65, %66 : vector<2x8x1xf32>
    %68 = vector.broadcast %60 : vector<2x8x1xf32> to vector<2x8x32xf32>
    %69 = arith.subf %56, %68 : vector<2x8x32xf32>
    %cst_36 = arith.constant 9.99999997E-7 : f32
    %70 = vector.broadcast %cst_36 : f32 to vector<2x8x1xf32>
    %71 = arith.addf %67, %70 : vector<2x8x1xf32>
    %72 = math.rsqrt %71 : vector<2x8x1xf32>
    %73 = vector.broadcast %72 : vector<2x8x1xf32> to vector<2x8x32xf32>
    %74 = arith.mulf %69, %73 : vector<2x8x32xf32>
    %c0_37 = arith.constant 0 : index
    %c0_38 = arith.constant 0 : index
    %c0_39 = arith.constant 0 : index
    %75 = vector.load %arg7[%c0_37, %c0_38, %c0_39] : memref<1x1x32xf32, #tpu.memory_space<vmem>>, vector<1x1x32xf32>
    %76 = vector.broadcast %75 : vector<1x1x32xf32> to vector<2x8x32xf32>
    %77 = arith.mulf %74, %76 : vector<2x8x32xf32>
    %c0_40 = arith.constant 0 : index
    %c0_41 = arith.constant 0 : index
    %c0_42 = arith.constant 0 : index
    %78 = vector.load %arg8[%c0_40, %c0_41, %c0_42] : memref<1x1x32xf32, #tpu.memory_space<vmem>>, vector<1x1x32xf32>
    %79 = vector.broadcast %78 : vector<1x1x32xf32> to vector<2x8x32xf32>
    %80 = arith.addf %77, %79 : vector<2x8x32xf32>
    %c0_43 = arith.constant 0 : index
    %c0_44 = arith.constant 0 : index
    %c0_45 = arith.constant 0 : index
    %81 = vector.load %arg9[%c0_43, %c0_44, %c0_45] : memref<2x8x32xf32, #tpu.memory_space<vmem>>, vector<2x8x32xf32>
    tpu.vector_store %arg9[%c0_43, %c0_44, %c0_45], %80 {strides = array<i32>} : memref<2x8x32xf32, #tpu.memory_space<vmem>>, vector<2x8x32xf32>,
    return
  }
}

</mosaic_0001>

<llo_original>
// kernel: tpu_custom_call.1
$region0: #{tpu_custom_call.1}
  #allocation0 [shape = 'u32[]', space=smem, size = 0x4, offset = 0x4, fixed_abs, tag = 'smem constant byte address 0x4 - core index']
  #allocation1 [shape = 'u32[144,128]{1,0:T(1,128)}', space=vmem, size = 0x12000, scoped, tag = 'internal scratch']
  %s0 = inlined_call_operand.hbm [shape: f32[2,8,32], index: 0, kind: input, shape index: {}]
  %s1 = inlined_call_operand.hbm [shape: f32[2,8,32], index: 1, kind: input, shape index: {}]
  %s2 = inlined_call_operand.hbm [shape: f32[2,8,32], index: 2, kind: input, shape index: {}]
  %s3 = inlined_call_operand.hbm [shape: f32[4,32,32], index: 3, kind: input, shape index: {}]
  %s4 = inlined_call_operand.hbm [shape: f32[4,32,32], index: 4, kind: input, shape index: {}]
  %s5 = inlined_call_operand.hbm [shape: f32[4,32,32], index: 5, kind: input, shape index: {}]
  %s6 = inlined_call_operand.hbm [shape: f32[4,32,32], index: 6, kind: input, shape index: {}]
  %s7 = inlined_call_operand.vmem [shape: f32[1,1,32], index: 7, kind: input, shape index: {}]
  %s8 = inlined_call_operand.vmem [shape: f32[1,1,32], index: 8, kind: input, shape index: {}]
  %s9 = inlined_call_operand.hbm [shape: f32[2,8,32], index: 9, kind: output, shape index: {0}]
  %s10 = inlined_call_operand.hbm [shape: f32[8,8,8], index: 10, kind: output, shape index: {1}]
  %11 = xla_tuple %s9, %s10
  %s12 = sld [smem:[#allocation0]]
  $region82: #{tpu_custom_call.1} parent=0
    _
  %s14 = ssub.s32 1, %s12
  %s15 = scalar_select 0, %s14, %s12
  $region1: #{tpu_custom_call.1} parent=0
    #allocation2 [shape = 'u8[8192]{0}', space=vmem, size = 0x2000, scoped, tag = 'input window, operand 0, single buffered']
    #allocation3 [shape = 's32[1]{0}', space=sflag, size = 0x4, scoped, tag = 'scoped memory for tpu_custom_call.1']
    #allocation4 [shape = 's32[1]{0}', space=sflag, size = 0x4, scoped, tag = 'scoped memory for tpu_custom_call.1']
    #allocation5 [shape = 'u8[8192]{0}', space=vmem, size = 0x2000, scoped, tag = 'input window, operand 1, single buffered']
    #allocation6 [shape = 's32[1]{0}', space=sflag, size = 0x4, scoped, tag = 'scoped memory for tpu_custom_call.1']
    #allocation7 [shape = 'u8[8192]{0}', space=vmem, size = 0x2000, scoped, tag = 'input window, operand 2, single buffered']
    #allocation8 [shape = 'u8[65536]{0}', space=vmem, size = 0x10000, scoped, tag = 'input window, operand 3, single buffered']
    #allocation9 [shape = 's32[1]{0}', space=sflag, size = 0x4, scoped, tag = 'scoped memory for tpu_custom_call.1']
    #allocation10 [shape = 'u8[65536]{0}', space=vmem, size = 0x10000, scoped, tag = 'input window, operand 4, single buffered']
    #allocation11 [shape = 'u8[65536]{0}', space=vmem, size = 0x10000, scoped, tag = 'input window, operand 5, single buffered']
    #allocation12 [shape = 's32[1]{0}', space=sflag, size = 0x4, scoped, tag = 'scoped memory for tpu_custom_call.1']
    #allocation13 [shape = 'u8[65536]{0}', space=vmem, size = 0x10000, scoped, tag = 'input window, operand 6, single buffered']
    #allocation14 [shape = 'u8[8192]{0}', space=vmem, size = 0x2000, scoped, tag = 'output window, operand 0, single buffered']
    #allocation15 [shape = 'u8[32768]{0}', space=vmem, size = 0x8000, scoped, tag = 'output window, operand 1, single buffered']
    #allocation16 [shape = 's32[1]{0}', space=sflag, size = 0x4, scoped, tag = 'scoped memory for tpu_custom_call.1']
    %16 = vsyncpa [#allocation3], 0
    %17 = vsyncpa [#allocation6], 0
    %18 = vsyncpa [#allocation9], 0
    %19 = vsyncpa [#allocation12], 0
    %20 = vsyncpa [#allocation4], 0
    %21 = vsyncpa [#allocation16], 0
    // Predicated region
    $region2: #{tpu_custom_call.1} parent=1 // pred_check
      _
    $region3: #{tpu_custom_call.1} parent=1 // pred_check_branch
      %23 = sbr.rel (0) target = $region5
    $region4: #{tpu_custom_call.1} parent=1 // pred_region
      %s25 = ssub.s32 256, 256
      %26 = vsyncadd [#allocation3], %s25
      %s27 = sshll.u32 [#allocation2], 4
      %s28 = int_to_ptr.vmem [resolvable:$true] %s27
      %33 = dma.hbm_to_vmem [thread:$0]  %s0, 256, %s28, [#allocation3], 128, 128, 8
    $region5: #{tpu_custom_call.1} parent=1 // pred_fallthru
      _
    // Predicated region
    $region6: #{tpu_custom_call.1} parent=1 // pred_check
      _
    $region7: #{tpu_custom_call.1} parent=1 // pred_check_branch
      %35 = sbr.rel (0) target = $region9
    $region8: #{tpu_custom_call.1} parent=1 // pred_region
      %s37 = ssub.s32 256, 256
      %38 = vsyncadd [#allocation6], %s37
      %s39 = sshll.u32 [#allocation5], 4
      %s40 = int_to_ptr.vmem [resolvable:$true] %s39
      %45 = dma.hbm_to_vmem [thread:$0]  %s1, 256, %s40, [#allocation6], 128, 128, 8
    $region9: #{tpu_custom_call.1} parent=1 // pred_fallthru
      _
    // Predicated region
    $region10: #{tpu_custom_call.1} parent=1 // pred_check
      _
    $region11: #{tpu_custom_call.1} parent=1 // pred_check_branch
      %47 = sbr.rel (0) target = $region13
    $region12: #{tpu_custom_call.1} parent=1 // pred_region
      %s49 = ssub.s32 256, 256
      %50 = vsyncadd [#allocation6], %s49
      %s51 = sshll.u32 [#allocation7], 4
      %s52 = int_to_ptr.vmem [resolvable:$true] %s51
      %57 = dma.hbm_to_vmem [thread:$0]  %s2, 256, %s52, [#allocation6], 128, 128, 8
    $region13: #{tpu_custom_call.1} parent=1 // pred_fallthru
      _
    // Predicated region
    $region14: #{tpu_custom_call.1} parent=1 // pred_check
      _
    $region15: #{tpu_custom_call.1} parent=1 // pred_check_branch
      %59 = sbr.rel (0) target = $region17
    $region16: #{tpu_custom_call.1} parent=1 // pred_region
      %s61 = ssub.s32 2048, 2048
      %62 = vsyncadd [#allocation9], %s61
      %s63 = sshll.u32 [#allocation8], 4
      %s64 = int_to_ptr.vmem [resolvable:$true] %s63
      %69 = dma.hbm_to_vmem [thread:$0]  %s3, 2048, %s64, [#allocation9], 128, 128, 8
    $region17: #{tpu_custom_call.1} parent=1 // pred_fallthru
      _
    // Predicated region
    $region18: #{tpu_custom_call.1} parent=1 // pred_check
      _
    $region19: #{tpu_custom_call.1} parent=1 // pred_check_branch
      %71 = sbr.rel (0) target = $region21
    $region20: #{tpu_custom_call.1} parent=1 // pred_region
      %s73 = ssub.s32 2048, 2048
      %74 = vsyncadd [#allocation9], %s73
      %s75 = sshll.u32 [#allocation10], 4
      %s76 = int_to_ptr.vmem [resolvable:$true] %s75
      %81 = dma.hbm_to_vmem [thread:$0]  %s4, 2048, %s76, [#allocation9], 128, 128, 8
    $region21: #{tpu_custom_call.1} parent=1 // pred_fallthru
      _
    // Predicated region
    $region22: #{tpu_custom_call.1} parent=1 // pred_check
      _
    $region23: #{tpu_custom_call.1} parent=1 // pred_check_branch
      %83 = sbr.rel (0) target = $region25
    $region24: #{tpu_custom_call.1} parent=1 // pred_region
      %s85 = ssub.s32 2048, 2048
      %86 = vsyncadd [#allocation12], %s85
      %s87 = sshll.u32 [#allocation11], 4
      %s88 = int_to_ptr.vmem [resolvable:$true] %s87
      %93 = dma.hbm_to_vmem [thread:$0]  %s5, 2048, %s88, [#allocation12], 128, 128, 8
    $region25: #{tpu_custom_call.1} parent=1 // pred_fallthru
      _
    // Predicated region
    $region26: #{tpu_custom_call.1} parent=1 // pred_check
      _
    $region27: #{tpu_custom_call.1} parent=1 // pred_check_branch
      %95 = sbr.rel (0) target = $region29
    $region28: #{tpu_custom_call.1} parent=1 // pred_region
      %s97 = ssub.s32 2048, 2048
      %98 = vsyncadd [#allocation12], %s97
      %s99 = sshll.u32 [#allocation13], 4
      %s100 = int_to_ptr.vmem [resolvable:$true] %s99
      %105 = dma.hbm_to_vmem [thread:$0]  %s6, 2048, %s100, [#allocation12], 128, 128, 8
    $region29: #{tpu_custom_call.1} parent=1 // pred_fallthru
      _
    // Predicated region
    $region30: #{tpu_custom_call.1} parent=1 // pred_check
      _
    $region31: #{tpu_custom_call.1} parent=1 // pred_check_branch
      %107 = sbr.rel (0) target = $region33
    $region32: #{tpu_custom_call.1} parent=1 // pred_region
      _
    $region33: #{tpu_custom_call.1} parent=1 // pred_fallthru
      _
    // Predicated region
    $region34: #{tpu_custom_call.1} parent=1 // pred_check
      _
    $region35: #{tpu_custom_call.1} parent=1 // pred_check_branch
      %109 = sbr.rel (0) target = $region37
    $region36: #{tpu_custom_call.1} parent=1 // pred_region
      _
    $region37: #{tpu_custom_call.1} parent=1 // pred_fallthru
      _
    // Predicated region
    $region38: #{tpu_custom_call.1} parent=1 // pred_check
      _
    $region39: #{tpu_custom_call.1} parent=1 // pred_check_branch
      %111 = sbr.rel (0) target = $region41
    $region40: #{tpu_custom_call.1} parent=1 // pred_region
      %112 = dma.done [#allocation3], 256
    $region41: #{tpu_custom_call.1} parent=1 // pred_fallthru
      _
    // Predicated region
    $region42: #{tpu_custom_call.1} parent=1 // pred_check
      _
    $region43: #{tpu_custom_call.1} parent=1 // pred_check_branch
      %114 = sbr.rel (0) target = $region45
    $region44: #{tpu_custom_call.1} parent=1 // pred_region
      %115 = dma.done [#allocation6], 256
    $region45: #{tpu_custom_call.1} parent=1 // pred_fallthru
      _
    // Predicated region
    $region46: #{tpu_custom_call.1} parent=1 // pred_check
      _
    $region47: #{tpu_custom_call.1} parent=1 // pred_check_branch
      %117 = sbr.rel (0) target = $region49
    $region48: #{tpu_custom_call.1} parent=1 // pred_region
      %118 = dma.done [#allocation6], 256
    $region49: #{tpu_custom_call.1} parent=1 // pred_fallthru
      _
    // Predicated region
    $region50: #{tpu_custom_call.1} parent=1 // pred_check
      _
    $region51: #{tpu_custom_call.1} parent=1 // pred_check_branch
      %120 = sbr.rel (0) target = $region53
    $region52: #{tpu_custom_call.1} parent=1 // pred_region
      %121 = dma.done [#allocation9], 2048
    $region53: #{tpu_custom_call.1} parent=1 // pred_fallthru
      _
    // Predicated region
    $region54: #{tpu_custom_call.1} parent=1 // pred_check
      _
    $region55: #{tpu_custom_call.1} parent=1 // pred_check_branch
      %123 = sbr.rel (0) target = $region57
    $region56: #{tpu_custom_call.1} parent=1 // pred_region
      %124 = dma.done [#allocation9], 2048
    $region57: #{tpu_custom_call.1} parent=1 // pred_fallthru
      _
    // Predicated region
    $region58: #{tpu_custom_call.1} parent=1 // pred_check
      _
    $region59: #{tpu_custom_call.1} parent=1 // pred_check_branch
      %126 = sbr.rel (0) target = $region61
    $region60: #{tpu_custom_call.1} parent=1 // pred_region
      %127 = dma.done [#allocation12], 2048
    $region61: #{tpu_custom_call.1} parent=1 // pred_fallthru
      _
    // Predicated region
    $region62: #{tpu_custom_call.1} parent=1 // pred_check
      _
    $region63: #{tpu_custom_call.1} parent=1 // pred_check_branch
      %129 = sbr.rel (0) target = $region65
    $region64: #{tpu_custom_call.1} parent=1 // pred_region
      %130 = dma.done [#allocation12], 2048
    $region65: #{tpu_custom_call.1} parent=1 // pred_fallthru
      _
    %v131 = vld [vmem:[#allocation2] sm:$0xff]
    %v132 = vld [vmem:[#allocation2 + $0x8] sm:$0xff]
    %v133 = vld [vmem:[#allocation5] sm:$0xff]
    %v134 = vld [vmem:[#allocation5 + $0x8] sm:$0xff]
    %v135 = vld [vmem:[#allocation7] sm:$0xff]
    %v136 = vld [vmem:[#allocation7 + $0x8] sm:$0xff]
    %v137 = vld [vmem:[#allocation8] sm:$0xff]
    %v138 = vld [vmem:[#allocation8 + $0x8] sm:$0xff]
    %v139 = vld [vmem:[#allocation8 + $0x10] sm:$0xff]
    %v140 = vld [vmem:[#allocation8 + $0x18] sm:$0xff]
    %v141 = vld [vmem:[#allocation8 + $0x20] sm:$0xff]
    %v142 = vld [vmem:[#allocation8 + $0x28] sm:$0xff]
    %v143 = vld [vmem:[#allocation8 + $0x30] sm:$0xff]
    %v144 = vld [vmem:[#allocation8 + $0x38] sm:$0xff]
    %v145 = vld [vmem:[#allocation8 + $0x40] sm:$0xff]
    %v146 = vld [vmem:[#allocation8 + $0x48] sm:$0xff]
    %v147 = vld [vmem:[#allocation8 + $0x50] sm:$0xff]
    %v148 = vld [vmem:[#allocation8 + $0x58] sm:$0xff]
    %v149 = vld [vmem:[#allocation8 + $0x60] sm:$0xff]
    %v150 = vld [vmem:[#allocation8 + $0x68] sm:$0xff]
    %v151 = vld [vmem:[#allocation8 + $0x70] sm:$0xff]
    %v152 = vld [vmem:[#allocation8 + $0x78] sm:$0xff]
    %vm153 = vcmask 261120
    %v155 = vsel %vm153, %v131, 0
    %157 = vmatprep.subr.mxu0 0.0
    %158 = vmatpush1.msra.mxu0 %v137
    %159 = vmatprep.subr.mxu0 0.0
    %160 = vmatpush1.msra.mxu0 %v138
    %161 = vmatprep.subr.mxu0 0.0
    %162 = vmatpush1.msra.mxu0 %v139
    %163 = vmatprep.subr.mxu0 0.0
    %164 = vmatpush1.msra.mxu0 %v140
    %165 = vmatprep.subr.mxu0 0.0
    %166 = vmatpush1.msra.mxu0 0.0
    %167 = vmatprep.subr.mxu0 0.0
    %168 = vmatpush1.msra.mxu0 0.0
    %169 = vmatprep.subr.mxu0 0.0
    %170 = vmatpush1.msra.mxu0 0.0
    %171 = vmatprep.subr.mxu0 0.0
    %172 = vmatpush1.msra.mxu0 0.0
    %173 = vmatprep.subr.mxu0 0.0
    %174 = vmatpush1.msra.mxu0 0.0
    %175 = vmatprep.subr.mxu0 0.0
    %176 = vmatpush1.msra.mxu0 0.0
    %177 = vmatprep.subr.mxu0 0.0
    %178 = vmatpush1.msra.mxu0 0.0
    %179 = vmatprep.subr.mxu0 0.0
    %180 = vmatpush1.msra.mxu0 0.0
    %181 = vmatprep.subr.mxu0 0.0
    %182 = vmatpush1.msra.mxu0 0.0
    %183 = vmatprep.subr.mxu0 0.0
    %184 = vmatpush1.msra.mxu0 0.0
    %185 = vmatprep.subr.mxu0 0.0
    %186 = vmatpush1.msra.mxu0 0.0
    %187 = vmatprep.subr.mxu0 0.0
    %188 = vmatpush1.msra.mxu0 0.0
    %189 = vmatprep.subr.mxu0 0.0
    %190 = vmatpush1.msra.mxu0 0.0
    %191 = vmatprep.subr.mxu0 0.0
    %192 = vmatpush1.msra.mxu0 0.0
    %193 = vmatprep.subr.mxu0 0.0
    %194 = vmatpush1.msra.mxu0 0.0
    %195 = vmatprep.subr.mxu0 0.0
    %196 = vmatpush1.msra.mxu0 0.0
    %197 = vmatprep.subr.mxu0 0.0
    %198 = vmatpush1.msra.mxu0 0.0
    %199 = vmatprep.subr.mxu0 0.0
    %200 = vmatpush1.msra.mxu0 0.0
    %201 = vmatprep.subr.mxu0 0.0
    %202 = vmatpush1.msra.mxu0 0.0
    %203 = vmatprep.subr.mxu0 0.0
    %204 = vmatpush1.msra.mxu0 0.0
    %205 = vmatprep.subr.mxu0 0.0
    %206 = vmatpush1.msra.mxu0 0.0
    %207 = vmatprep.subr.mxu0 0.0
    %208 = vmatpush1.msra.mxu0 0.0
    %209 = vmatprep.subr.mxu0 0.0
    %210 = vmatpush1.msra.mxu0 0.0
    %211 = vmatprep.subr.mxu0 0.0
    %212 = vmatpush1.msra.mxu0 0.0
    %213 = vmatprep.subr.mxu0 0.0
    %214 = vmatpush1.msra.mxu0 0.0
    %215 = vmatprep.subr.mxu0 0.0
    %216 = vmatpush1.msra.mxu0 0.0
    %217 = vmatprep.subr.mxu0 0.0
    %218 = vmatpush1.msra.mxu0 0.0
    %219 = vmatprep.subr.mxu0 0.0
    %220 = vmatpush1.msra.mxu0 0.0
    %221 = vmatprep.mubr.f32.mxu0 0.0
    %222 = vmatmul.mubr.f32.gmra.mrb[0].mxu0 %v155
    %v223 = vpop.f32.mrb[0].mxu0
    %v224 = vadd.f32 0.0, %v223
    %v225 = vpop.f32.mrb[0].mxu0
    %226 = vdwg.mxu0
    %227 = vmatprep.subr.mxu0 0.0
    %228 = vmatpush1.msra.mxu0 %v141
    %229 = vmatprep.subr.mxu0 0.0
    %230 = vmatpush1.msra.mxu0 %v142
    %231 = vmatprep.subr.mxu0 0.0
    %232 = vmatpush1.msra.mxu0 %v143
    %233 = vmatprep.subr.mxu0 0.0
    %234 = vmatpush1.msra.mxu0 %v144
    %235 = vmatprep.subr.mxu0 0.0
    %236 = vmatpush1.msra.mxu0 0.0
    %237 = vmatprep.subr.mxu0 0.0
    %238 = vmatpush1.msra.mxu0 0.0
    %239 = vmatprep.subr.mxu0 0.0
    %240 = vmatpush1.msra.mxu0 0.0
    %241 = vmatprep.subr.mxu0 0.0
    %242 = vmatpush1.msra.mxu0 0.0
    %243 = vmatprep.subr.mxu0 0.0
    %244 = vmatpush1.msra.mxu0 0.0
    %245 = vmatprep.subr.mxu0 0.0
    %246 = vmatpush1.msra.mxu0 0.0
    %247 = vmatprep.subr.mxu0 0.0
    %248 = vmatpush1.msra.mxu0 0.0
    %249 = vmatprep.subr.mxu0 0.0
    %250 = vmatpush1.msra.mxu0 0.0
    %251 = vmatprep.subr.mxu0 0.0
    %252 = vmatpush1.msra.mxu0 0.0
    %253 = vmatprep.subr.mxu0 0.0
    %254 = vmatpush1.msra.mxu0 0.0
    %255 = vmatprep.subr.mxu0 0.0
    %256 = vmatpush1.msra.mxu0 0.0
    %257 = vmatprep.subr.mxu0 0.0
    %258 = vmatpush1.msra.mxu0 0.0
    %259 = vmatprep.subr.mxu0 0.0
    %260 = vmatpush1.msra.mxu0 0.0
    %261 = vmatprep.subr.mxu0 0.0
    %262 = vmatpush1.msra.mxu0 0.0
    %263 = vmatprep.subr.mxu0 0.0
    %264 = vmatpush1.msra.mxu0 0.0
    %265 = vmatprep.subr.mxu0 0.0
    %266 = vmatpush1.msra.mxu0 0.0
    %267 = vmatprep.subr.mxu0 0.0
    %268 = vmatpush1.msra.mxu0 0.0
    %269 = vmatprep.subr.mxu0 0.0
    %270 = vmatpush1.msra.mxu0 0.0
    %271 = vmatprep.subr.mxu0 0.0
    %272 = vmatpush1.msra.mxu0 0.0
    %273 = vmatprep.subr.mxu0 0.0
    %274 = vmatpush1.msra.mxu0 0.0
    %275 = vmatprep.subr.mxu0 0.0
    %276 = vmatpush1.msra.mxu0 0.0
    %277 = vmatprep.subr.mxu0 0.0
    %278 = vmatpush1.msra.mxu0 0.0
    %279 = vmatprep.subr.mxu0 0.0
    %280 = vmatpush1.msra.mxu0 0.0
    %281 = vmatprep.subr.mxu0 0.0
    %282 = vmatpush1.msra.mxu0 0.0
    %283 = vmatprep.subr.mxu0 0.0
    %284 = vmatpush1.msra.mxu0 0.0
    %285 = vmatprep.subr.mxu0 0.0
    %286 = vmatpush1.msra.mxu0 0.0
    %287 = vmatprep.subr.mxu0 0.0
    %288 = vmatpush1.msra.mxu0 0.0
    %289 = vmatprep.subr.mxu0 0.0
    %290 = vmatpush1.msra.mxu0 0.0
    %291 = vmatprep.mubr.f32.mxu0 0.0
    %292 = vmatmul.mubr.f32.gmra.mrb[0].mxu0 %v155
    %v293 = vpop.f32.mrb[0].mxu0
    %v294 = vadd.f32 0.0, %v293
    %v295 = vpop.f32.mrb[0].mxu0
    %296 = vdwg.mxu0
    %297 = vmatprep.subr.mxu0 0.0
    %298 = vmatpush1.msra.mxu0 %v145
    %299 = vmatprep.subr.mxu0 0.0
    %300 = vmatpush1.msra.mxu0 %v146
    %301 = vmatprep.subr.mxu0 0.0
    %302 = vmatpush1.msra.mxu0 %v147
    %303 = vmatprep.subr.mxu0 0.0
    %304 = vmatpush1.msra.mxu0 %v148
    %305 = vmatprep.subr.mxu0 0.0
    %306 = vmatpush1.msra.mxu0 0.0
    %307 = vmatprep.subr.mxu0 0.0
    %308 = vmatpush1.msra.mxu0 0.0
    %309 = vmatprep.subr.mxu0 0.0
    %310 = vmatpush1.msra.mxu0 0.0
    %311 = vmatprep.subr.mxu0 0.0
    %312 = vmatpush1.msra.mxu0 0.0
    %313 = vmatprep.subr.mxu0 0.0
    %314 = vmatpush1.msra.mxu0 0.0
    %315 = vmatprep.subr.mxu0 0.0
    %316 = vmatpush1.msra.mxu0 0.0
    %317 = vmatprep.subr.mxu0 0.0
    %318 = vmatpush1.msra.mxu0 0.0
    %319 = vmatprep.subr.mxu0 0.0
    %320 = vmatpush1.msra.mxu0 0.0
    %321 = vmatprep.subr.mxu0 0.0
    %322 = vmatpush1.msra.mxu0 0.0
    %323 = vmatprep.subr.mxu0 0.0
    %324 = vmatpush1.msra.mxu0 0.0
    %325 = vmatprep.subr.mxu0 0.0
    %326 = vmatpush1.msra.mxu0 0.0
    %327 = vmatprep.subr.mxu0 0.0
    %328 = vmatpush1.msra.mxu0 0.0
    %329 = vmatprep.subr.mxu0 0.0
    %330 = vmatpush1.msra.mxu0 0.0
    %331 = vmatprep.subr.mxu0 0.0
    %332 = vmatpush1.msra.mxu0 0.0
    %333 = vmatprep.subr.mxu0 0.0
    %334 = vmatpush1.msra.mxu0 0.0
    %335 = vmatprep.subr.mxu0 0.0
    %336 = vmatpush1.msra.mxu0 0.0
    %337 = vmatprep.subr.mxu0 0.0
    %338 = vmatpush1.msra.mxu0 0.0
    %339 = vmatprep.subr.mxu0 0.0
    %340 = vmatpush1.msra.mxu0 0.0
    %341 = vmatprep.subr.mxu0 0.0
    %342 = vmatpush1.msra.mxu0 0.0
    %343 = vmatprep.subr.mxu0 0.0
    %344 = vmatpush1.msra.mxu0 0.0
    %345 = vmatprep.subr.mxu0 0.0
    %346 = vmatpush1.msra.mxu0 0.0
    %347 = vmatprep.subr.mxu0 0.0
    %348 = vmatpush1.msra.mxu0 0.0
    %349 = vmatprep.subr.mxu0 0.0
    %350 = vmatpush1.msra.mxu0 0.0
    %351 = vmatprep.subr.mxu0 0.0
    %352 = vmatpush1.msra.mxu0 0.0
    %353 = vmatprep.subr.mxu0 0.0
    %354 = vmatpush1.msra.mxu0 0.0
    %355 = vmatprep.subr.mxu0 0.0
    %356 = vmatpush1.msra.mxu0 0.0
    %357 = vmatprep.subr.mxu0 0.0
    %358 = vmatpush1.msra.mxu0 0.0
    %359 = vmatprep.subr.mxu0 0.0
    %360 = vmatpush1.msra.mxu0 0.0
    %361 = vmatprep.mubr.f32.mxu0 0.0
    %362 = vmatmul.mubr.f32.gmra.mrb[0].mxu0 %v155
    %v363 = vpop.f32.mrb[0].mxu0
    %v364 = vadd.f32 0.0, %v363
    %v365 = vpop.f32.mrb[0].mxu0
    %366 = vdwg.mxu0
    %367 = vmatprep.subr.mxu0 0.0
    %368 = vmatpush1.msra.mxu0 %v149
    %369 = vmatprep.subr.mxu0 0.0
    %370 = vmatpush1.msra.mxu0 %v150
    %371 = vmatprep.subr.mxu0 0.0
    %372 = vmatpush1.msra.mxu0 %v151
    %373 = vmatprep.subr.mxu0 0.0
    %374 = vmatpush1.msra.mxu0 %v152
    %375 = vmatprep.subr.mxu0 0.0
    %376 = vmatpush1.msra.mxu0 0.0
    %377 = vmatprep.subr.mxu0 0.0
    %378 = vmatpush1.msra.mxu0 0.0
    %379 = vmatprep.subr.mxu0 0.0
    %380 = vmatpush1.msra.mxu0 0.0
    %381 = vmatprep.subr.mxu0 0.0
    %382 = vmatpush1.msra.mxu0 0.0
    %383 = vmatprep.subr.mxu0 0.0
    %384 = vmatpush1.msra.mxu0 0.0
    %385 = vmatprep.subr.mxu0 0.0
    %386 = vmatpush1.msra.mxu0 0.0
    %387 = vmatprep.subr.mxu0 0.0
    %388 = vmatpush1.msra.mxu0 0.0
    %389 = vmatprep.subr.mxu0 0.0
    %390 = vmatpush1.msra.mxu0 0.0
    %391 = vmatprep.subr.mxu0 0.0
    %392 = vmatpush1.msra.mxu0 0.0
    %393 = vmatprep.subr.mxu0 0.0
    %394 = vmatpush1.msra.mxu0 0.0
    %395 = vmatprep.subr.mxu0 0.0
    %396 = vmatpush1.msra.mxu0 0.0
    %397 = vmatprep.subr.mxu0 0.0
    %398 = vmatpush1.msra.mxu0 0.0
    %399 = vmatprep.subr.mxu0 0.0
    %400 = vmatpush1.msra.mxu0 0.0
    %401 = vmatprep.subr.mxu0 0.0
    %402 = vmatpush1.msra.mxu0 0.0
    %403 = vmatprep.subr.mxu0 0.0
    %404 = vmatpush1.msra.mxu0 0.0
    %405 = vmatprep.subr.mxu0 0.0
    %406 = vmatpush1.msra.mxu0 0.0
    %407 = vmatprep.subr.mxu0 0.0
    %408 = vmatpush1.msra.mxu0 0.0
    %409 = vmatprep.subr.mxu0 0.0
    %410 = vmatpush1.msra.mxu0 0.0
    %411 = vmatprep.subr.mxu0 0.0
    %412 = vmatpush1.msra.mxu0 0.0
    %413 = vmatprep.subr.mxu0 0.0
    %414 = vmatpush1.msra.mxu0 0.0
    %415 = vmatprep.subr.mxu0 0.0
    %416 = vmatpush1.msra.mxu0 0.0
    %417 = vmatprep.subr.mxu0 0.0
    %418 = vmatpush1.msra.mxu0 0.0
    %419 = vmatprep.subr.mxu0 0.0
    %420 = vmatpush1.msra.mxu0 0.0
    %421 = vmatprep.subr.mxu0 0.0
    %422 = vmatpush1.msra.mxu0 0.0
    %423 = vmatprep.subr.mxu0 0.0
    %424 = vmatpush1.msra.mxu0 0.0
    %425 = vmatprep.subr.mxu0 0.0
    %426 = vmatpush1.msra.mxu0 0.0
    %427 = vmatprep.subr.mxu0 0.0
    %428 = vmatpush1.msra.mxu0 0.0
    %429 = vmatprep.subr.mxu0 0.0
    %430 = vmatpush1.msra.mxu0 0.0
    %431 = vmatprep.mubr.f32.mxu0 0.0
    %432 = vmatmul.mubr.f32.gmra.mrb[0].mxu0 %v155
    %v433 = vpop.f32.mrb[0].mxu0
    %v434 = vadd.f32 0.0, %v433
    %v435 = vpop.f32.mrb[0].mxu0
    %436 = vdwg.mxu0
    %v438 = vsel %vm153, %v132, 0
    %440 = vmatprep.subr.mxu0 0.0
    %441 = vmatpush1.msra.mxu0 %v137
    %442 = vmatprep.subr.mxu0 0.0
    %443 = vmatpush1.msra.mxu0 %v138
    %444 = vmatprep.subr.mxu0 0.0
    %445 = vmatpush1.msra.mxu0 %v139
    %446 = vmatprep.subr.mxu0 0.0
    %447 = vmatpush1.msra.mxu0 %v140
    %448 = vmatprep.subr.mxu0 0.0
    %449 = vmatpush1.msra.mxu0 0.0
    %450 = vmatprep.subr.mxu0 0.0
    %451 = vmatpush1.msra.mxu0 0.0
    %452 = vmatprep.subr.mxu0 0.0
    %453 = vmatpush1.msra.mxu0 0.0
    %454 = vmatprep.subr.mxu0 0.0
    %455 = vmatpush1.msra.mxu0 0.0
    %456 = vmatprep.subr.mxu0 0.0
    %457 = vmatpush1.msra.mxu0 0.0
    %458 = vmatprep.subr.mxu0 0.0
    %459 = vmatpush1.msra.mxu0 0.0
    %460 = vmatprep.subr.mxu0 0.0
    %461 = vmatpush1.msra.mxu0 0.0
    %462 = vmatprep.subr.mxu0 0.0
    %463 = vmatpush1.msra.mxu0 0.0
    %464 = vmatprep.subr.mxu0 0.0
    %465 = vmatpush1.msra.mxu0 0.0
    %466 = vmatprep.subr.mxu0 0.0
    %467 = vmatpush1.msra.mxu0 0.0
    %468 = vmatprep.subr.mxu0 0.0
    %469 = vmatpush1.msra.mxu0 0.0
    %470 = vmatprep.subr.mxu0 0.0
    %471 = vmatpush1.msra.mxu0 0.0
    %472 = vmatprep.subr.mxu0 0.0
    %473 = vmatpush1.msra.mxu0 0.0
    %474 = vmatprep.subr.mxu0 0.0
    %475 = vmatpush1.msra.mxu0 0.0
    %476 = vmatprep.subr.mxu0 0.0
    %477 = vmatpush1.msra.mxu0 0.0
    %478 = vmatprep.subr.mxu0 0.0
    %479 = vmatpush1.msra.mxu0 0.0
    %480 = vmatprep.subr.mxu0 0.0
    %481 = vmatpush1.msra.mxu0 0.0
    %482 = vmatprep.subr.mxu0 0.0
    %483 = vmatpush1.msra.mxu0 0.0
    %484 = vmatprep.subr.mxu0 0.0
    %485 = vmatpush1.msra.mxu0 0.0
    %486 = vmatprep.subr.mxu0 0.0
    %487 = vmatpush1.msra.mxu0 0.0
    %488 = vmatprep.subr.mxu0 0.0
    %489 = vmatpush1.msra.mxu0 0.0
    %490 = vmatprep.subr.mxu0 0.0
    %491 = vmatpush1.msra.mxu0 0.0
    %492 = vmatprep.subr.mxu0 0.0
    %493 = vmatpush1.msra.mxu0 0.0
    %494 = vmatprep.subr.mxu0 0.0
    %495 = vmatpush1.msra.mxu0 0.0
    %496 = vmatprep.subr.mxu0 0.0
    %497 = vmatpush1.msra.mxu0 0.0
    %498 = vmatprep.subr.mxu0 0.0
    %499 = vmatpush1.msra.mxu0 0.0
    %500 = vmatprep.subr.mxu0 0.0
    %501 = vmatpush1.msra.mxu0 0.0
    %502 = vmatprep.subr.mxu0 0.0
    %503 = vmatpush1.msra.mxu0 0.0
    %504 = vmatprep.mubr.f32.mxu0 0.0
    %505 = vmatmul.mubr.f32.gmra.mrb[0].mxu0 %v438
    %v506 = vpop.f32.mrb[0].mxu0
    %v507 = vadd.f32 0.0, %v506
    %v508 = vpop.f32.mrb[0].mxu0
    %509 = vdwg.mxu0
    %510 = vmatprep.subr.mxu0 0.0
    %511 = vmatpush1.msra.mxu0 %v141
    %512 = vmatprep.subr.mxu0 0.0
    %513 = vmatpush1.msra.mxu0 %v142
    %514 = vmatprep.subr.mxu0 0.0
    %515 = vmatpush1.msra.mxu0 %v143
    %516 = vmatprep.subr.mxu0 0.0
    %517 = vmatpush1.msra.mxu0 %v144
    %518 = vmatprep.subr.mxu0 0.0
    %519 = vmatpush1.msra.mxu0 0.0
    %520 = vmatprep.subr.mxu0 0.0
    %521 = vmatpush1.msra.mxu0 0.0
    %522 = vmatprep.subr.mxu0 0.0
    %523 = vmatpush1.msra.mxu0 0.0
    %524 = vmatprep.subr.mxu0 0.0
    %525 = vmatpush1.msra.mxu0 0.0
    %526 = vmatprep.subr.mxu0 0.0
    %527 = vmatpush1.msra.mxu0 0.0
    %528 = vmatprep.subr.mxu0 0.0
    %529 = vmatpush1.msra.mxu0 0.0
    %530 = vmatprep.subr.mxu0 0.0
    %531 = vmatpush1.msra.mxu0 0.0
    %532 = vmatprep.subr.mxu0 0.0
    %533 = vmatpush1.msra.mxu0 0.0
    %534 = vmatprep.subr.mxu0 0.0
    %535 = vmatpush1.msra.mxu0 0.0
    %536 = vmatprep.subr.mxu0 0.0
    %537 = vmatpush1.msra.mxu0 0.0
    %538 = vmatprep.subr.mxu0 0.0
    %539 = vmatpush1.msra.mxu0 0.0
    %540 = vmatprep.subr.mxu0 0.0
    %541 = vmatpush1.msra.mxu0 0.0
    %542 = vmatprep.subr.mxu0 0.0
    %543 = vmatpush1.msra.mxu0 0.0
    %544 = vmatprep.subr.mxu0 0.0
    %545 = vmatpush1.msra.mxu0 0.0
    %546 = vmatprep.subr.mxu0 0.0
    %547 = vmatpush1.msra.mxu0 0.0
    %548 = vmatprep.subr.mxu0 0.0
    %549 = vmatpush1.msra.mxu0 0.0
    %550 = vmatprep.subr.mxu0 0.0
    %551 = vmatpush1.msra.mxu0 0.0
    %552 = vmatprep.subr.mxu0 0.0
    %553 = vmatpush1.msra.mxu0 0.0
    %554 = vmatprep.subr.mxu0 0.0
    %555 = vmatpush1.msra.mxu0 0.0
    %556 = vmatprep.subr.mxu0 0.0
    %557 = vmatpush1.msra.mxu0 0.0
    %558 = vmatprep.subr.mxu0 0.0
    %559 = vmatpush1.msra.mxu0 0.0
    %560 = vmatprep.subr.mxu0 0.0
    %561 = vmatpush1.msra.mxu0 0.0
    %562 = vmatprep.subr.mxu0 0.0
    %563 = vmatpush1.msra.mxu0 0.0
    %564 = vmatprep.subr.mxu0 0.0
    %565 = vmatpush1.msra.mxu0 0.0
    %566 = vmatprep.subr.mxu0 0.0
    %567 = vmatpush1.msra.mxu0 0.0
    %568 = vmatprep.subr.mxu0 0.0
    %569 = vmatpush1.msra.mxu0 0.0
    %570 = vmatprep.subr.mxu0 0.0
    %571 = vmatpush1.msra.mxu0 0.0
    %572 = vmatprep.subr.mxu0 0.0
    %573 = vmatpush1.msra.mxu0 0.0
    %574 = vmatprep.mubr.f32.mxu0 0.0
    %575 = vmatmul.mubr.f32.gmra.mrb[0].mxu0 %v438
    %v576 = vpop.f32.mrb[0].mxu0
    %v577 = vadd.f32 0.0, %v576
    %v578 = vpop.f32.mrb[0].mxu0
    %579 = vdwg.mxu0
    %580 = vmatprep.subr.mxu0 0.0
    %581 = vmatpush1.msra.mxu0 %v145
    %582 = vmatprep.subr.mxu0 0.0
    %583 = vmatpush1.msra.mxu0 %v146
    %584 = vmatprep.subr.mxu0 0.0
    %585 = vmatpush1.msra.mxu0 %v147
    %586 = vmatprep.subr.mxu0 0.0
    %587 = vmatpush1.msra.mxu0 %v148
    %588 = vmatprep.subr.mxu0 0.0
    %589 = vmatpush1.msra.mxu0 0.0
    %590 = vmatprep.subr.mxu0 0.0
    %591 = vmatpush1.msra.mxu0 0.0
    %592 = vmatprep.subr.mxu0 0.0
    %593 = vmatpush1.msra.mxu0 0.0
    %594 = vmatprep.subr.mxu0 0.0
    %595 = vmatpush1.msra.mxu0 0.0
    %596 = vmatprep.subr.mxu0 0.0
    %597 = vmatpush1.msra.mxu0 0.0
    %598 = vmatprep.subr.mxu0 0.0
    %599 = vmatpush1.msra.mxu0 0.0
    %600 = vmatprep.subr.mxu0 0.0
    %601 = vmatpush1.msra.mxu0 0.0
    %602 = vmatprep.subr.mxu0 0.0
    %603 = vmatpush1.msra.mxu0 0.0
    %604 = vmatprep.subr.mxu0 0.0
    %605 = vmatpush1.msra.mxu0 0.0
    %606 = vmatprep.subr.mxu0 0.0
    %607 = vmatpush1.msra.mxu0 0.0
    %608 = vmatprep.subr.mxu0 0.0
    %609 = vmatpush1.msra.mxu0 0.0
    %610 = vmatprep.subr.mxu0 0.0
    %611 = vmatpush1.msra.mxu0 0.0
    %612 = vmatprep.subr.mxu0 0.0
    %613 = vmatpush1.msra.mxu0 0.0
    %614 = vmatprep.subr.mxu0 0.0
    %615 = vmatpush1.msra.mxu0 0.0
    %616 = vmatprep.subr.mxu0 0.0
    %617 = vmatpush1.msra.mxu0 0.0
    %618 = vmatprep.subr.mxu0 0.0
    %619 = vmatpush1.msra.mxu0 0.0
    %620 = vmatprep.subr.mxu0 0.0
    %621 = vmatpush1.msra.mxu0 0.0
    %622 = vmatprep.subr.mxu0 0.0
    %623 = vmatpush1.msra.mxu0 0.0
    %624 = vmatprep.subr.mxu0 0.0
    %625 = vmatpush1.msra.mxu0 0.0
    %626 = vmatprep.subr.mxu0 0.0
    %627 = vmatpush1.msra.mxu0 0.0
    %628 = vmatprep.subr.mxu0 0.0
    %629 = vmatpush1.msra.mxu0 0.0
    %630 = vmatprep.subr.mxu0 0.0
    %631 = vmatpush1.msra.mxu0 0.0
    %632 = vmatprep.subr.mxu0 0.0
    %633 = vmatpush1.msra.mxu0 0.0
    %634 = vmatprep.subr.mxu0 0.0
    %635 = vmatpush1.msra.mxu0 0.0
    %636 = vmatprep.subr.mxu0 0.0
    %637 = vmatpush1.msra.mxu0 0.0
    %638 = vmatprep.subr.mxu0 0.0
    %639 = vmatpush1.msra.mxu0 0.0
    %640 = vmatprep.subr.mxu0 0.0
    %641 = vmatpush1.msra.mxu0 0.0
    %642 = vmatprep.subr.mxu0 0.0
    %643 = vmatpush1.msra.mxu0 0.0
    %644 = vmatprep.mubr.f32.mxu0 0.0
    %645 = vmatmul.mubr.f32.gmra.mrb[0].mxu0 %v438
    %v646 = vpop.f32.mrb[0].mxu0
    %v647 = vadd.f32 0.0, %v646
    %v648 = vpop.f32.mrb[0].mxu0
    %649 = vdwg.mxu0
    %650 = vmatprep.subr.mxu0 0.0
    %651 = vmatpush1.msra.mxu0 %v149
    %652 = vmatprep.subr.mxu0 0.0
    %653 = vmatpush1.msra.mxu0 %v150
    %654 = vmatprep.subr.mxu0 0.0
    %655 = vmatpush1.msra.mxu0 %v151
    %656 = vmatprep.subr.mxu0 0.0
    %657 = vmatpush1.msra.mxu0 %v152
    %658 = vmatprep.subr.mxu0 0.0
    %659 = vmatpush1.msra.mxu0 0.0
    %660 = vmatprep.subr.mxu0 0.0
    %661 = vmatpush1.msra.mxu0 0.0
    %662 = vmatprep.subr.mxu0 0.0
    %663 = vmatpush1.msra.mxu0 0.0
    %664 = vmatprep.subr.mxu0 0.0
    %665 = vmatpush1.msra.mxu0 0.0
    %666 = vmatprep.subr.mxu0 0.0
    %667 = vmatpush1.msra.mxu0 0.0
    %668 = vmatprep.subr.mxu0 0.0
    %669 = vmatpush1.msra.mxu0 0.0
    %670 = vmatprep.subr.mxu0 0.0
    %671 = vmatpush1.msra.mxu0 0.0
    %672 = vmatprep.subr.mxu0 0.0
    %673 = vmatpush1.msra.mxu0 0.0
    %674 = vmatprep.subr.mxu0 0.0
    %675 = vmatpush1.msra.mxu0 0.0
    %676 = vmatprep.subr.mxu0 0.0
    %677 = vmatpush1.msra.mxu0 0.0
    %678 = vmatprep.subr.mxu0 0.0
    %679 = vmatpush1.msra.mxu0 0.0
    %680 = vmatprep.subr.mxu0 0.0
    %681 = vmatpush1.msra.mxu0 0.0
    %682 = vmatprep.subr.mxu0 0.0
    %683 = vmatpush1.msra.mxu0 0.0
    %684 = vmatprep.subr.mxu0 0.0
    %685 = vmatpush1.msra.mxu0 0.0
    %686 = vmatprep.subr.mxu0 0.0
    %687 = vmatpush1.msra.mxu0 0.0
    %688 = vmatprep.subr.mxu0 0.0
    %689 = vmatpush1.msra.mxu0 0.0
    %690 = vmatprep.subr.mxu0 0.0
    %691 = vmatpush1.msra.mxu0 0.0
    %692 = vmatprep.subr.mxu0 0.0
    %693 = vmatpush1.msra.mxu0 0.0
    %694 = vmatprep.subr.mxu0 0.0
    %695 = vmatpush1.msra.mxu0 0.0
    %696 = vmatprep.subr.mxu0 0.0
    %697 = vmatpush1.msra.mxu0 0.0
    %698 = vmatprep.subr.mxu0 0.0
    %699 = vmatpush1.msra.mxu0 0.0
    %700 = vmatprep.subr.mxu0 0.0
    %701 = vmatpush1.msra.mxu0 0.0
    %702 = vmatprep.subr.mxu0 0.0
    %703 = vmatpush1.msra.mxu0 0.0
    %704 = vmatprep.subr.mxu0 0.0
    %705 = vmatpush1.msra.mxu0 0.0
    %706 = vmatprep.subr.mxu0 0.0
    %707 = vmatpush1.msra.mxu0 0.0
    %708 = vmatprep.subr.mxu0 0.0
    %709 = vmatpush1.msra.mxu0 0.0
    %710 = vmatprep.subr.mxu0 0.0
    %711 = vmatpush1.msra.mxu0 0.0
    %712 = vmatprep.subr.mxu0 0.0
    %713 = vmatpush1.msra.mxu0 0.0
    %714 = vmatprep.mubr.f32.mxu0 0.0
    %715 = vmatmul.mubr.f32.gmra.mrb[0].mxu0 %v438
    %v716 = vpop.f32.mrb[0].mxu0
    %v717 = vadd.f32 0.0, %v716
    %v718 = vpop.f32.mrb[0].mxu0
    %719 = vdwg.mxu0
    %v720 = vmul.f32 %v224, 0.17677669
    %v721 = vmul.f32 %v294, 0.17677669
    %v722 = vmul.f32 %v364, 0.17677669
    %v723 = vmul.f32 %v434, 0.17677669
    %v724 = vmul.f32 %v507, 0.17677669
    %v725 = vmul.f32 %v577, 0.17677669
    %v726 = vmul.f32 %v647, 0.17677669
    %v727 = vmul.f32 %v717, 0.17677669
    %v728 = vld [vmem:[#allocation10] sm:$0xff]
    %v729 = vld [vmem:[#allocation10 + $0x8] sm:$0xff]
    %v730 = vld [vmem:[#allocation10 + $0x10] sm:$0xff]
    %v731 = vld [vmem:[#allocation10 + $0x18] sm:$0xff]
    %v732 = vld [vmem:[#allocation10 + $0x20] sm:$0xff]
    %v733 = vld [vmem:[#allocation10 + $0x28] sm:$0xff]
    %v734 = vld [vmem:[#allocation10 + $0x30] sm:$0xff]
    %v735 = vld [vmem:[#allocation10 + $0x38] sm:$0xff]
    %v736 = vld [vmem:[#allocation10 + $0x40] sm:$0xff]
    %v737 = vld [vmem:[#allocation10 + $0x48] sm:$0xff]
    %v738 = vld [vmem:[#allocation10 + $0x50] sm:$0xff]
    %v739 = vld [vmem:[#allocation10 + $0x58] sm:$0xff]
    %v740 = vld [vmem:[#allocation10 + $0x60] sm:$0xff]
    %v741 = vld [vmem:[#allocation10 + $0x68] sm:$0xff]
    %v742 = vld [vmem:[#allocation10 + $0x70] sm:$0xff]
    %v743 = vld [vmem:[#allocation10 + $0x78] sm:$0xff]
    %v745 = vsel %vm153, %v133, 0
    %747 = vmatprep.subr.mxu0 0.0
    %748 = vmatpush1.msra.mxu0 %v728
    %749 = vmatprep.subr.mxu0 0.0
    %750 = vmatpush1.msra.mxu0 %v729
    %751 = vmatprep.subr.mxu0 0.0
    %752 = vmatpush1.msra.mxu0 %v730
    %753 = vmatprep.subr.mxu0 0.0
    %754 = vmatpush1.msra.mxu0 %v731
    %755 = vmatprep.subr.mxu0 0.0
    %756 = vmatpush1.msra.mxu0 0.0
    %757 = vmatprep.subr.mxu0 0.0
    %758 = vmatpush1.msra.mxu0 0.0
    %759 = vmatprep.subr.mxu0 0.0
    %760 = vmatpush1.msra.mxu0 0.0
    %761 = vmatprep.subr.mxu0 0.0
    %762 = vmatpush1.msra.mxu0 0.0
    %763 = vmatprep.subr.mxu0 0.0
    %764 = vmatpush1.msra.mxu0 0.0
    %765 = vmatprep.subr.mxu0 0.0
    %766 = vmatpush1.msra.mxu0 0.0
    %767 = vmatprep.subr.mxu0 0.0
    %768 = vmatpush1.msra.mxu0 0.0
    %769 = vmatprep.subr.mxu0 0.0
    %770 = vmatpush1.msra.mxu0 0.0
    %771 = vmatprep.subr.mxu0 0.0
    %772 = vmatpush1.msra.mxu0 0.0
    %773 = vmatprep.subr.mxu0 0.0
    %774 = vmatpush1.msra.mxu0 0.0
    %775 = vmatprep.subr.mxu0 0.0
    %776 = vmatpush1.msra.mxu0 0.0
    %777 = vmatprep.subr.mxu0 0.0
    %778 = vmatpush1.msra.mxu0 0.0
    %779 = vmatprep.subr.mxu0 0.0
    %780 = vmatpush1.msra.mxu0 0.0
    %781 = vmatprep.subr.mxu0 0.0
    %782 = vmatpush1.msra.mxu0 0.0
    %783 = vmatprep.subr.mxu0 0.0
    %784 = vmatpush1.msra.mxu0 0.0
    %785 = vmatprep.subr.mxu0 0.0
    %786 = vmatpush1.msra.mxu0 0.0
    %787 = vmatprep.subr.mxu0 0.0
    %788 = vmatpush1.msra.mxu0 0.0
    %789 = vmatprep.subr.mxu0 0.0
    %790 = vmatpush1.msra.mxu0 0.0
    %791 = vmatprep.subr.mxu0 0.0
    %792 = vmatpush1.msra.mxu0 0.0
    %793 = vmatprep.subr.mxu0 0.0
    %794 = vmatpush1.msra.mxu0 0.0
    %795 = vmatprep.subr.mxu0 0.0
    %796 = vmatpush1.msra.mxu0 0.0
    %797 = vmatprep.subr.mxu0 0.0
    %798 = vmatpush1.msra.mxu0 0.0
    %799 = vmatprep.subr.mxu0 0.0
    %800 = vmatpush1.msra.mxu0 0.0
    %801 = vmatprep.subr.mxu0 0.0
    %802 = vmatpush1.msra.mxu0 0.0
    %803 = vmatprep.subr.mxu0 0.0
    %804 = vmatpush1.msra.mxu0 0.0
    %805 = vmatprep.subr.mxu0 0.0
    %806 = vmatpush1.msra.mxu0 0.0
    %807 = vmatprep.subr.mxu0 0.0
    %808 = vmatpush1.msra.mxu0 0.0
    %809 = vmatprep.subr.mxu0 0.0
    %810 = vmatpush1.msra.mxu0 0.0
    %811 = vmatprep.mubr.f32.mxu0 0.0
    %812 = vmatmul.mubr.f32.gmra.mrb[0].mxu0 %v745
    %v813 = vpop.f32.mrb[0].mxu0
    %v814 = vadd.f32 0.0, %v813
    %v815 = vpop.f32.mrb[0].mxu0
    %816 = vdwg.mxu0
    %817 = vmatprep.subr.mxu0 0.0
    %818 = vmatpush1.msra.mxu0 %v732
    %819 = vmatprep.subr.mxu0 0.0
    %820 = vmatpush1.msra.mxu0 %v733
    %821 = vmatprep.subr.mxu0 0.0
    %822 = vmatpush1.msra.mxu0 %v734
    %823 = vmatprep.subr.mxu0 0.0
    %824 = vmatpush1.msra.mxu0 %v735
    %825 = vmatprep.subr.mxu0 0.0
    %826 = vmatpush1.msra.mxu0 0.0
    %827 = vmatprep.subr.mxu0 0.0
    %828 = vmatpush1.msra.mxu0 0.0
    %829 = vmatprep.subr.mxu0 0.0
    %830 = vmatpush1.msra.mxu0 0.0
    %831 = vmatprep.subr.mxu0 0.0
    %832 = vmatpush1.msra.mxu0 0.0
    %833 = vmatprep.subr.mxu0 0.0
    %834 = vmatpush1.msra.mxu0 0.0
    %835 = vmatprep.subr.mxu0 0.0
    %836 = vmatpush1.msra.mxu0 0.0
    %837 = vmatprep.subr.mxu0 0.0
    %838 = vmatpush1.msra.mxu0 0.0
    %839 = vmatprep.subr.mxu0 0.0
    %840 = vmatpush1.msra.mxu0 0.0
    %841 = vmatprep.subr.mxu0 0.0
    %842 = vmatpush1.msra.mxu0 0.0
    %843 = vmatprep.subr.mxu0 0.0
    %844 = vmatpush1.msra.mxu0 0.0
    %845 = vmatprep.subr.mxu0 0.0
    %846 = vmatpush1.msra.mxu0 0.0
    %847 = vmatprep.subr.mxu0 0.0
    %848 = vmatpush1.msra.mxu0 0.0
    %849 = vmatprep.subr.mxu0 0.0
    %850 = vmatpush1.msra.mxu0 0.0
    %851 = vmatprep.subr.mxu0 0.0
    %852 = vmatpush1.msra.mxu0 0.0
    %853 = vmatprep.subr.mxu0 0.0
    %854 = vmatpush1.msra.mxu0 0.0
    %855 = vmatprep.subr.mxu0 0.0
    %856 = vmatpush1.msra.mxu0 0.0
    %857 = vmatprep.subr.mxu0 0.0
    %858 = vmatpush1.msra.mxu0 0.0
    %859 = vmatprep.subr.mxu0 0.0
    %860 = vmatpush1.msra.mxu0 0.0
    %861 = vmatprep.subr.mxu0 0.0
    %862 = vmatpush1.msra.mxu0 0.0
    %863 = vmatprep.subr.mxu0 0.0
    %864 = vmatpush1.msra.mxu0 0.0
    %865 = vmatprep.subr.mxu0 0.0
    %866 = vmatpush1.msra.mxu0 0.0
    %867 = vmatprep.subr.mxu0 0.0
    %868 = vmatpush1.msra.mxu0 0.0
    %869 = vmatprep.subr.mxu0 0.0
    %870 = vmatpush1.msra.mxu0 0.0
    %871 = vmatprep.subr.mxu0 0.0
    %872 = vmatpush1.msra.mxu0 0.0
    %873 = vmatprep.subr.mxu0 0.0
    %874 = vmatpush1.msra.mxu0 0.0
    %875 = vmatprep.subr.mxu0 0.0
    %876 = vmatpush1.msra.mxu0 0.0
    %877 = vmatprep.subr.mxu0 0.0
    %878 = vmatpush1.msra.mxu0 0.0
    %879 = vmatprep.subr.mxu0 0.0
    %880 = vmatpush1.msra.mxu0 0.0
    %881 = vmatprep.mubr.f32.mxu0 0.0
    %882 = vmatmul.mubr.f32.gmra.mrb[0].mxu0 %v745
    %v883 = vpop.f32.mrb[0].mxu0
    %v884 = vadd.f32 0.0, %v883
    %v885 = vpop.f32.mrb[0].mxu0
    %886 = vdwg.mxu0
    %887 = vmatprep.subr.mxu0 0.0
    %888 = vmatpush1.msra.mxu0 %v736
    %889 = vmatprep.subr.mxu0 0.0
    %890 = vmatpush1.msra.mxu0 %v737
    %891 = vmatprep.subr.mxu0 0.0
    %892 = vmatpush1.msra.mxu0 %v738
    %893 = vmatprep.subr.mxu0 0.0
    %894 = vmatpush1.msra.mxu0 %v739
    %895 = vmatprep.subr.mxu0 0.0
    %896 = vmatpush1.msra.mxu0 0.0
    %897 = vmatprep.subr.mxu0 0.0
    %898 = vmatpush1.msra.mxu0 0.0
    %899 = vmatprep.subr.mxu0 0.0
    %900 = vmatpush1.msra.mxu0 0.0
    %901 = vmatprep.subr.mxu0 0.0
    %902 = vmatpush1.msra.mxu0 0.0
    %903 = vmatprep.subr.mxu0 0.0
    %904 = vmatpush1.msra.mxu0 0.0
    %905 = vmatprep.subr.mxu0 0.0
    %906 = vmatpush1.msra.mxu0 0.0
    %907 = vmatprep.subr.mxu0 0.0
    %908 = vmatpush1.msra.mxu0 0.0
    %909 = vmatprep.subr.mxu0 0.0
    %910 = vmatpush1.msra.mxu0 0.0
    %911 = vmatprep.subr.mxu0 0.0
    %912 = vmatpush1.msra.mxu0 0.0
    %913 = vmatprep.subr.mxu0 0.0
    %914 = vmatpush1.msra.mxu0 0.0
    %915 = vmatprep.subr.mxu0 0.0
    %916 = vmatpush1.msra.mxu0 0.0
    %917 = vmatprep.subr.mxu0 0.0
    %918 = vmatpush1.msra.mxu0 0.0
    %919 = vmatprep.subr.mxu0 0.0
    %920 = vmatpush1.msra.mxu0 0.0
    %921 = vmatprep.subr.mxu0 0.0
    %922 = vmatpush1.msra.mxu0 0.0
    %923 = vmatprep.subr.mxu0 0.0
    %924 = vmatpush1.msra.mxu0 0.0
    %925 = vmatprep.subr.mxu0 0.0
    %926 = vmatpush1.msra.mxu0 0.0
    %927 = vmatprep.subr.mxu0 0.0
    %928 = vmatpush1.msra.mxu0 0.0
    %929 = vmatprep.subr.mxu0 0.0
    %930 = vmatpush1.msra.mxu0 0.0
    %931 = vmatprep.subr.mxu0 0.0
    %932 = vmatpush1.msra.mxu0 0.0
    %933 = vmatprep.subr.mxu0 0.0
    %934 = vmatpush1.msra.mxu0 0.0
    %935 = vmatprep.subr.mxu0 0.0
    %936 = vmatpush1.msra.mxu0 0.0
    %937 = vmatprep.subr.mxu0 0.0
    %938 = vmatpush1.msra.mxu0 0.0
    %939 = vmatprep.subr.mxu0 0.0
    %940 = vmatpush1.msra.mxu0 0.0
    %941 = vmatprep.subr.mxu0 0.0
    %942 = vmatpush1.msra.mxu0 0.0
    %943 = vmatprep.subr.mxu0 0.0
    %944 = vmatpush1.msra.mxu0 0.0
    %945 = vmatprep.subr.mxu0 0.0
    %946 = vmatpush1.msra.mxu0 0.0
    %947 = vmatprep.subr.mxu0 0.0
    %948 = vmatpush1.msra.mxu0 0.0
    %949 = vmatprep.subr.mxu0 0.0
    %950 = vmatpush1.msra.mxu0 0.0
    %951 = vmatprep.mubr.f32.mxu0 0.0
    %952 = vmatmul.mubr.f32.gmra.mrb[0].mxu0 %v745
    %v953 = vpop.f32.mrb[0].mxu0
    %v954 = vadd.f32 0.0, %v953
    %v955 = vpop.f32.mrb[0].mxu0
    %956 = vdwg.mxu0
    %957 = vmatprep.subr.mxu0 0.0
    %958 = vmatpush1.msra.mxu0 %v740
    %959 = vmatprep.subr.mxu0 0.0
    %960 = vmatpush1.msra.mxu0 %v741
    %961 = vmatprep.subr.mxu0 0.0
    %962 = vmatpush1.msra.mxu0 %v742
    %963 = vmatprep.subr.mxu0 0.0
    %964 = vmatpush1.msra.mxu0 %v743
    %965 = vmatprep.subr.mxu0 0.0
    %966 = vmatpush1.msra.mxu0 0.0
    %967 = vmatprep.subr.mxu0 0.0
    %968 = vmatpush1.msra.mxu0 0.0
    %969 = vmatprep.subr.mxu0 0.0
    %970 = vmatpush1.msra.mxu0 0.0
    %971 = vmatprep.subr.mxu0 0.0
    %972 = vmatpush1.msra.mxu0 0.0
    %973 = vmatprep.subr.mxu0 0.0
    %974 = vmatpush1.msra.mxu0 0.0
    %975 = vmatprep.subr.mxu0 0.0
    %976 = vmatpush1.msra.mxu0 0.0
    %977 = vmatprep.subr.mxu0 0.0
    %978 = vmatpush1.msra.mxu0 0.0
    %979 = vmatprep.subr.mxu0 0.0
    %980 = vmatpush1.msra.mxu0 0.0
    %981 = vmatprep.subr.mxu0 0.0
    %982 = vmatpush1.msra.mxu0 0.0
    %983 = vmatprep.subr.mxu0 0.0
    %984 = vmatpush1.msra.mxu0 0.0
    %985 = vmatprep.subr.mxu0 0.0
    %986 = vmatpush1.msra.mxu0 0.0
    %987 = vmatprep.subr.mxu0 0.0
    %988 = vmatpush1.msra.mxu0 0.0
    %989 = vmatprep.subr.mxu0 0.0
    %990 = vmatpush1.msra.mxu0 0.0
    %991 = vmatprep.subr.mxu0 0.0
    %992 = vmatpush1.msra.mxu0 0.0
    %993 = vmatprep.subr.mxu0 0.0
    %994 = vmatpush1.msra.mxu0 0.0
    %995 = vmatprep.subr.mxu0 0.0
    %996 = vmatpush1.msra.mxu0 0.0
    %997 = vmatprep.subr.mxu0 0.0
    %998 = vmatpush1.msra.mxu0 0.0
    %999 = vmatprep.subr.mxu0 0.0
    %1000 = vmatpush1.msra.mxu0 0.0
    %1001 = vmatprep.subr.mxu0 0.0
    %1002 = vmatpush1.msra.mxu0 0.0
    %1003 = vmatprep.subr.mxu0 0.0
    %1004 = vmatpush1.msra.mxu0 0.0
    %1005 = vmatprep.subr.mxu0 0.0
    %1006 = vmatpush1.msra.mxu0 0.0
    %1007 = vmatprep.subr.mxu0 0.0
    %1008 = vmatpush1.msra.mxu0 0.0
    %1009 = vmatprep.subr.mxu0 0.0
    %1010 = vmatpush1.msra.mxu0 0.0
    %1011 = vmatprep.subr.mxu0 0.0
    %1012 = vmatpush1.msra.mxu0 0.0
    %1013 = vmatprep.subr.mxu0 0.0
    %1014 = vmatpush1.msra.mxu0 0.0
    %1015 = vmatprep.subr.mxu0 0.0
    %1016 = vmatpush1.msra.mxu0 0.0
    %1017 = vmatprep.subr.mxu0 0.0
    %1018 = vmatpush1.msra.mxu0 0.0
    %1019 = vmatprep.subr.mxu0 0.0
    %1020 = vmatpush1.msra.mxu0 0.0
    %1021 = vmatprep.mubr.f32.mxu0 0.0
    %1022 = vmatmul.mubr.f32.gmra.mrb[0].mxu0 %v745
    %v1023 = vpop.f32.mrb[0].mxu0
    %v1024 = vadd.f32 0.0, %v1023
    %v1025 = vpop.f32.mrb[0].mxu0
    %1026 = vdwg.mxu0
    %v1028 = vsel %vm153, %v134, 0
    %1030 = vmatprep.subr.mxu0 0.0
    %1031 = vmatpush1.msra.mxu0 %v728
    %1032 = vmatprep.subr.mxu0 0.0
    %1033 = vmatpush1.msra.mxu0 %v729
    %1034 = vmatprep.subr.mxu0 0.0
    %1035 = vmatpush1.msra.mxu0 %v730
    %1036 = vmatprep.subr.mxu0 0.0
    %1037 = vmatpush1.msra.mxu0 %v731
    %1038 = vmatprep.subr.mxu0 0.0
    %1039 = vmatpush1.msra.mxu0 0.0
    %1040 = vmatprep.subr.mxu0 0.0
    %1041 = vmatpush1.msra.mxu0 0.0
    %1042 = vmatprep.subr.mxu0 0.0
    %1043 = vmatpush1.msra.mxu0 0.0
    %1044 = vmatprep.subr.mxu0 0.0
    %1045 = vmatpush1.msra.mxu0 0.0
    %1046 = vmatprep.subr.mxu0 0.0
    %1047 = vmatpush1.msra.mxu0 0.0
    %1048 = vmatprep.subr.mxu0 0.0
    %1049 = vmatpush1.msra.mxu0 0.0
    %1050 = vmatprep.subr.mxu0 0.0
    %1051 = vmatpush1.msra.mxu0 0.0
    %1052 = vmatprep.subr.mxu0 0.0
    %1053 = vmatpush1.msra.mxu0 0.0
    %1054 = vmatprep.subr.mxu0 0.0
    %1055 = vmatpush1.msra.mxu0 0.0
    %1056 = vmatprep.subr.mxu0 0.0
    %1057 = vmatpush1.msra.mxu0 0.0
    %1058 = vmatprep.subr.mxu0 0.0
    %1059 = vmatpush1.msra.mxu0 0.0
    %1060 = vmatprep.subr.mxu0 0.0
    %1061 = vmatpush1.msra.mxu0 0.0
    %1062 = vmatprep.subr.mxu0 0.0
    %1063 = vmatpush1.msra.mxu0 0.0
    %1064 = vmatprep.subr.mxu0 0.0
    %1065 = vmatpush1.msra.mxu0 0.0
    %1066 = vmatprep.subr.mxu0 0.0
    %1067 = vmatpush1.msra.mxu0 0.0
    %1068 = vmatprep.subr.mxu0 0.0
    %1069 = vmatpush1.msra.mxu0 0.0
    %1070 = vmatprep.subr.mxu0 0.0
    %1071 = vmatpush1.msra.mxu0 0.0
    %1072 = vmatprep.subr.mxu0 0.0
    %1073 = vmatpush1.msra.mxu0 0.0
    %1074 = vmatprep.subr.mxu0 0.0
    %1075 = vmatpush1.msra.mxu0 0.0
    %1076 = vmatprep.subr.mxu0 0.0
    %1077 = vmatpush1.msra.mxu0 0.0
    %1078 = vmatprep.subr.mxu0 0.0
    %1079 = vmatpush1.msra.mxu0 0.0
    %1080 = vmatprep.subr.mxu0 0.0
    %1081 = vmatpush1.msra.mxu0 0.0
    %1082 = vmatprep.subr.mxu0 0.0
    %1083 = vmatpush1.msra.mxu0 0.0
    %1084 = vmatprep.subr.mxu0 0.0
    %1085 = vmatpush1.msra.mxu0 0.0
    %1086 = vmatprep.subr.mxu0 0.0
    %1087 = vmatpush1.msra.mxu0 0.0
    %1088 = vmatprep.subr.mxu0 0.0
    %1089 = vmatpush1.msra.mxu0 0.0
    %1090 = vmatprep.subr.mxu0 0.0
    %1091 = vmatpush1.msra.mxu0 0.0
    %1092 = vmatprep.subr.mxu0 0.0
    %1093 = vmatpush1.msra.mxu0 0.0
    %1094 = vmatprep.mubr.f32.mxu0 0.0
    %1095 = vmatmul.mubr.f32.gmra.mrb[0].mxu0 %v1028
    %v1096 = vpop.f32.mrb[0].mxu0
    %v1097 = vadd.f32 0.0, %v1096
    %v1098 = vpop.f32.mrb[0].mxu0
    %1099 = vdwg.mxu0
    %1100 = vmatprep.subr.mxu0 0.0
    %1101 = vmatpush1.msra.mxu0 %v732
    %1102 = vmatprep.subr.mxu0 0.0
    %1103 = vmatpush1.msra.mxu0 %v733
    %1104 = vmatprep.subr.mxu0 0.0
    %1105 = vmatpush1.msra.mxu0 %v734
    %1106 = vmatprep.subr.mxu0 0.0
    %1107 = vmatpush1.msra.mxu0 %v735
    %1108 = vmatprep.subr.mxu0 0.0
    %1109 = vmatpush1.msra.mxu0 0.0
    %1110 = vmatprep.subr.mxu0 0.0
    %1111 = vmatpush1.msra.mxu0 0.0
    %1112 = vmatprep.subr.mxu0 0.0
    %1113 = vmatpush1.msra.mxu0 0.0
    %1114 = vmatprep.subr.mxu0 0.0
    %1115 = vmatpush1.msra.mxu0 0.0
    %1116 = vmatprep.subr.mxu0 0.0
    %1117 = vmatpush1.msra.mxu0 0.0
    %1118 = vmatprep.subr.mxu0 0.0
    %1119 = vmatpush1.msra.mxu0 0.0
    %1120 = vmatprep.subr.mxu0 0.0
    %1121 = vmatpush1.msra.mxu0 0.0
    %1122 = vmatprep.subr.mxu0 0.0
    %1123 = vmatpush1.msra.mxu0 0.0
    %1124 = vmatprep.subr.mxu0 0.0
    %1125 = vmatpush1.msra.mxu0 0.0
    %1126 = vmatprep.subr.mxu0 0.0
    %1127 = vmatpush1.msra.mxu0 0.0
    %1128 = vmatprep.subr.mxu0 0.0
    %1129 = vmatpush1.msra.mxu0 0.0
    %1130 = vmatprep.subr.mxu0 0.0
    %1131 = vmatpush1.msra.mxu0 0.0
    %1132 = vmatprep.subr.mxu0 0.0
    %1133 = vmatpush1.msra.mxu0 0.0
    %1134 = vmatprep.subr.mxu0 0.0
    %1135 = vmatpush1.msra.mxu0 0.0
    %1136 = vmatprep.subr.mxu0 0.0
    %1137 = vmatpush1.msra.mxu0 0.0
    %1138 = vmatprep.subr.mxu0 0.0
    %1139 = vmatpush1.msra.mxu0 0.0
    %1140 = vmatprep.subr.mxu0 0.0
    %1141 = vmatpush1.msra.mxu0 0.0
    %1142 = vmatprep.subr.mxu0 0.0
    %1143 = vmatpush1.msra.mxu0 0.0
    %1144 = vmatprep.subr.mxu0 0.0
    %1145 = vmatpush1.msra.mxu0 0.0
    %1146 = vmatprep.subr.mxu0 0.0
    %1147 = vmatpush1.msra.mxu0 0.0
    %1148 = vmatprep.subr.mxu0 0.0
    %1149 = vmatpush1.msra.mxu0 0.0
    %1150 = vmatprep.subr.mxu0 0.0
    %1151 = vmatpush1.msra.mxu0 0.0
    %1152 = vmatprep.subr.mxu0 0.0
    %1153 = vmatpush1.msra.mxu0 0.0
    %1154 = vmatprep.subr.mxu0 0.0
    %1155 = vmatpush1.msra.mxu0 0.0
    %1156 = vmatprep.subr.mxu0 0.0
    %1157 = vmatpush1.msra.mxu0 0.0
    %1158 = vmatprep.subr.mxu0 0.0
    %1159 = vmatpush1.msra.mxu0 0.0
    %1160 = vmatprep.subr.mxu0 0.0
    %1161 = vmatpush1.msra.mxu0 0.0
    %1162 = vmatprep.subr.mxu0 0.0
    %1163 = vmatpush1.msra.mxu0 0.0
    %1164 = vmatprep.mubr.f32.mxu0 0.0
    %1165 = vmatmul.mubr.f32.gmra.mrb[0].mxu0 %v1028
    %v1166 = vpop.f32.mrb[0].mxu0
    %v1167 = vadd.f32 0.0, %v1166
    %v1168 = vpop.f32.mrb[0].mxu0
    %1169 = vdwg.mxu0
    %1170 = vmatprep.subr.mxu0 0.0
    %1171 = vmatpush1.msra.mxu0 %v736
    %1172 = vmatprep.subr.mxu0 0.0
    %1173 = vmatpush1.msra.mxu0 %v737
    %1174 = vmatprep.subr.mxu0 0.0
    %1175 = vmatpush1.msra.mxu0 %v738
    %1176 = vmatprep.subr.mxu0 0.0
    %1177 = vmatpush1.msra.mxu0 %v739
    %1178 = vmatprep.subr.mxu0 0.0
    %1179 = vmatpush1.msra.mxu0 0.0
    %1180 = vmatprep.subr.mxu0 0.0
    %1181 = vmatpush1.msra.mxu0 0.0
    %1182 = vmatprep.subr.mxu0 0.0
    %1183 = vmatpush1.msra.mxu0 0.0
    %1184 = vmatprep.subr.mxu0 0.0
    %1185 = vmatpush1.msra.mxu0 0.0
    %1186 = vmatprep.subr.mxu0 0.0
    %1187 = vmatpush1.msra.mxu0 0.0
    %1188 = vmatprep.subr.mxu0 0.0
    %1189 = vmatpush1.msra.mxu0 0.0
    %1190 = vmatprep.subr.mxu0 0.0
    %1191 = vmatpush1.msra.mxu0 0.0
    %1192 = vmatprep.subr.mxu0 0.0
    %1193 = vmatpush1.msra.mxu0 0.0
    %1194 = vmatprep.subr.mxu0 0.0
    %1195 = vmatpush1.msra.mxu0 0.0
    %1196 = vmatprep.subr.mxu0 0.0
    %1197 = vmatpush1.msra.mxu0 0.0
    %1198 = vmatprep.subr.mxu0 0.0
    %1199 = vmatpush1.msra.mxu0 0.0
    %1200 = vmatprep.subr.mxu0 0.0
    %1201 = vmatpush1.msra.mxu0 0.0
    %1202 = vmatprep.subr.mxu0 0.0
    %1203 = vmatpush1.msra.mxu0 0.0
    %1204 = vmatprep.subr.mxu0 0.0
    %1205 = vmatpush1.msra.mxu0 0.0
    %1206 = vmatprep.subr.mxu0 0.0
    %1207 = vmatpush1.msra.mxu0 0.0
    %1208 = vmatprep.subr.mxu0 0.0
    %1209 = vmatpush1.msra.mxu0 0.0
    %1210 = vmatprep.subr.mxu0 0.0
    %1211 = vmatpush1.msra.mxu0 0.0
    %1212 = vmatprep.subr.mxu0 0.0
    %1213 = vmatpush1.msra.mxu0 0.0
    %1214 = vmatprep.subr.mxu0 0.0
    %1215 = vmatpush1.msra.mxu0 0.0
    %1216 = vmatprep.subr.mxu0 0.0
    %1217 = vmatpush1.msra.mxu0 0.0
    %1218 = vmatprep.subr.mxu0 0.0
    %1219 = vmatpush1.msra.mxu0 0.0
    %1220 = vmatprep.subr.mxu0 0.0
    %1221 = vmatpush1.msra.mxu0 0.0
    %1222 = vmatprep.subr.mxu0 0.0
    %1223 = vmatpush1.msra.mxu0 0.0
    %1224 = vmatprep.subr.mxu0 0.0
    %1225 = vmatpush1.msra.mxu0 0.0
    %1226 = vmatprep.subr.mxu0 0.0
    %1227 = vmatpush1.msra.mxu0 0.0
    %1228 = vmatprep.subr.mxu0 0.0
    %1229 = vmatpush1.msra.mxu0 0.0
    %1230 = vmatprep.subr.mxu0 0.0
    %1231 = vmatpush1.msra.mxu0 0.0
    %1232 = vmatprep.subr.mxu0 0.0
    %1233 = vmatpush1.msra.mxu0 0.0
    %1234 = vmatprep.mubr.f32.mxu0 0.0
    %1235 = vmatmul.mubr.f32.gmra.mrb[0].mxu0 %v1028
    %v1236 = vpop.f32.mrb[0].mxu0
    %v1237 = vadd.f32 0.0, %v1236
    %v1238 = vpop.f32.mrb[0].mxu0
    %1239 = vdwg.mxu0
    %1240 = vmatprep.subr.mxu0 0.0
    %1241 = vmatpush1.msra.mxu0 %v740
    %1242 = vmatprep.subr.mxu0 0.0
    %1243 = vmatpush1.msra.mxu0 %v741
    %1244 = vmatprep.subr.mxu0 0.0
    %1245 = vmatpush1.msra.mxu0 %v742
    %1246 = vmatprep.subr.mxu0 0.0
    %1247 = vmatpush1.msra.mxu0 %v743
    %1248 = vmatprep.subr.mxu0 0.0
    %1249 = vmatpush1.msra.mxu0 0.0
    %1250 = vmatprep.subr.mxu0 0.0
    %1251 = vmatpush1.msra.mxu0 0.0
    %1252 = vmatprep.subr.mxu0 0.0
    %1253 = vmatpush1.msra.mxu0 0.0
    %1254 = vmatprep.subr.mxu0 0.0
    %1255 = vmatpush1.msra.mxu0 0.0
    %1256 = vmatprep.subr.mxu0 0.0
    %1257 = vmatpush1.msra.mxu0 0.0
    %1258 = vmatprep.subr.mxu0 0.0
    %1259 = vmatpush1.msra.mxu0 0.0
    %1260 = vmatprep.subr.mxu0 0.0
    %1261 = vmatpush1.msra.mxu0 0.0
    %1262 = vmatprep.subr.mxu0 0.0
    %1263 = vmatpush1.msra.mxu0 0.0
    %1264 = vmatprep.subr.mxu0 0.0
    %1265 = vmatpush1.msra.mxu0 0.0
    %1266 = vmatprep.subr.mxu0 0.0
    %1267 = vmatpush1.msra.mxu0 0.0
    %1268 = vmatprep.subr.mxu0 0.0
    %1269 = vmatpush1.msra.mxu0 0.0
    %1270 = vmatprep.subr.mxu0 0.0
    %1271 = vmatpush1.msra.mxu0 0.0
    %1272 = vmatprep.subr.mxu0 0.0
    %1273 = vmatpush1.msra.mxu0 0.0
    %1274 = vmatprep.subr.mxu0 0.0
    %1275 = vmatpush1.msra.mxu0 0.0
    %1276 = vmatprep.subr.mxu0 0.0
    %1277 = vmatpush1.msra.mxu0 0.0
    %1278 = vmatprep.subr.mxu0 0.0
    %1279 = vmatpush1.msra.mxu0 0.0
    %1280 = vmatprep.subr.mxu0 0.0
    %1281 = vmatpush1.msra.mxu0 0.0
    %1282 = vmatprep.subr.mxu0 0.0
    %1283 = vmatpush1.msra.mxu0 0.0
    %1284 = vmatprep.subr.mxu0 0.0
    %1285 = vmatpush1.msra.mxu0 0.0
    %1286 = vmatprep.subr.mxu0 0.0
    %1287 = vmatpush1.msra.mxu0 0.0
    %1288 = vmatprep.subr.mxu0 0.0
    %1289 = vmatpush1.msra.mxu0 0.0
    %1290 = vmatprep.subr.mxu0 0.0
    %1291 = vmatpush1.msra.mxu0 0.0
    %1292 = vmatprep.subr.mxu0 0.0
    %1293 = vmatpush1.msra.mxu0 0.0
    %1294 = vmatprep.subr.mxu0 0.0
    %1295 = vmatpush1.msra.mxu0 0.0
    %1296 = vmatprep.subr.mxu0 0.0
    %1297 = vmatpush1.msra.mxu0 0.0
    %1298 = vmatprep.subr.mxu0 0.0
    %1299 = vmatpush1.msra.mxu0 0.0
    %1300 = vmatprep.subr.mxu0 0.0
    %1301 = vmatpush1.msra.mxu0 0.0
    %1302 = vmatprep.subr.mxu0 0.0
    %1303 = vmatpush1.msra.mxu0 0.0
    %1304 = vmatprep.mubr.f32.mxu0 0.0
    %1305 = vmatmul.mubr.f32.gmra.mrb[0].mxu0 %v1028
    %v1306 = vpop.f32.mrb[0].mxu0
    %v1307 = vadd.f32 0.0, %v1306
    %v1308 = vpop.f32.mrb[0].mxu0
    %1309 = vdwg.mxu0
    %v1310 = vld [vmem:[#allocation11] sm:$0xff]
    %v1311 = vld [vmem:[#allocation11 + $0x8] sm:$0xff]
    %v1312 = vld [vmem:[#allocation11 + $0x10] sm:$0xff]
    %v1313 = vld [vmem:[#allocation11 + $0x18] sm:$0xff]
    %v1314 = vld [vmem:[#allocation11 + $0x20] sm:$0xff]
    %v1315 = vld [vmem:[#allocation11 + $0x28] sm:$0xff]
    %v1316 = vld [vmem:[#allocation11 + $0x30] sm:$0xff]
    %v1317 = vld [vmem:[#allocation11 + $0x38] sm:$0xff]
    %v1318 = vld [vmem:[#allocation11 + $0x40] sm:$0xff]
    %v1319 = vld [vmem:[#allocation11 + $0x48] sm:$0xff]
    %v1320 = vld [vmem:[#allocation11 + $0x50] sm:$0xff]
    %v1321 = vld [vmem:[#allocation11 + $0x58] sm:$0xff]
    %v1322 = vld [vmem:[#allocation11 + $0x60] sm:$0xff]
    %v1323 = vld [vmem:[#allocation11 + $0x68] sm:$0xff]
    %v1324 = vld [vmem:[#allocation11 + $0x70] sm:$0xff]
    %v1325 = vld [vmem:[#allocation11 + $0x78] sm:$0xff]
    %v1327 = vsel %vm153, %v135, 0
    %1329 = vmatprep.subr.mxu0 0.0
    %1330 = vmatpush1.msra.mxu0 %v1310
    %1331 = vmatprep.subr.mxu0 0.0
    %1332 = vmatpush1.msra.mxu0 %v1311
    %1333 = vmatprep.subr.mxu0 0.0
    %1334 = vmatpush1.msra.mxu0 %v1312
    %1335 = vmatprep.subr.mxu0 0.0
    %1336 = vmatpush1.msra.mxu0 %v1313
    %1337 = vmatprep.subr.mxu0 0.0
    %1338 = vmatpush1.msra.mxu0 0.0
    %1339 = vmatprep.subr.mxu0 0.0
    %1340 = vmatpush1.msra.mxu0 0.0
    %1341 = vmatprep.subr.mxu0 0.0
    %1342 = vmatpush1.msra.mxu0 0.0
    %1343 = vmatprep.subr.mxu0 0.0
    %1344 = vmatpush1.msra.mxu0 0.0
    %1345 = vmatprep.subr.mxu0 0.0
    %1346 = vmatpush1.msra.mxu0 0.0
    %1347 = vmatprep.subr.mxu0 0.0
    %1348 = vmatpush1.msra.mxu0 0.0
    %1349 = vmatprep.subr.mxu0 0.0
    %1350 = vmatpush1.msra.mxu0 0.0
    %1351 = vmatprep.subr.mxu0 0.0
    %1352 = vmatpush1.msra.mxu0 0.0
    %1353 = vmatprep.subr.mxu0 0.0
    %1354 = vmatpush1.msra.mxu0 0.0
    %1355 = vmatprep.subr.mxu0 0.0
    %1356 = vmatpush1.msra.mxu0 0.0
    %1357 = vmatprep.subr.mxu0 0.0
    %1358 = vmatpush1.msra.mxu0 0.0
    %1359 = vmatprep.subr.mxu0 0.0
    %1360 = vmatpush1.msra.mxu0 0.0
    %1361 = vmatprep.subr.mxu0 0.0
    %1362 = vmatpush1.msra.mxu0 0.0
    %1363 = vmatprep.subr.mxu0 0.0
    %1364 = vmatpush1.msra.mxu0 0.0
    %1365 = vmatprep.subr.mxu0 0.0
    %1366 = vmatpush1.msra.mxu0 0.0
    %1367 = vmatprep.subr.mxu0 0.0
    %1368 = vmatpush1.msra.mxu0 0.0
    %1369 = vmatprep.subr.mxu0 0.0
    %1370 = vmatpush1.msra.mxu0 0.0
    %1371 = vmatprep.subr.mxu0 0.0
    %1372 = vmatpush1.msra.mxu0 0.0
    %1373 = vmatprep.subr.mxu0 0.0
    %1374 = vmatpush1.msra.mxu0 0.0
    %1375 = vmatprep.subr.mxu0 0.0
    %1376 = vmatpush1.msra.mxu0 0.0
    %1377 = vmatprep.subr.mxu0 0.0
    %1378 = vmatpush1.msra.mxu0 0.0
    %1379 = vmatprep.subr.mxu0 0.0
    %1380 = vmatpush1.msra.mxu0 0.0
    %1381 = vmatprep.subr.mxu0 0.0
    %1382 = vmatpush1.msra.mxu0 0.0
    %1383 = vmatprep.subr.mxu0 0.0
    %1384 = vmatpush1.msra.mxu0 0.0
    %1385 = vmatprep.subr.mxu0 0.0
    %1386 = vmatpush1.msra.mxu0 0.0
    %1387 = vmatprep.subr.mxu0 0.0
    %1388 = vmatpush1.msra.mxu0 0.0
    %1389 = vmatprep.subr.mxu0 0.0
    %1390 = vmatpush1.msra.mxu0 0.0
    %1391 = vmatprep.subr.mxu0 0.0
    %1392 = vmatpush1.msra.mxu0 0.0
    %1393 = vmatprep.mubr.f32.mxu0 0.0
    %1394 = vmatmul.mubr.f32.gmra.mrb[0].mxu0 %v1327
    %v1395 = vpop.f32.mrb[0].mxu0
    %v1396 = vadd.f32 0.0, %v1395
    %v1397 = vpop.f32.mrb[0].mxu0
    %1398 = vdwg.mxu0
    %1399 = vmatprep.subr.mxu0 0.0
    %1400 = vmatpush1.msra.mxu0 %v1314
    %1401 = vmatprep.subr.mxu0 0.0
    %1402 = vmatpush1.msra.mxu0 %v1315
    %1403 = vmatprep.subr.mxu0 0.0
    %1404 = vmatpush1.msra.mxu0 %v1316
    %1405 = vmatprep.subr.mxu0 0.0
    %1406 = vmatpush1.msra.mxu0 %v1317
    %1407 = vmatprep.subr.mxu0 0.0
    %1408 = vmatpush1.msra.mxu0 0.0
    %1409 = vmatprep.subr.mxu0 0.0
    %1410 = vmatpush1.msra.mxu0 0.0
    %1411 = vmatprep.subr.mxu0 0.0
    %1412 = vmatpush1.msra.mxu0 0.0
    %1413 = vmatprep.subr.mxu0 0.0
    %1414 = vmatpush1.msra.mxu0 0.0
    %1415 = vmatprep.subr.mxu0 0.0
    %1416 = vmatpush1.msra.mxu0 0.0
    %1417 = vmatprep.subr.mxu0 0.0
    %1418 = vmatpush1.msra.mxu0 0.0
    %1419 = vmatprep.subr.mxu0 0.0
    %1420 = vmatpush1.msra.mxu0 0.0
    %1421 = vmatprep.subr.mxu0 0.0
    %1422 = vmatpush1.msra.mxu0 0.0
    %1423 = vmatprep.subr.mxu0 0.0
    %1424 = vmatpush1.msra.mxu0 0.0
    %1425 = vmatprep.subr.mxu0 0.0
    %1426 = vmatpush1.msra.mxu0 0.0
    %1427 = vmatprep.subr.mxu0 0.0
    %1428 = vmatpush1.msra.mxu0 0.0
    %1429 = vmatprep.subr.mxu0 0.0
    %1430 = vmatpush1.msra.mxu0 0.0
    %1431 = vmatprep.subr.mxu0 0.0
    %1432 = vmatpush1.msra.mxu0 0.0
    %1433 = vmatprep.subr.mxu0 0.0
    %1434 = vmatpush1.msra.mxu0 0.0
    %1435 = vmatprep.subr.mxu0 0.0
    %1436 = vmatpush1.msra.mxu0 0.0
    %1437 = vmatprep.subr.mxu0 0.0
    %1438 = vmatpush1.msra.mxu0 0.0
    %1439 = vmatprep.subr.mxu0 0.0
    %1440 = vmatpush1.msra.mxu0 0.0
    %1441 = vmatprep.subr.mxu0 0.0
    %1442 = vmatpush1.msra.mxu0 0.0
    %1443 = vmatprep.subr.mxu0 0.0
    %1444 = vmatpush1.msra.mxu0 0.0
    %1445 = vmatprep.subr.mxu0 0.0
    %1446 = vmatpush1.msra.mxu0 0.0
    %1447 = vmatprep.subr.mxu0 0.0
    %1448 = vmatpush1.msra.mxu0 0.0
    %1449 = vmatprep.subr.mxu0 0.0
    %1450 = vmatpush1.msra.mxu0 0.0
    %1451 = vmatprep.subr.mxu0 0.0
    %1452 = vmatpush1.msra.mxu0 0.0
    %1453 = vmatprep.subr.mxu0 0.0
    %1454 = vmatpush1.msra.mxu0 0.0
    %1455 = vmatprep.subr.mxu0 0.0
    %1456 = vmatpush1.msra.mxu0 0.0
    %1457 = vmatprep.subr.mxu0 0.0
    %1458 = vmatpush1.msra.mxu0 0.0
    %1459 = vmatprep.subr.mxu0 0.0
    %1460 = vmatpush1.msra.mxu0 0.0
    %1461 = vmatprep.subr.mxu0 0.0
    %1462 = vmatpush1.msra.mxu0 0.0
    %1463 = vmatprep.mubr.f32.mxu0 0.0
    %1464 = vmatmul.mubr.f32.gmra.mrb[0].mxu0 %v1327
    %v1465 = vpop.f32.mrb[0].mxu0
    %v1466 = vadd.f32 0.0, %v1465
    %v1467 = vpop.f32.mrb[0].mxu0
    %1468 = vdwg.mxu0
    %1469 = vmatprep.subr.mxu0 0.0
    %1470 = vmatpush1.msra.mxu0 %v1318
    %1471 = vmatprep.subr.mxu0 0.0
    %1472 = vmatpush1.msra.mxu0 %v1319
    %1473 = vmatprep.subr.mxu0 0.0
    %1474 = vmatpush1.msra.mxu0 %v1320
    %1475 = vmatprep.subr.mxu0 0.0
    %1476 = vmatpush1.msra.mxu0 %v1321
    %1477 = vmatprep.subr.mxu0 0.0
    %1478 = vmatpush1.msra.mxu0 0.0
    %1479 = vmatprep.subr.mxu0 0.0
    %1480 = vmatpush1.msra.mxu0 0.0
    %1481 = vmatprep.subr.mxu0 0.0
    %1482 = vmatpush1.msra.mxu0 0.0
    %1483 = vmatprep.subr.mxu0 0.0
    %1484 = vmatpush1.msra.mxu0 0.0
    %1485 = vmatprep.subr.mxu0 0.0
    %1486 = vmatpush1.msra.mxu0 0.0
    %1487 = vmatprep.subr.mxu0 0.0
    %1488 = vmatpush1.msra.mxu0 0.0
    %1489 = vmatprep.subr.mxu0 0.0
    %1490 = vmatpush1.msra.mxu0 0.0
    %1491 = vmatprep.subr.mxu0 0.0
    %1492 = vmatpush1.msra.mxu0 0.0
    %1493 = vmatprep.subr.mxu0 0.0
    %1494 = vmatpush1.msra.mxu0 0.0
    %1495 = vmatprep.subr.mxu0 0.0
    %1496 = vmatpush1.msra.mxu0 0.0
    %1497 = vmatprep.subr.mxu0 0.0
    %1498 = vmatpush1.msra.mxu0 0.0
    %1499 = vmatprep.subr.mxu0 0.0
    %1500 = vmatpush1.msra.mxu0 0.0
    %1501 = vmatprep.subr.mxu0 0.0
    %1502 = vmatpush1.msra.mxu0 0.0
    %1503 = vmatprep.subr.mxu0 0.0
    %1504 = vmatpush1.msra.mxu0 0.0
    %1505 = vmatprep.subr.mxu0 0.0
    %1506 = vmatpush1.msra.mxu0 0.0
    %1507 = vmatprep.subr.mxu0 0.0
    %1508 = vmatpush1.msra.mxu0 0.0
    %1509 = vmatprep.subr.mxu0 0.0
    %1510 = vmatpush1.msra.mxu0 0.0
    %1511 = vmatprep.subr.mxu0 0.0
    %1512 = vmatpush1.msra.mxu0 0.0
    %1513 = vmatprep.subr.mxu0 0.0
    %1514 = vmatpush1.msra.mxu0 0.0
    %1515 = vmatprep.subr.mxu0 0.0
    %1516 = vmatpush1.msra.mxu0 0.0
    %1517 = vmatprep.subr.mxu0 0.0
    %1518 = vmatpush1.msra.mxu0 0.0
    %1519 = vmatprep.subr.mxu0 0.0
    %1520 = vmatpush1.msra.mxu0 0.0
    %1521 = vmatprep.subr.mxu0 0.0
    %1522 = vmatpush1.msra.mxu0 0.0
    %1523 = vmatprep.subr.mxu0 0.0
    %1524 = vmatpush1.msra.mxu0 0.0
    %1525 = vmatprep.subr.mxu0 0.0
    %1526 = vmatpush1.msra.mxu0 0.0
    %1527 = vmatprep.subr.mxu0 0.0
    %1528 = vmatpush1.msra.mxu0 0.0
    %1529 = vmatprep.subr.mxu0 0.0
    %1530 = vmatpush1.msra.mxu0 0.0
    %1531 = vmatprep.subr.mxu0 0.0
    %1532 = vmatpush1.msra.mxu0 0.0
    %1533 = vmatprep.mubr.f32.mxu0 0.0
    %1534 = vmatmul.mubr.f32.gmra.mrb[0].mxu0 %v1327
    %v1535 = vpop.f32.mrb[0].mxu0
    %v1536 = vadd.f32 0.0, %v1535
    %v1537 = vpop.f32.mrb[0].mxu0
    %1538 = vdwg.mxu0
    %1539 = vmatprep.subr.mxu0 0.0
    %1540 = vmatpush1.msra.mxu0 %v1322
    %1541 = vmatprep.subr.mxu0 0.0
    %1542 = vmatpush1.msra.mxu0 %v1323
    %1543 = vmatprep.subr.mxu0 0.0
    %1544 = vmatpush1.msra.mxu0 %v1324
    %1545 = vmatprep.subr.mxu0 0.0
    %1546 = vmatpush1.msra.mxu0 %v1325
    %1547 = vmatprep.subr.mxu0 0.0
    %1548 = vmatpush1.msra.mxu0 0.0
    %1549 = vmatprep.subr.mxu0 0.0
    %1550 = vmatpush1.msra.mxu0 0.0
    %1551 = vmatprep.subr.mxu0 0.0
    %1552 = vmatpush1.msra.mxu0 0.0
    %1553 = vmatprep.subr.mxu0 0.0
    %1554 = vmatpush1.msra.mxu0 0.0
    %1555 = vmatprep.subr.mxu0 0.0
    %1556 = vmatpush1.msra.mxu0 0.0
    %1557 = vmatprep.subr.mxu0 0.0
    %1558 = vmatpush1.msra.mxu0 0.0
    %1559 = vmatprep.subr.mxu0 0.0
    %1560 = vmatpush1.msra.mxu0 0.0
    %1561 = vmatprep.subr.mxu0 0.0
    %1562 = vmatpush1.msra.mxu0 0.0
    %1563 = vmatprep.subr.mxu0 0.0
    %1564 = vmatpush1.msra.mxu0 0.0
    %1565 = vmatprep.subr.mxu0 0.0
    %1566 = vmatpush1.msra.mxu0 0.0
    %1567 = vmatprep.subr.mxu0 0.0
    %1568 = vmatpush1.msra.mxu0 0.0
    %1569 = vmatprep.subr.mxu0 0.0
    %1570 = vmatpush1.msra.mxu0 0.0
    %1571 = vmatprep.subr.mxu0 0.0
    %1572 = vmatpush1.msra.mxu0 0.0
    %1573 = vmatprep.subr.mxu0 0.0
    %1574 = vmatpush1.msra.mxu0 0.0
    %1575 = vmatprep.subr.mxu0 0.0
    %1576 = vmatpush1.msra.mxu0 0.0
    %1577 = vmatprep.subr.mxu0 0.0
    %1578 = vmatpush1.msra.mxu0 0.0
    %1579 = vmatprep.subr.mxu0 0.0
    %1580 = vmatpush1.msra.mxu0 0.0
    %1581 = vmatprep.subr.mxu0 0.0
    %1582 = vmatpush1.msra.mxu0 0.0
    %1583 = vmatprep.subr.mxu0 0.0
    %1584 = vmatpush1.msra.mxu0 0.0
    %1585 = vmatprep.subr.mxu0 0.0
    %1586 = vmatpush1.msra.mxu0 0.0
    %1587 = vmatprep.subr.mxu0 0.0
    %1588 = vmatpush1.msra.mxu0 0.0
    %1589 = vmatprep.subr.mxu0 0.0
    %1590 = vmatpush1.msra.mxu0 0.0
    %1591 = vmatprep.subr.mxu0 0.0
    %1592 = vmatpush1.msra.mxu0 0.0
    %1593 = vmatprep.subr.mxu0 0.0
    %1594 = vmatpush1.msra.mxu0 0.0
    %1595 = vmatprep.subr.mxu0 0.0
    %1596 = vmatpush1.msra.mxu0 0.0
    %1597 = vmatprep.subr.mxu0 0.0
    %1598 = vmatpush1.msra.mxu0 0.0
    %1599 = vmatprep.subr.mxu0 0.0
    %1600 = vmatpush1.msra.mxu0 0.0
    %1601 = vmatprep.subr.mxu0 0.0
    %1602 = vmatpush1.msra.mxu0 0.0
    %1603 = vmatprep.mubr.f32.mxu0 0.0
    %1604 = vmatmul.mubr.f32.gmra.mrb[0].mxu0 %v1327
    %v1605 = vpop.f32.mrb[0].mxu0
    %v1606 = vadd.f32 0.0, %v1605
    %v1607 = vpop.f32.mrb[0].mxu0
    %1608 = vdwg.mxu0
    %v1610 = vsel %vm153, %v136, 0
    %1612 = vmatprep.subr.mxu0 0.0
    %1613 = vmatpush1.msra.mxu0 %v1310
    %1614 = vmatprep.subr.mxu0 0.0
    %1615 = vmatpush1.msra.mxu0 %v1311
    %1616 = vmatprep.subr.mxu0 0.0
    %1617 = vmatpush1.msra.mxu0 %v1312
    %1618 = vmatprep.subr.mxu0 0.0
    %1619 = vmatpush1.msra.mxu0 %v1313
    %1620 = vmatprep.subr.mxu0 0.0
    %1621 = vmatpush1.msra.mxu0 0.0
    %1622 = vmatprep.subr.mxu0 0.0
    %1623 = vmatpush1.msra.mxu0 0.0
    %1624 = vmatprep.subr.mxu0 0.0
    %1625 = vmatpush1.msra.mxu0 0.0
    %1626 = vmatprep.subr.mxu0 0.0
    %1627 = vmatpush1.msra.mxu0 0.0
    %1628 = vmatprep.subr.mxu0 0.0
    %1629 = vmatpush1.msra.mxu0 0.0
    %1630 = vmatprep.subr.mxu0 0.0
    %1631 = vmatpush1.msra.mxu0 0.0
    %1632 = vmatprep.subr.mxu0 0.0
    %1633 = vmatpush1.msra.mxu0 0.0
    %1634 = vmatprep.subr.mxu0 0.0
    %1635 = vmatpush1.msra.mxu0 0.0
    %1636 = vmatprep.subr.mxu0 0.0
    %1637 = vmatpush1.msra.mxu0 0.0
    %1638 = vmatprep.subr.mxu0 0.0
    %1639 = vmatpush1.msra.mxu0 0.0
    %1640 = vmatprep.subr.mxu0 0.0
    %1641 = vmatpush1.msra.mxu0 0.0
    %1642 = vmatprep.subr.mxu0 0.0
    %1643 = vmatpush1.msra.mxu0 0.0
    %1644 = vmatprep.subr.mxu0 0.0
    %1645 = vmatpush1.msra.mxu0 0.0
    %1646 = vmatprep.subr.mxu0 0.0
    %1647 = vmatpush1.msra.mxu0 0.0
    %1648 = vmatprep.subr.mxu0 0.0
    %1649 = vmatpush1.msra.mxu0 0.0
    %1650 = vmatprep.subr.mxu0 0.0
    %1651 = vmatpush1.msra.mxu0 0.0
    %1652 = vmatprep.subr.mxu0 0.0
    %1653 = vmatpush1.msra.mxu0 0.0
    %1654 = vmatprep.subr.mxu0 0.0
    %1655 = vmatpush1.msra.mxu0 0.0
    %1656 = vmatprep.subr.mxu0 0.0
    %1657 = vmatpush1.msra.mxu0 0.0
    %1658 = vmatprep.subr.mxu0 0.0
    %1659 = vmatpush1.msra.mxu0 0.0
    %1660 = vmatprep.subr.mxu0 0.0
    %1661 = vmatpush1.msra.mxu0 0.0
    %1662 = vmatprep.subr.mxu0 0.0
    %1663 = vmatpush1.msra.mxu0 0.0
    %1664 = vmatprep.subr.mxu0 0.0
    %1665 = vmatpush1.msra.mxu0 0.0
    %1666 = vmatprep.subr.mxu0 0.0
    %1667 = vmatpush1.msra.mxu0 0.0
    %1668 = vmatprep.subr.mxu0 0.0
    %1669 = vmatpush1.msra.mxu0 0.0
    %1670 = vmatprep.subr.mxu0 0.0
    %1671 = vmatpush1.msra.mxu0 0.0
    %1672 = vmatprep.subr.mxu0 0.0
    %1673 = vmatpush1.msra.mxu0 0.0
    %1674 = vmatprep.subr.mxu0 0.0
    %1675 = vmatpush1.msra.mxu0 0.0
    %1676 = vmatprep.mubr.f32.mxu0 0.0
    %1677 = vmatmul.mubr.f32.gmra.mrb[0].mxu0 %v1610
    %v1678 = vpop.f32.mrb[0].mxu0
    %v1679 = vadd.f32 0.0, %v1678
    %v1680 = vpop.f32.mrb[0].mxu0
    %1681 = vdwg.mxu0
    %1682 = vmatprep.subr.mxu0 0.0
    %1683 = vmatpush1.msra.mxu0 %v1314
    %1684 = vmatprep.subr.mxu0 0.0
    %1685 = vmatpush1.msra.mxu0 %v1315
    %1686 = vmatprep.subr.mxu0 0.0
    %1687 = vmatpush1.msra.mxu0 %v1316
    %1688 = vmatprep.subr.mxu0 0.0
    %1689 = vmatpush1.msra.mxu0 %v1317
    %1690 = vmatprep.subr.mxu0 0.0
    %1691 = vmatpush1.msra.mxu0 0.0
    %1692 = vmatprep.subr.mxu0 0.0
    %1693 = vmatpush1.msra.mxu0 0.0
    %1694 = vmatprep.subr.mxu0 0.0
    %1695 = vmatpush1.msra.mxu0 0.0
    %1696 = vmatprep.subr.mxu0 0.0
    %1697 = vmatpush1.msra.mxu0 0.0
    %1698 = vmatprep.subr.mxu0 0.0
    %1699 = vmatpush1.msra.mxu0 0.0
    %1700 = vmatprep.subr.mxu0 0.0
    %1701 = vmatpush1.msra.mxu0 0.0
    %1702 = vmatprep.subr.mxu0 0.0
    %1703 = vmatpush1.msra.mxu0 0.0
    %1704 = vmatprep.subr.mxu0 0.0
    %1705 = vmatpush1.msra.mxu0 0.0
    %1706 = vmatprep.subr.mxu0 0.0
    %1707 = vmatpush1.msra.mxu0 0.0
    %1708 = vmatprep.subr.mxu0 0.0
    %1709 = vmatpush1.msra.mxu0 0.0
    %1710 = vmatprep.subr.mxu0 0.0
    %1711 = vmatpush1.msra.mxu0 0.0
    %1712 = vmatprep.subr.mxu0 0.0
    %1713 = vmatpush1.msra.mxu0 0.0
    %1714 = vmatprep.subr.mxu0 0.0
    %1715 = vmatpush1.msra.mxu0 0.0
    %1716 = vmatprep.subr.mxu0 0.0
    %1717 = vmatpush1.msra.mxu0 0.0
    %1718 = vmatprep.subr.mxu0 0.0
    %1719 = vmatpush1.msra.mxu0 0.0
    %1720 = vmatprep.subr.mxu0 0.0
    %1721 = vmatpush1.msra.mxu0 0.0
    %1722 = vmatprep.subr.mxu0 0.0
    %1723 = vmatpush1.msra.mxu0 0.0
    %1724 = vmatprep.subr.mxu0 0.0
    %1725 = vmatpush1.msra.mxu0 0.0
    %1726 = vmatprep.subr.mxu0 0.0
    %1727 = vmatpush1.msra.mxu0 0.0
    %1728 = vmatprep.subr.mxu0 0.0
    %1729 = vmatpush1.msra.mxu0 0.0
    %1730 = vmatprep.subr.mxu0 0.0
    %1731 = vmatpush1.msra.mxu0 0.0
    %1732 = vmatprep.subr.mxu0 0.0
    %1733 = vmatpush1.msra.mxu0 0.0
    %1734 = vmatprep.subr.mxu0 0.0
    %1735 = vmatpush1.msra.mxu0 0.0
    %1736 = vmatprep.subr.mxu0 0.0
    %1737 = vmatpush1.msra.mxu0 0.0
    %1738 = vmatprep.subr.mxu0 0.0
    %1739 = vmatpush1.msra.mxu0 0.0
    %1740 = vmatprep.subr.mxu0 0.0
    %1741 = vmatpush1.msra.mxu0 0.0
    %1742 = vmatprep.subr.mxu0 0.0
    %1743 = vmatpush1.msra.mxu0 0.0
    %1744 = vmatprep.subr.mxu0 0.0
    %1745 = vmatpush1.msra.mxu0 0.0
    %1746 = vmatprep.mubr.f32.mxu0 0.0
    %1747 = vmatmul.mubr.f32.gmra.mrb[0].mxu0 %v1610
    %v1748 = vpop.f32.mrb[0].mxu0
    %v1749 = vadd.f32 0.0, %v1748
    %v1750 = vpop.f32.mrb[0].mxu0
    %1751 = vdwg.mxu0
    %1752 = vmatprep.subr.mxu0 0.0
    %1753 = vmatpush1.msra.mxu0 %v1318
    %1754 = vmatprep.subr.mxu0 0.0
    %1755 = vmatpush1.msra.mxu0 %v1319
    %1756 = vmatprep.subr.mxu0 0.0
    %1757 = vmatpush1.msra.mxu0 %v1320
    %1758 = vmatprep.subr.mxu0 0.0
    %1759 = vmatpush1.msra.mxu0 %v1321
    %1760 = vmatprep.subr.mxu0 0.0
    %1761 = vmatpush1.msra.mxu0 0.0
    %1762 = vmatprep.subr.mxu0 0.0
    %1763 = vmatpush1.msra.mxu0 0.0
    %1764 = vmatprep.subr.mxu0 0.0
    %1765 = vmatpush1.msra.mxu0 0.0
    %1766 = vmatprep.subr.mxu0 0.0
    %1767 = vmatpush1.msra.mxu0 0.0
    %1768 = vmatprep.subr.mxu0 0.0
    %1769 = vmatpush1.msra.mxu0 0.0
    %1770 = vmatprep.subr.mxu0 0.0
    %1771 = vmatpush1.msra.mxu0 0.0
    %1772 = vmatprep.subr.mxu0 0.0
    %1773 = vmatpush1.msra.mxu0 0.0
    %1774 = vmatprep.subr.mxu0 0.0
    %1775 = vmatpush1.msra.mxu0 0.0
    %1776 = vmatprep.subr.mxu0 0.0
    %1777 = vmatpush1.msra.mxu0 0.0
    %1778 = vmatprep.subr.mxu0 0.0
    %1779 = vmatpush1.msra.mxu0 0.0
    %1780 = vmatprep.subr.mxu0 0.0
    %1781 = vmatpush1.msra.mxu0 0.0
    %1782 = vmatprep.subr.mxu0 0.0
    %1783 = vmatpush1.msra.mxu0 0.0
    %1784 = vmatprep.subr.mxu0 0.0
    %1785 = vmatpush1.msra.mxu0 0.0
    %1786 = vmatprep.subr.mxu0 0.0
    %1787 = vmatpush1.msra.mxu0 0.0
    %1788 = vmatprep.subr.mxu0 0.0
    %1789 = vmatpush1.msra.mxu0 0.0
    %1790 = vmatprep.subr.mxu0 0.0
    %1791 = vmatpush1.msra.mxu0 0.0
    %1792 = vmatprep.subr.mxu0 0.0
    %1793 = vmatpush1.msra.mxu0 0.0
    %1794 = vmatprep.subr.mxu0 0.0
    %1795 = vmatpush1.msra.mxu0 0.0
    %1796 = vmatprep.subr.mxu0 0.0
    %1797 = vmatpush1.msra.mxu0 0.0
    %1798 = vmatprep.subr.mxu0 0.0
    %1799 = vmatpush1.msra.mxu0 0.0
    %1800 = vmatprep.subr.mxu0 0.0
    %1801 = vmatpush1.msra.mxu0 0.0
    %1802 = vmatprep.subr.mxu0 0.0
    %1803 = vmatpush1.msra.mxu0 0.0
    %1804 = vmatprep.subr.mxu0 0.0
    %1805 = vmatpush1.msra.mxu0 0.0
    %1806 = vmatprep.subr.mxu0 0.0
    %1807 = vmatpush1.msra.mxu0 0.0
    %1808 = vmatprep.subr.mxu0 0.0
    %1809 = vmatpush1.msra.mxu0 0.0
    %1810 = vmatprep.subr.mxu0 0.0
    %1811 = vmatpush1.msra.mxu0 0.0
    %1812 = vmatprep.subr.mxu0 0.0
    %1813 = vmatpush1.msra.mxu0 0.0
    %1814 = vmatprep.subr.mxu0 0.0
    %1815 = vmatpush1.msra.mxu0 0.0
    %1816 = vmatprep.mubr.f32.mxu0 0.0
    %1817 = vmatmul.mubr.f32.gmra.mrb[0].mxu0 %v1610
    %v1818 = vpop.f32.mrb[0].mxu0
    %v1819 = vadd.f32 0.0, %v1818
    %v1820 = vpop.f32.mrb[0].mxu0
    %1821 = vdwg.mxu0
    %1822 = vmatprep.subr.mxu0 0.0
    %1823 = vmatpush1.msra.mxu0 %v1322
    %1824 = vmatprep.subr.mxu0 0.0
    %1825 = vmatpush1.msra.mxu0 %v1323
    %1826 = vmatprep.subr.mxu0 0.0
    %1827 = vmatpush1.msra.mxu0 %v1324
    %1828 = vmatprep.subr.mxu0 0.0
    %1829 = vmatpush1.msra.mxu0 %v1325
    %1830 = vmatprep.subr.mxu0 0.0
    %1831 = vmatpush1.msra.mxu0 0.0
    %1832 = vmatprep.subr.mxu0 0.0
    %1833 = vmatpush1.msra.mxu0 0.0
    %1834 = vmatprep.subr.mxu0 0.0
    %1835 = vmatpush1.msra.mxu0 0.0
    %1836 = vmatprep.subr.mxu0 0.0
    %1837 = vmatpush1.msra.mxu0 0.0
    %1838 = vmatprep.subr.mxu0 0.0
    %1839 = vmatpush1.msra.mxu0 0.0
    %1840 = vmatprep.subr.mxu0 0.0
    %1841 = vmatpush1.msra.mxu0 0.0
    %1842 = vmatprep.subr.mxu0 0.0
    %1843 = vmatpush1.msra.mxu0 0.0
    %1844 = vmatprep.subr.mxu0 0.0
    %1845 = vmatpush1.msra.mxu0 0.0
    %1846 = vmatprep.subr.mxu0 0.0
    %1847 = vmatpush1.msra.mxu0 0.0
    %1848 = vmatprep.subr.mxu0 0.0
    %1849 = vmatpush1.msra.mxu0 0.0
    %1850 = vmatprep.subr.mxu0 0.0
    %1851 = vmatpush1.msra.mxu0 0.0
    %1852 = vmatprep.subr.mxu0 0.0
    %1853 = vmatpush1.msra.mxu0 0.0
    %1854 = vmatprep.subr.mxu0 0.0
    %1855 = vmatpush1.msra.mxu0 0.0
    %1856 = vmatprep.subr.mxu0 0.0
    %1857 = vmatpush1.msra.mxu0 0.0
    %1858 = vmatprep.subr.mxu0 0.0
    %1859 = vmatpush1.msra.mxu0 0.0
    %1860 = vmatprep.subr.mxu0 0.0
    %1861 = vmatpush1.msra.mxu0 0.0
    %1862 = vmatprep.subr.mxu0 0.0
    %1863 = vmatpush1.msra.mxu0 0.0
    %1864 = vmatprep.subr.mxu0 0.0
    %1865 = vmatpush1.msra.mxu0 0.0
    %1866 = vmatprep.subr.mxu0 0.0
    %1867 = vmatpush1.msra.mxu0 0.0
    %1868 = vmatprep.subr.mxu0 0.0
    %1869 = vmatpush1.msra.mxu0 0.0
    %1870 = vmatprep.subr.mxu0 0.0
    %1871 = vmatpush1.msra.mxu0 0.0
    %1872 = vmatprep.subr.mxu0 0.0
    %1873 = vmatpush1.msra.mxu0 0.0
    %1874 = vmatprep.subr.mxu0 0.0
    %1875 = vmatpush1.msra.mxu0 0.0
    %1876 = vmatprep.subr.mxu0 0.0
    %1877 = vmatpush1.msra.mxu0 0.0
    %1878 = vmatprep.subr.mxu0 0.0
    %1879 = vmatpush1.msra.mxu0 0.0
    %1880 = vmatprep.subr.mxu0 0.0
    %1881 = vmatpush1.msra.mxu0 0.0
    %1882 = vmatprep.subr.mxu0 0.0
    %1883 = vmatpush1.msra.mxu0 0.0
    %1884 = vmatprep.subr.mxu0 0.0
    %1885 = vmatpush1.msra.mxu0 0.0
    %1886 = vmatprep.mubr.f32.mxu0 0.0
    %1887 = vmatmul.mubr.f32.gmra.mrb[0].mxu0 %v1610
    %v1888 = vpop.f32.mrb[0].mxu0
    %v1889 = vadd.f32 0.0, %v1888
    %v1890 = vpop.f32.mrb[0].mxu0
    %1891 = vdwg.mxu0
    %v1893 = vsel %vm153, %v720, 0
    %v1896 = vsel %vm153, %v814, 0
    %1898 = vmatprep.subr.mxu0 0.0
    %1899 = vmatpush1.xpose.msra.mxu0 %v1896
    %1900 = vmatprep.subr.mxu0 0.0
    %1901 = vmatpush1.xpose.msra.mxu0 0.0
    %1902 = vmatprep.subr.mxu0 0.0
    %1903 = vmatpush1.xpose.msra.mxu0 0.0
    %1904 = vmatprep.subr.mxu0 0.0
    %1905 = vmatpush1.xpose.msra.mxu0 0.0
    %1906 = vmatprep.subr.mxu0 0.0
    %1907 = vmatpush1.xpose.msra.mxu0 0.0
    %1908 = vmatprep.subr.mxu0 0.0
    %1909 = vmatpush1.xpose.msra.mxu0 0.0
    %1910 = vmatprep.subr.mxu0 0.0
    %1911 = vmatpush1.xpose.msra.mxu0 0.0
    %1912 = vmatprep.subr.mxu0 0.0
    %1913 = vmatpush1.xpose.msra.mxu0 0.0
    %1914 = vmatprep.subr.mxu0 0.0
    %1915 = vmatpush1.xpose.msra.mxu0 0.0
    %1916 = vmatprep.subr.mxu0 0.0
    %1917 = vmatpush1.xpose.msra.mxu0 0.0
    %1918 = vmatprep.subr.mxu0 0.0
    %1919 = vmatpush1.xpose.msra.mxu0 0.0
    %1920 = vmatprep.subr.mxu0 0.0
    %1921 = vmatpush1.xpose.msra.mxu0 0.0
    %1922 = vmatprep.subr.mxu0 0.0
    %1923 = vmatpush1.xpose.msra.mxu0 0.0
    %1924 = vmatprep.subr.mxu0 0.0
    %1925 = vmatpush1.xpose.msra.mxu0 0.0
    %1926 = vmatprep.subr.mxu0 0.0
    %1927 = vmatpush1.xpose.msra.mxu0 0.0
    %1928 = vmatprep.subr.mxu0 0.0
    %1929 = vmatpush1.xpose.msra.mxu0 0.0
    %1930 = vmatprep.subr.mxu0 0.0
    %1931 = vmatpush1.xpose.msra.mxu0 0.0
    %1932 = vmatprep.subr.mxu0 0.0
    %1933 = vmatpush1.xpose.msra.mxu0 0.0
    %1934 = vmatprep.subr.mxu0 0.0
    %1935 = vmatpush1.xpose.msra.mxu0 0.0
    %1936 = vmatprep.subr.mxu0 0.0
    %1937 = vmatpush1.xpose.msra.mxu0 0.0
    %1938 = vmatprep.subr.mxu0 0.0
    %1939 = vmatpush1.xpose.msra.mxu0 0.0
    %1940 = vmatprep.subr.mxu0 0.0
    %1941 = vmatpush1.xpose.msra.mxu0 0.0
    %1942 = vmatprep.subr.mxu0 0.0
    %1943 = vmatpush1.xpose.msra.mxu0 0.0
    %1944 = vmatprep.subr.mxu0 0.0
    %1945 = vmatpush1.xpose.msra.mxu0 0.0
    %1946 = vmatprep.subr.mxu0 0.0
    %1947 = vmatpush1.xpose.msra.mxu0 0.0
    %1948 = vmatprep.subr.mxu0 0.0
    %1949 = vmatpush1.xpose.msra.mxu0 0.0
    %1950 = vmatprep.subr.mxu0 0.0
    %1951 = vmatpush1.xpose.msra.mxu0 0.0
    %1952 = vmatprep.subr.mxu0 0.0
    %1953 = vmatpush1.xpose.msra.mxu0 0.0
    %1954 = vmatprep.subr.mxu0 0.0
    %1955 = vmatpush1.xpose.msra.mxu0 0.0
    %1956 = vmatprep.subr.mxu0 0.0
    %1957 = vmatpush1.xpose.msra.mxu0 0.0
    %1958 = vmatprep.subr.mxu0 0.0
    %1959 = vmatpush1.xpose.msra.mxu0 0.0
    %1960 = vmatprep.subr.mxu0 0.0
    %1961 = vmatpush1.xpose.msra.mxu0 0.0
    %1962 = vmatprep.mubr.f32.mxu0 0.0
    %1963 = vmatmul.mubr.f32.gmra.mrb[0].mxu0 %v1893
    %v1964 = vpop.f32.mrb[0].mxu0
    %v1965 = vadd.f32 0.0, %v1964
    %v1966 = vpop.f32.mrb[0].mxu0
    %1967 = vdwg.mxu0
    %v1969 = vsel %vm153, %v721, 0
    %v1972 = vsel %vm153, %v884, 0
    %1974 = vmatprep.subr.mxu0 0.0
    %1975 = vmatpush1.xpose.msra.mxu0 %v1972
    %1976 = vmatprep.subr.mxu0 0.0
    %1977 = vmatpush1.xpose.msra.mxu0 0.0
    %1978 = vmatprep.subr.mxu0 0.0
    %1979 = vmatpush1.xpose.msra.mxu0 0.0
    %1980 = vmatprep.subr.mxu0 0.0
    %1981 = vmatpush1.xpose.msra.mxu0 0.0
    %1982 = vmatprep.subr.mxu0 0.0
    %1983 = vmatpush1.xpose.msra.mxu0 0.0
    %1984 = vmatprep.subr.mxu0 0.0
    %1985 = vmatpush1.xpose.msra.mxu0 0.0
    %1986 = vmatprep.subr.mxu0 0.0
    %1987 = vmatpush1.xpose.msra.mxu0 0.0
    %1988 = vmatprep.subr.mxu0 0.0
    %1989 = vmatpush1.xpose.msra.mxu0 0.0
    %1990 = vmatprep.subr.mxu0 0.0
    %1991 = vmatpush1.xpose.msra.mxu0 0.0
    %1992 = vmatprep.subr.mxu0 0.0
    %1993 = vmatpush1.xpose.msra.mxu0 0.0
    %1994 = vmatprep.subr.mxu0 0.0
    %1995 = vmatpush1.xpose.msra.mxu0 0.0
    %1996 = vmatprep.subr.mxu0 0.0
    %1997 = vmatpush1.xpose.msra.mxu0 0.0
    %1998 = vmatprep.subr.mxu0 0.0
    %1999 = vmatpush1.xpose.msra.mxu0 0.0
    %2000 = vmatprep.subr.mxu0 0.0
    %2001 = vmatpush1.xpose.msra.mxu0 0.0
    %2002 = vmatprep.subr.mxu0 0.0
    %2003 = vmatpush1.xpose.msra.mxu0 0.0
    %2004 = vmatprep.subr.mxu0 0.0
    %2005 = vmatpush1.xpose.msra.mxu0 0.0
    %2006 = vmatprep.subr.mxu0 0.0
    %2007 = vmatpush1.xpose.msra.mxu0 0.0
    %2008 = vmatprep.subr.mxu0 0.0
    %2009 = vmatpush1.xpose.msra.mxu0 0.0
    %2010 = vmatprep.subr.mxu0 0.0
    %2011 = vmatpush1.xpose.msra.mxu0 0.0
    %2012 = vmatprep.subr.mxu0 0.0
    %2013 = vmatpush1.xpose.msra.mxu0 0.0
    %2014 = vmatprep.subr.mxu0 0.0
    %2015 = vmatpush1.xpose.msra.mxu0 0.0
    %2016 = vmatprep.subr.mxu0 0.0
    %2017 = vmatpush1.xpose.msra.mxu0 0.0
    %2018 = vmatprep.subr.mxu0 0.0
    %2019 = vmatpush1.xpose.msra.mxu0 0.0
    %2020 = vmatprep.subr.mxu0 0.0
    %2021 = vmatpush1.xpose.msra.mxu0 0.0
    %2022 = vmatprep.subr.mxu0 0.0
    %2023 = vmatpush1.xpose.msra.mxu0 0.0
    %2024 = vmatprep.subr.mxu0 0.0
    %2025 = vmatpush1.xpose.msra.mxu0 0.0
    %2026 = vmatprep.subr.mxu0 0.0
    %2027 = vmatpush1.xpose.msra.mxu0 0.0
    %2028 = vmatprep.subr.mxu0 0.0
    %2029 = vmatpush1.xpose.msra.mxu0 0.0
    %2030 = vmatprep.subr.mxu0 0.0
    %2031 = vmatpush1.xpose.msra.mxu0 0.0
    %2032 = vmatprep.subr.mxu0 0.0
    %2033 = vmatpush1.xpose.msra.mxu0 0.0
    %2034 = vmatprep.subr.mxu0 0.0
    %2035 = vmatpush1.xpose.msra.mxu0 0.0
    %2036 = vmatprep.subr.mxu0 0.0
    %2037 = vmatpush1.xpose.msra.mxu0 0.0
    %2038 = vmatprep.mubr.f32.mxu0 0.0
    %2039 = vmatmul.mubr.f32.gmra.mrb[0].mxu0 %v1969
    %v2040 = vpop.f32.mrb[0].mxu0
    %v2041 = vadd.f32 0.0, %v2040
    %v2042 = vpop.f32.mrb[0].mxu0
    %2043 = vdwg.mxu0
    %v2045 = vsel %vm153, %v722, 0
    %v2048 = vsel %vm153, %v954, 0
    %2050 = vmatprep.subr.mxu0 0.0
    %2051 = vmatpush1.xpose.msra.mxu0 %v2048
    %2052 = vmatprep.subr.mxu0 0.0
    %2053 = vmatpush1.xpose.msra.mxu0 0.0
    %2054 = vmatprep.subr.mxu0 0.0
    %2055 = vmatpush1.xpose.msra.mxu0 0.0
    %2056 = vmatprep.subr.mxu0 0.0
    %2057 = vmatpush1.xpose.msra.mxu0 0.0
    %2058 = vmatprep.subr.mxu0 0.0
    %2059 = vmatpush1.xpose.msra.mxu0 0.0
    %2060 = vmatprep.subr.mxu0 0.0
    %2061 = vmatpush1.xpose.msra.mxu0 0.0
    %2062 = vmatprep.subr.mxu0 0.0
    %2063 = vmatpush1.xpose.msra.mxu0 0.0
    %2064 = vmatprep.subr.mxu0 0.0
    %2065 = vmatpush1.xpose.msra.mxu0 0.0
    %2066 = vmatprep.subr.mxu0 0.0
    %2067 = vmatpush1.xpose.msra.mxu0 0.0
    %2068 = vmatprep.subr.mxu0 0.0
    %2069 = vmatpush1.xpose.msra.mxu0 0.0
    %2070 = vmatprep.subr.mxu0 0.0
    %2071 = vmatpush1.xpose.msra.mxu0 0.0
    %2072 = vmatprep.subr.mxu0 0.0
    %2073 = vmatpush1.xpose.msra.mxu0 0.0
    %2074 = vmatprep.subr.mxu0 0.0
    %2075 = vmatpush1.xpose.msra.mxu0 0.0
    %2076 = vmatprep.subr.mxu0 0.0
    %2077 = vmatpush1.xpose.msra.mxu0 0.0
    %2078 = vmatprep.subr.mxu0 0.0
    %2079 = vmatpush1.xpose.msra.mxu0 0.0
    %2080 = vmatprep.subr.mxu0 0.0
    %2081 = vmatpush1.xpose.msra.mxu0 0.0
    %2082 = vmatprep.subr.mxu0 0.0
    %2083 = vmatpush1.xpose.msra.mxu0 0.0
    %2084 = vmatprep.subr.mxu0 0.0
    %2085 = vmatpush1.xpose.msra.mxu0 0.0
    %2086 = vmatprep.subr.mxu0 0.0
    %2087 = vmatpush1.xpose.msra.mxu0 0.0
    %2088 = vmatprep.subr.mxu0 0.0
    %2089 = vmatpush1.xpose.msra.mxu0 0.0
    %2090 = vmatprep.subr.mxu0 0.0
    %2091 = vmatpush1.xpose.msra.mxu0 0.0
    %2092 = vmatprep.subr.mxu0 0.0
    %2093 = vmatpush1.xpose.msra.mxu0 0.0
    %2094 = vmatprep.subr.mxu0 0.0
    %2095 = vmatpush1.xpose.msra.mxu0 0.0
    %2096 = vmatprep.subr.mxu0 0.0
    %2097 = vmatpush1.xpose.msra.mxu0 0.0
    %2098 = vmatprep.subr.mxu0 0.0
    %2099 = vmatpush1.xpose.msra.mxu0 0.0
    %2100 = vmatprep.subr.mxu0 0.0
    %2101 = vmatpush1.xpose.msra.mxu0 0.0
    %2102 = vmatprep.subr.mxu0 0.0
    %2103 = vmatpush1.xpose.msra.mxu0 0.0
    %2104 = vmatprep.subr.mxu0 0.0
    %2105 = vmatpush1.xpose.msra.mxu0 0.0
    %2106 = vmatprep.subr.mxu0 0.0
    %2107 = vmatpush1.xpose.msra.mxu0 0.0
    %2108 = vmatprep.subr.mxu0 0.0
    %2109 = vmatpush1.xpose.msra.mxu0 0.0
    %2110 = vmatprep.subr.mxu0 0.0
    %2111 = vmatpush1.xpose.msra.mxu0 0.0
    %2112 = vmatprep.subr.mxu0 0.0
    %2113 = vmatpush1.xpose.msra.mxu0 0.0
    %2114 = vmatprep.mubr.f32.mxu0 0.0
    %2115 = vmatmul.mubr.f32.gmra.mrb[0].mxu0 %v2045
    %v2116 = vpop.f32.mrb[0].mxu0
    %v2117 = vadd.f32 0.0, %v2116
    %v2118 = vpop.f32.mrb[0].mxu0
    %2119 = vdwg.mxu0
    %v2121 = vsel %vm153, %v723, 0
    %v2124 = vsel %vm153, %v1024, 0
    %2126 = vmatprep.subr.mxu0 0.0
    %2127 = vmatpush1.xpose.msra.mxu0 %v2124
    %2128 = vmatprep.subr.mxu0 0.0
    %2129 = vmatpush1.xpose.msra.mxu0 0.0
    %2130 = vmatprep.subr.mxu0 0.0
    %2131 = vmatpush1.xpose.msra.mxu0 0.0
    %2132 = vmatprep.subr.mxu0 0.0
    %2133 = vmatpush1.xpose.msra.mxu0 0.0
    %2134 = vmatprep.subr.mxu0 0.0
    %2135 = vmatpush1.xpose.msra.mxu0 0.0
    %2136 = vmatprep.subr.mxu0 0.0
    %2137 = vmatpush1.xpose.msra.mxu0 0.0
    %2138 = vmatprep.subr.mxu0 0.0
    %2139 = vmatpush1.xpose.msra.mxu0 0.0
    %2140 = vmatprep.subr.mxu0 0.0
    %2141 = vmatpush1.xpose.msra.mxu0 0.0
    %2142 = vmatprep.subr.mxu0 0.0
    %2143 = vmatpush1.xpose.msra.mxu0 0.0
    %2144 = vmatprep.subr.mxu0 0.0
    %2145 = vmatpush1.xpose.msra.mxu0 0.0
    %2146 = vmatprep.subr.mxu0 0.0
    %2147 = vmatpush1.xpose.msra.mxu0 0.0
    %2148 = vmatprep.subr.mxu0 0.0
    %2149 = vmatpush1.xpose.msra.mxu0 0.0
    %2150 = vmatprep.subr.mxu0 0.0
    %2151 = vmatpush1.xpose.msra.mxu0 0.0
    %2152 = vmatprep.subr.mxu0 0.0
    %2153 = vmatpush1.xpose.msra.mxu0 0.0
    %2154 = vmatprep.subr.mxu0 0.0
    %2155 = vmatpush1.xpose.msra.mxu0 0.0
    %2156 = vmatprep.subr.mxu0 0.0
    %2157 = vmatpush1.xpose.msra.mxu0 0.0
    %2158 = vmatprep.subr.mxu0 0.0
    %2159 = vmatpush1.xpose.msra.mxu0 0.0
    %2160 = vmatprep.subr.mxu0 0.0
    %2161 = vmatpush1.xpose.msra.mxu0 0.0
    %2162 = vmatprep.subr.mxu0 0.0
    %2163 = vmatpush1.xpose.msra.mxu0 0.0
    %2164 = vmatprep.subr.mxu0 0.0
    %2165 = vmatpush1.xpose.msra.mxu0 0.0
    %2166 = vmatprep.subr.mxu0 0.0
    %2167 = vmatpush1.xpose.msra.mxu0 0.0
    %2168 = vmatprep.subr.mxu0 0.0
    %2169 = vmatpush1.xpose.msra.mxu0 0.0
    %2170 = vmatprep.subr.mxu0 0.0
    %2171 = vmatpush1.xpose.msra.mxu0 0.0
    %2172 = vmatprep.subr.mxu0 0.0
    %2173 = vmatpush1.xpose.msra.mxu0 0.0
    %2174 = vmatprep.subr.mxu0 0.0
    %2175 = vmatpush1.xpose.msra.mxu0 0.0
    %2176 = vmatprep.subr.mxu0 0.0
    %2177 = vmatpush1.xpose.msra.mxu0 0.0
    %2178 = vmatprep.subr.mxu0 0.0
    %2179 = vmatpush1.xpose.msra.mxu0 0.0
    %2180 = vmatprep.subr.mxu0 0.0
    %2181 = vmatpush1.xpose.msra.mxu0 0.0
    %2182 = vmatprep.subr.mxu0 0.0
    %2183 = vmatpush1.xpose.msra.mxu0 0.0
    %2184 = vmatprep.subr.mxu0 0.0
    %2185 = vmatpush1.xpose.msra.mxu0 0.0
    %2186 = vmatprep.subr.mxu0 0.0
    %2187 = vmatpush1.xpose.msra.mxu0 0.0
    %2188 = vmatprep.subr.mxu0 0.0
    %2189 = vmatpush1.xpose.msra.mxu0 0.0
    %2190 = vmatprep.mubr.f32.mxu0 0.0
    %2191 = vmatmul.mubr.f32.gmra.mrb[0].mxu0 %v2121
    %v2192 = vpop.f32.mrb[0].mxu0
    %v2193 = vadd.f32 0.0, %v2192
    %v2194 = vpop.f32.mrb[0].mxu0
    %2195 = vdwg.mxu0
    %v2197 = vsel %vm153, %v724, 0
    %v2200 = vsel %vm153, %v1097, 0
    %2202 = vmatprep.subr.mxu0 0.0
    %2203 = vmatpush1.xpose.msra.mxu0 %v2200
    %2204 = vmatprep.subr.mxu0 0.0
    %2205 = vmatpush1.xpose.msra.mxu0 0.0
    %2206 = vmatprep.subr.mxu0 0.0
    %2207 = vmatpush1.xpose.msra.mxu0 0.0
    %2208 = vmatprep.subr.mxu0 0.0
    %2209 = vmatpush1.xpose.msra.mxu0 0.0
    %2210 = vmatprep.subr.mxu0 0.0
    %2211 = vmatpush1.xpose.msra.mxu0 0.0
    %2212 = vmatprep.subr.mxu0 0.0
    %2213 = vmatpush1.xpose.msra.mxu0 0.0
    %2214 = vmatprep.subr.mxu0 0.0
    %2215 = vmatpush1.xpose.msra.mxu0 0.0
    %2216 = vmatprep.subr.mxu0 0.0
    %2217 = vmatpush1.xpose.msra.mxu0 0.0
    %2218 = vmatprep.subr.mxu0 0.0
    %2219 = vmatpush1.xpose.msra.mxu0 0.0
    %2220 = vmatprep.subr.mxu0 0.0
    %2221 = vmatpush1.xpose.msra.mxu0 0.0
    %2222 = vmatprep.subr.mxu0 0.0
    %2223 = vmatpush1.xpose.msra.mxu0 0.0
    %2224 = vmatprep.subr.mxu0 0.0
    %2225 = vmatpush1.xpose.msra.mxu0 0.0
    %2226 = vmatprep.subr.mxu0 0.0
    %2227 = vmatpush1.xpose.msra.mxu0 0.0
    %2228 = vmatprep.subr.mxu0 0.0
    %2229 = vmatpush1.xpose.msra.mxu0 0.0
    %2230 = vmatprep.subr.mxu0 0.0
    %2231 = vmatpush1.xpose.msra.mxu0 0.0
    %2232 = vmatprep.subr.mxu0 0.0
    %2233 = vmatpush1.xpose.msra.mxu0 0.0
    %2234 = vmatprep.subr.mxu0 0.0
    %2235 = vmatpush1.xpose.msra.mxu0 0.0
    %2236 = vmatprep.subr.mxu0 0.0
    %2237 = vmatpush1.xpose.msra.mxu0 0.0
    %2238 = vmatprep.subr.mxu0 0.0
    %2239 = vmatpush1.xpose.msra.mxu0 0.0
    %2240 = vmatprep.subr.mxu0 0.0
    %2241 = vmatpush1.xpose.msra.mxu0 0.0
    %2242 = vmatprep.subr.mxu0 0.0
    %2243 = vmatpush1.xpose.msra.mxu0 0.0
    %2244 = vmatprep.subr.mxu0 0.0
    %2245 = vmatpush1.xpose.msra.mxu0 0.0
    %2246 = vmatprep.subr.mxu0 0.0
    %2247 = vmatpush1.xpose.msra.mxu0 0.0
    %2248 = vmatprep.subr.mxu0 0.0
    %2249 = vmatpush1.xpose.msra.mxu0 0.0
    %2250 = vmatprep.subr.mxu0 0.0
    %2251 = vmatpush1.xpose.msra.mxu0 0.0
    %2252 = vmatprep.subr.mxu0 0.0
    %2253 = vmatpush1.xpose.msra.mxu0 0.0
    %2254 = vmatprep.subr.mxu0 0.0
    %2255 = vmatpush1.xpose.msra.mxu0 0.0
    %2256 = vmatprep.subr.mxu0 0.0
    %2257 = vmatpush1.xpose.msra.mxu0 0.0
    %2258 = vmatprep.subr.mxu0 0.0
    %2259 = vmatpush1.xpose.msra.mxu0 0.0
    %2260 = vmatprep.subr.mxu0 0.0
    %2261 = vmatpush1.xpose.msra.mxu0 0.0
    %2262 = vmatprep.subr.mxu0 0.0
    %2263 = vmatpush1.xpose.msra.mxu0 0.0
    %2264 = vmatprep.subr.mxu0 0.0
    %2265 = vmatpush1.xpose.msra.mxu0 0.0
    %2266 = vmatprep.mubr.f32.mxu0 0.0
    %2267 = vmatmul.mubr.f32.gmra.mrb[0].mxu0 %v2197
    %v2268 = vpop.f32.mrb[0].mxu0
    %v2269 = vadd.f32 0.0, %v2268
    %v2270 = vpop.f32.mrb[0].mxu0
    %2271 = vdwg.mxu0
    %v2273 = vsel %vm153, %v725, 0
    %v2276 = vsel %vm153, %v1167, 0
    %2278 = vmatprep.subr.mxu0 0.0
    %2279 = vmatpush1.xpose.msra.mxu0 %v2276
    %2280 = vmatprep.subr.mxu0 0.0
    %2281 = vmatpush1.xpose.msra.mxu0 0.0
    %2282 = vmatprep.subr.mxu0 0.0
    %2283 = vmatpush1.xpose.msra.mxu0 0.0
    %2284 = vmatprep.subr.mxu0 0.0
    %2285 = vmatpush1.xpose.msra.mxu0 0.0
    %2286 = vmatprep.subr.mxu0 0.0
    %2287 = vmatpush1.xpose.msra.mxu0 0.0
    %2288 = vmatprep.subr.mxu0 0.0
    %2289 = vmatpush1.xpose.msra.mxu0 0.0
    %2290 = vmatprep.subr.mxu0 0.0
    %2291 = vmatpush1.xpose.msra.mxu0 0.0
    %2292 = vmatprep.subr.mxu0 0.0
    %2293 = vmatpush1.xpose.msra.mxu0 0.0
    %2294 = vmatprep.subr.mxu0 0.0
    %2295 = vmatpush1.xpose.msra.mxu0 0.0
    %2296 = vmatprep.subr.mxu0 0.0
    %2297 = vmatpush1.xpose.msra.mxu0 0.0
    %2298 = vmatprep.subr.mxu0 0.0
    %2299 = vmatpush1.xpose.msra.mxu0 0.0
    %2300 = vmatprep.subr.mxu0 0.0
    %2301 = vmatpush1.xpose.msra.mxu0 0.0
    %2302 = vmatprep.subr.mxu0 0.0
    %2303 = vmatpush1.xpose.msra.mxu0 0.0
    %2304 = vmatprep.subr.mxu0 0.0
    %2305 = vmatpush1.xpose.msra.mxu0 0.0
    %2306 = vmatprep.subr.mxu0 0.0
    %2307 = vmatpush1.xpose.msra.mxu0 0.0
    %2308 = vmatprep.subr.mxu0 0.0
    %2309 = vmatpush1.xpose.msra.mxu0 0.0
    %2310 = vmatprep.subr.mxu0 0.0
    %2311 = vmatpush1.xpose.msra.mxu0 0.0
    %2312 = vmatprep.subr.mxu0 0.0
    %2313 = vmatpush1.xpose.msra.mxu0 0.0
    %2314 = vmatprep.subr.mxu0 0.0
    %2315 = vmatpush1.xpose.msra.mxu0 0.0
    %2316 = vmatprep.subr.mxu0 0.0
    %2317 = vmatpush1.xpose.msra.mxu0 0.0
    %2318 = vmatprep.subr.mxu0 0.0
    %2319 = vmatpush1.xpose.msra.mxu0 0.0
    %2320 = vmatprep.subr.mxu0 0.0
    %2321 = vmatpush1.xpose.msra.mxu0 0.0
    %2322 = vmatprep.subr.mxu0 0.0
    %2323 = vmatpush1.xpose.msra.mxu0 0.0
    %2324 = vmatprep.subr.mxu0 0.0
    %2325 = vmatpush1.xpose.msra.mxu0 0.0
    %2326 = vmatprep.subr.mxu0 0.0
    %2327 = vmatpush1.xpose.msra.mxu0 0.0
    %2328 = vmatprep.subr.mxu0 0.0
    %2329 = vmatpush1.xpose.msra.mxu0 0.0
    %2330 = vmatprep.subr.mxu0 0.0
    %2331 = vmatpush1.xpose.msra.mxu0 0.0
    %2332 = vmatprep.subr.mxu0 0.0
    %2333 = vmatpush1.xpose.msra.mxu0 0.0
    %2334 = vmatprep.subr.mxu0 0.0
    %2335 = vmatpush1.xpose.msra.mxu0 0.0
    %2336 = vmatprep.subr.mxu0 0.0
    %2337 = vmatpush1.xpose.msra.mxu0 0.0
    %2338 = vmatprep.subr.mxu0 0.0
    %2339 = vmatpush1.xpose.msra.mxu0 0.0
    %2340 = vmatprep.subr.mxu0 0.0
    %2341 = vmatpush1.xpose.msra.mxu0 0.0
    %2342 = vmatprep.mubr.f32.mxu0 0.0
    %2343 = vmatmul.mubr.f32.gmra.mrb[0].mxu0 %v2273
    %v2344 = vpop.f32.mrb[0].mxu0
    %v2345 = vadd.f32 0.0, %v2344
    %v2346 = vpop.f32.mrb[0].mxu0
    %2347 = vdwg.mxu0
    %v2349 = vsel %vm153, %v726, 0
    %v2352 = vsel %vm153, %v1237, 0
    %2354 = vmatprep.subr.mxu0 0.0
    %2355 = vmatpush1.xpose.msra.mxu0 %v2352
    %2356 = vmatprep.subr.mxu0 0.0
    %2357 = vmatpush1.xpose.msra.mxu0 0.0
    %2358 = vmatprep.subr.mxu0 0.0
    %2359 = vmatpush1.xpose.msra.mxu0 0.0
    %2360 = vmatprep.subr.mxu0 0.0
    %2361 = vmatpush1.xpose.msra.mxu0 0.0
    %2362 = vmatprep.subr.mxu0 0.0
    %2363 = vmatpush1.xpose.msra.mxu0 0.0
    %2364 = vmatprep.subr.mxu0 0.0
    %2365 = vmatpush1.xpose.msra.mxu0 0.0
    %2366 = vmatprep.subr.mxu0 0.0
    %2367 = vmatpush1.xpose.msra.mxu0 0.0
    %2368 = vmatprep.subr.mxu0 0.0
    %2369 = vmatpush1.xpose.msra.mxu0 0.0
    %2370 = vmatprep.subr.mxu0 0.0
    %2371 = vmatpush1.xpose.msra.mxu0 0.0
    %2372 = vmatprep.subr.mxu0 0.0
    %2373 = vmatpush1.xpose.msra.mxu0 0.0
    %2374 = vmatprep.subr.mxu0 0.0
    %2375 = vmatpush1.xpose.msra.mxu0 0.0
    %2376 = vmatprep.subr.mxu0 0.0
    %2377 = vmatpush1.xpose.msra.mxu0 0.0
    %2378 = vmatprep.subr.mxu0 0.0
    %2379 = vmatpush1.xpose.msra.mxu0 0.0
    %2380 = vmatprep.subr.mxu0 0.0
    %2381 = vmatpush1.xpose.msra.mxu0 0.0
    %2382 = vmatprep.subr.mxu0 0.0
    %2383 = vmatpush1.xpose.msra.mxu0 0.0
    %2384 = vmatprep.subr.mxu0 0.0
    %2385 = vmatpush1.xpose.msra.mxu0 0.0
    %2386 = vmatprep.subr.mxu0 0.0
    %2387 = vmatpush1.xpose.msra.mxu0 0.0
    %2388 = vmatprep.subr.mxu0 0.0
    %2389 = vmatpush1.xpose.msra.mxu0 0.0
    %2390 = vmatprep.subr.mxu0 0.0
    %2391 = vmatpush1.xpose.msra.mxu0 0.0
    %2392 = vmatprep.subr.mxu0 0.0
    %2393 = vmatpush1.xpose.msra.mxu0 0.0
    %2394 = vmatprep.subr.mxu0 0.0
    %2395 = vmatpush1.xpose.msra.mxu0 0.0
    %2396 = vmatprep.subr.mxu0 0.0
    %2397 = vmatpush1.xpose.msra.mxu0 0.0
    %2398 = vmatprep.subr.mxu0 0.0
    %2399 = vmatpush1.xpose.msra.mxu0 0.0
    %2400 = vmatprep.subr.mxu0 0.0
    %2401 = vmatpush1.xpose.msra.mxu0 0.0
    %2402 = vmatprep.subr.mxu0 0.0
    %2403 = vmatpush1.xpose.msra.mxu0 0.0
    %2404 = vmatprep.subr.mxu0 0.0
    %2405 = vmatpush1.xpose.msra.mxu0 0.0
    %2406 = vmatprep.subr.mxu0 0.0
    %2407 = vmatpush1.xpose.msra.mxu0 0.0
    %2408 = vmatprep.subr.mxu0 0.0
    %2409 = vmatpush1.xpose.msra.mxu0 0.0
    %2410 = vmatprep.subr.mxu0 0.0
    %2411 = vmatpush1.xpose.msra.mxu0 0.0
    %2412 = vmatprep.subr.mxu0 0.0
    %2413 = vmatpush1.xpose.msra.mxu0 0.0
    %2414 = vmatprep.subr.mxu0 0.0
    %2415 = vmatpush1.xpose.msra.mxu0 0.0
    %2416 = vmatprep.subr.mxu0 0.0
    %2417 = vmatpush1.xpose.msra.mxu0 0.0
    %2418 = vmatprep.mubr.f32.mxu0 0.0
    %2419 = vmatmul.mubr.f32.gmra.mrb[0].mxu0 %v2349
    %v2420 = vpop.f32.mrb[0].mxu0
    %v2421 = vadd.f32 0.0, %v2420
    %v2422 = vpop.f32.mrb[0].mxu0
    %2423 = vdwg.mxu0
    %v2425 = vsel %vm153, %v727, 0
    %v2428 = vsel %vm153, %v1307, 0
    %2430 = vmatprep.subr.mxu0 0.0
    %2431 = vmatpush1.xpose.msra.mxu0 %v2428
    %2432 = vmatprep.subr.mxu0 0.0
    %2433 = vmatpush1.xpose.msra.mxu0 0.0
    %2434 = vmatprep.subr.mxu0 0.0
    %2435 = vmatpush1.xpose.msra.mxu0 0.0
    %2436 = vmatprep.subr.mxu0 0.0
    %2437 = vmatpush1.xpose.msra.mxu0 0.0
    %2438 = vmatprep.subr.mxu0 0.0
    %2439 = vmatpush1.xpose.msra.mxu0 0.0
    %2440 = vmatprep.subr.mxu0 0.0
    %2441 = vmatpush1.xpose.msra.mxu0 0.0
    %2442 = vmatprep.subr.mxu0 0.0
    %2443 = vmatpush1.xpose.msra.mxu0 0.0
    %2444 = vmatprep.subr.mxu0 0.0
    %2445 = vmatpush1.xpose.msra.mxu0 0.0
    %2446 = vmatprep.subr.mxu0 0.0
    %2447 = vmatpush1.xpose.msra.mxu0 0.0
    %2448 = vmatprep.subr.mxu0 0.0
    %2449 = vmatpush1.xpose.msra.mxu0 0.0
    %2450 = vmatprep.subr.mxu0 0.0
    %2451 = vmatpush1.xpose.msra.mxu0 0.0
    %2452 = vmatprep.subr.mxu0 0.0
    %2453 = vmatpush1.xpose.msra.mxu0 0.0
    %2454 = vmatprep.subr.mxu0 0.0
    %2455 = vmatpush1.xpose.msra.mxu0 0.0
    %2456 = vmatprep.subr.mxu0 0.0
    %2457 = vmatpush1.xpose.msra.mxu0 0.0
    %2458 = vmatprep.subr.mxu0 0.0
    %2459 = vmatpush1.xpose.msra.mxu0 0.0
    %2460 = vmatprep.subr.mxu0 0.0
    %2461 = vmatpush1.xpose.msra.mxu0 0.0
    %2462 = vmatprep.subr.mxu0 0.0
    %2463 = vmatpush1.xpose.msra.mxu0 0.0
    %2464 = vmatprep.subr.mxu0 0.0
    %2465 = vmatpush1.xpose.msra.mxu0 0.0
    %2466 = vmatprep.subr.mxu0 0.0
    %2467 = vmatpush1.xpose.msra.mxu0 0.0
    %2468 = vmatprep.subr.mxu0 0.0
    %2469 = vmatpush1.xpose.msra.mxu0 0.0
    %2470 = vmatprep.subr.mxu0 0.0
    %2471 = vmatpush1.xpose.msra.mxu0 0.0
    %2472 = vmatprep.subr.mxu0 0.0
    %2473 = vmatpush1.xpose.msra.mxu0 0.0
    %2474 = vmatprep.subr.mxu0 0.0
    %2475 = vmatpush1.xpose.msra.mxu0 0.0
    %2476 = vmatprep.subr.mxu0 0.0
    %2477 = vmatpush1.xpose.msra.mxu0 0.0
    %2478 = vmatprep.subr.mxu0 0.0
    %2479 = vmatpush1.xpose.msra.mxu0 0.0
    %2480 = vmatprep.subr.mxu0 0.0
    %2481 = vmatpush1.xpose.msra.mxu0 0.0
    %2482 = vmatprep.subr.mxu0 0.0
    %2483 = vmatpush1.xpose.msra.mxu0 0.0
    %2484 = vmatprep.subr.mxu0 0.0
    %2485 = vmatpush1.xpose.msra.mxu0 0.0
    %2486 = vmatprep.subr.mxu0 0.0
    %2487 = vmatpush1.xpose.msra.mxu0 0.0
    %2488 = vmatprep.subr.mxu0 0.0
    %2489 = vmatpush1.xpose.msra.mxu0 0.0
    %2490 = vmatprep.subr.mxu0 0.0
    %2491 = vmatpush1.xpose.msra.mxu0 0.0
    %2492 = vmatprep.subr.mxu0 0.0
    %2493 = vmatpush1.xpose.msra.mxu0 0.0
    %2494 = vmatprep.mubr.f32.mxu0 0.0
    %2495 = vmatmul.mubr.f32.gmra.mrb[0].mxu0 %v2425
    %v2496 = vpop.f32.mrb[0].mxu0
    %v2497 = vadd.f32 0.0, %v2496
    %v2498 = vpop.f32.mrb[0].mxu0
    %2499 = vdwg.mxu0
    %vm2500 = vcmask 64512
    %v2501 = vsel %vm2500, %v1965, -inf
    %2502 = vmax.xlane.f32.xlu0 %v2501
    %v2503 = vpop.xlane.xlu0 %2502
    %v2504 = vsel %vm2500, %v2041, -inf
    %2505 = vmax.xlane.f32.xlu0 %v2504
    %v2506 = vpop.xlane.xlu0 %2505
    %v2507 = vsel %vm2500, %v2117, -inf
    %2508 = vmax.xlane.f32.xlu0 %v2507
    %v2509 = vpop.xlane.xlu0 %2508
    %v2510 = vsel %vm2500, %v2193, -inf
    %2511 = vmax.xlane.f32.xlu0 %v2510
    %v2512 = vpop.xlane.xlu0 %2511
    %v2513 = vsel %vm2500, %v2269, -inf
    %2514 = vmax.xlane.f32.xlu0 %v2513
    %v2515 = vpop.xlane.xlu0 %2514
    %v2516 = vsel %vm2500, %v2345, -inf
    %2517 = vmax.xlane.f32.xlu0 %v2516
    %v2518 = vpop.xlane.xlu0 %2517
    %v2519 = vsel %vm2500, %v2421, -inf
    %2520 = vmax.xlane.f32.xlu0 %v2519
    %v2521 = vpop.xlane.xlu0 %2520
    %v2522 = vsel %vm2500, %v2497, -inf
    %2523 = vmax.xlane.f32.xlu0 %v2522
    %v2524 = vpop.xlane.xlu0 %2523
    %v2525 = vsub.f32 %v1965, %v2503
    %v2526 = vsub.f32 %v2041, %v2506
    %v2527 = vsub.f32 %v2117, %v2509
    %v2528 = vsub.f32 %v2193, %v2512
    %v2529 = vsub.f32 %v2269, %v2515
    %v2530 = vsub.f32 %v2345, %v2518
    %v2531 = vsub.f32 %v2421, %v2521
    %v2532 = vsub.f32 %v2497, %v2524
    %v2533 = vmul.f32 %v2525, 1.442695
    %v2534 = vpow.pop %v2533
    %v2535 = vmul.f32 %v2526, 1.442695
    %v2536 = vpow.pop %v2535
    %v2537 = vmul.f32 %v2527, 1.442695
    %v2538 = vpow.pop %v2537
    %v2539 = vmul.f32 %v2528, 1.442695
    %v2540 = vpow.pop %v2539
    %v2541 = vmul.f32 %v2529, 1.442695
    %v2542 = vpow.pop %v2541
    %v2543 = vmul.f32 %v2530, 1.442695
    %v2544 = vpow.pop %v2543
    %v2545 = vmul.f32 %v2531, 1.442695
    %v2546 = vpow.pop %v2545
    %v2547 = vmul.f32 %v2532, 1.442695
    %v2548 = vpow.pop %v2547
    %v2549 = vsel %vm2500, %v2534, 0.0
    %2550 = vadd.xlane.f32.xlu0 %v2549
    %v2551 = vpop.xlane.xlu0 %2550
    %v2552 = vsel %vm2500, %v2536, 0.0
    %2553 = vadd.xlane.f32.xlu0 %v2552
    %v2554 = vpop.xlane.xlu0 %2553
    %v2555 = vsel %vm2500, %v2538, 0.0
    %2556 = vadd.xlane.f32.xlu0 %v2555
    %v2557 = vpop.xlane.xlu0 %2556
    %v2558 = vsel %vm2500, %v2540, 0.0
    %2559 = vadd.xlane.f32.xlu0 %v2558
    %v2560 = vpop.xlane.xlu0 %2559
    %v2561 = vsel %vm2500, %v2542, 0.0
    %2562 = vadd.xlane.f32.xlu0 %v2561
    %v2563 = vpop.xlane.xlu0 %2562
    %v2564 = vsel %vm2500, %v2544, 0.0
    %2565 = vadd.xlane.f32.xlu0 %v2564
    %v2566 = vpop.xlane.xlu0 %2565
    %v2567 = vsel %vm2500, %v2546, 0.0
    %2568 = vadd.xlane.f32.xlu0 %v2567
    %v2569 = vpop.xlane.xlu0 %2568
    %v2570 = vsel %vm2500, %v2548, 0.0
    %2571 = vadd.xlane.f32.xlu0 %v2570
    %v2572 = vpop.xlane.xlu0 %2571
    %v2573 = vrcp.pop %v2551
    %v2574 = vrcp.pop %v2554
    %v2575 = vrcp.pop %v2557
    %v2576 = vrcp.pop %v2560
    %v2577 = vrcp.pop %v2563
    %v2578 = vrcp.pop %v2566
    %v2579 = vrcp.pop %v2569
    %v2580 = vrcp.pop %v2572
    %v2581 = vmul.f32 %v2534, %v2573
    %v2582 = vmul.f32 %v2536, %v2574
    %v2583 = vmul.f32 %v2538, %v2575
    %v2584 = vmul.f32 %v2540, %v2576
    %v2585 = vmul.f32 %v2542, %v2577
    %v2586 = vmul.f32 %v2544, %v2578
    %v2587 = vmul.f32 %v2546, %v2579
    %v2588 = vmul.f32 %v2548, %v2580
    %2589 = vst.msk [vmem:[#allocation15] sm:$0xff] %vm2500, %v2581
    %2590 = vst.msk [vmem:[#allocation15 + $0x8] sm:$0xff] %vm2500, %v2582
    %2591 = vst.msk [vmem:[#allocation15 + $0x10] sm:$0xff] %vm2500, %v2583
    %2592 = vst.msk [vmem:[#allocation15 + $0x18] sm:$0xff] %vm2500, %v2584
    %2593 = vst.msk [vmem:[#allocation15 + $0x20] sm:$0xff] %vm2500, %v2585
    %2594 = vst.msk [vmem:[#allocation15 + $0x28] sm:$0xff] %vm2500, %v2586
    %2595 = vst.msk [vmem:[#allocation15 + $0x30] sm:$0xff] %vm2500, %v2587
    %2596 = vst.msk [vmem:[#allocation15 + $0x38] sm:$0xff] %vm2500, %v2588
    %v2598 = vsel %vm2500, %v2581, 0
    %2600 = vmatprep.subr.mxu0 0.0
    %2601 = vmatpush1.msra.mxu0 %v1396
    %2602 = vmatprep.subr.mxu0 0.0
    %2603 = vmatpush1.msra.mxu0 0.0
    %2604 = vmatprep.subr.mxu0 0.0
    %2605 = vmatpush1.msra.mxu0 0.0
    %2606 = vmatprep.subr.mxu0 0.0
    %2607 = vmatpush1.msra.mxu0 0.0
    %2608 = vmatprep.subr.mxu0 0.0
    %2609 = vmatpush1.msra.mxu0 0.0
    %2610 = vmatprep.subr.mxu0 0.0
    %2611 = vmatpush1.msra.mxu0 0.0
    %2612 = vmatprep.subr.mxu0 0.0
    %2613 = vmatpush1.msra.mxu0 0.0
    %2614 = vmatprep.subr.mxu0 0.0
    %2615 = vmatpush1.msra.mxu0 0.0
    %2616 = vmatprep.subr.mxu0 0.0
    %2617 = vmatpush1.msra.mxu0 0.0
    %2618 = vmatprep.subr.mxu0 0.0
    %2619 = vmatpush1.msra.mxu0 0.0
    %2620 = vmatprep.subr.mxu0 0.0
    %2621 = vmatpush1.msra.mxu0 0.0
    %2622 = vmatprep.subr.mxu0 0.0
    %2623 = vmatpush1.msra.mxu0 0.0
    %2624 = vmatprep.subr.mxu0 0.0
    %2625 = vmatpush1.msra.mxu0 0.0
    %2626 = vmatprep.subr.mxu0 0.0
    %2627 = vmatpush1.msra.mxu0 0.0
    %2628 = vmatprep.subr.mxu0 0.0
    %2629 = vmatpush1.msra.mxu0 0.0
    %2630 = vmatprep.subr.mxu0 0.0
    %2631 = vmatpush1.msra.mxu0 0.0
    %2632 = vmatprep.subr.mxu0 0.0
    %2633 = vmatpush1.msra.mxu0 0.0
    %2634 = vmatprep.subr.mxu0 0.0
    %2635 = vmatpush1.msra.mxu0 0.0
    %2636 = vmatprep.subr.mxu0 0.0
    %2637 = vmatpush1.msra.mxu0 0.0
    %2638 = vmatprep.subr.mxu0 0.0
    %2639 = vmatpush1.msra.mxu0 0.0
    %2640 = vmatprep.subr.mxu0 0.0
    %2641 = vmatpush1.msra.mxu0 0.0
    %2642 = vmatprep.subr.mxu0 0.0
    %2643 = vmatpush1.msra.mxu0 0.0
    %2644 = vmatprep.subr.mxu0 0.0
    %2645 = vmatpush1.msra.mxu0 0.0
    %2646 = vmatprep.subr.mxu0 0.0
    %2647 = vmatpush1.msra.mxu0 0.0
    %2648 = vmatprep.subr.mxu0 0.0
    %2649 = vmatpush1.msra.mxu0 0.0
    %2650 = vmatprep.subr.mxu0 0.0
    %2651 = vmatpush1.msra.mxu0 0.0
    %2652 = vmatprep.subr.mxu0 0.0
    %2653 = vmatpush1.msra.mxu0 0.0
    %2654 = vmatprep.subr.mxu0 0.0
    %2655 = vmatpush1.msra.mxu0 0.0
    %2656 = vmatprep.subr.mxu0 0.0
    %2657 = vmatpush1.msra.mxu0 0.0
    %2658 = vmatprep.subr.mxu0 0.0
    %2659 = vmatpush1.msra.mxu0 0.0
    %2660 = vmatprep.subr.mxu0 0.0
    %2661 = vmatpush1.msra.mxu0 0.0
    %2662 = vmatprep.subr.mxu0 0.0
    %2663 = vmatpush1.msra.mxu0 0.0
    %2664 = vmatprep.mubr.f32.mxu0 0.0
    %2665 = vmatmul.mubr.f32.gmra.mrb[0].mxu0 %v2598
    %v2666 = vpop.f32.mrb[0].mxu0
    %v2667 = vadd.f32 0.0, %v2666
    %v2668 = vpop.f32.mrb[0].mxu0
    %2669 = vdwg.mxu0
    %v2671 = vsel %vm2500, %v2582, 0
    %2673 = vmatprep.subr.mxu0 0.0
    %2674 = vmatpush1.msra.mxu0 %v1466
    %2675 = vmatprep.subr.mxu0 0.0
    %2676 = vmatpush1.msra.mxu0 0.0
    %2677 = vmatprep.subr.mxu0 0.0
    %2678 = vmatpush1.msra.mxu0 0.0
    %2679 = vmatprep.subr.mxu0 0.0
    %2680 = vmatpush1.msra.mxu0 0.0
    %2681 = vmatprep.subr.mxu0 0.0
    %2682 = vmatpush1.msra.mxu0 0.0
    %2683 = vmatprep.subr.mxu0 0.0
    %2684 = vmatpush1.msra.mxu0 0.0
    %2685 = vmatprep.subr.mxu0 0.0
    %2686 = vmatpush1.msra.mxu0 0.0
    %2687 = vmatprep.subr.mxu0 0.0
    %2688 = vmatpush1.msra.mxu0 0.0
    %2689 = vmatprep.subr.mxu0 0.0
    %2690 = vmatpush1.msra.mxu0 0.0
    %2691 = vmatprep.subr.mxu0 0.0
    %2692 = vmatpush1.msra.mxu0 0.0
    %2693 = vmatprep.subr.mxu0 0.0
    %2694 = vmatpush1.msra.mxu0 0.0
    %2695 = vmatprep.subr.mxu0 0.0
    %2696 = vmatpush1.msra.mxu0 0.0
    %2697 = vmatprep.subr.mxu0 0.0
    %2698 = vmatpush1.msra.mxu0 0.0
    %2699 = vmatprep.subr.mxu0 0.0
    %2700 = vmatpush1.msra.mxu0 0.0
    %2701 = vmatprep.subr.mxu0 0.0
    %2702 = vmatpush1.msra.mxu0 0.0
    %2703 = vmatprep.subr.mxu0 0.0
    %2704 = vmatpush1.msra.mxu0 0.0
    %2705 = vmatprep.subr.mxu0 0.0
    %2706 = vmatpush1.msra.mxu0 0.0
    %2707 = vmatprep.subr.mxu0 0.0
    %2708 = vmatpush1.msra.mxu0 0.0
    %2709 = vmatprep.subr.mxu0 0.0
    %2710 = vmatpush1.msra.mxu0 0.0
    %2711 = vmatprep.subr.mxu0 0.0
    %2712 = vmatpush1.msra.mxu0 0.0
    %2713 = vmatprep.subr.mxu0 0.0
    %2714 = vmatpush1.msra.mxu0 0.0
    %2715 = vmatprep.subr.mxu0 0.0
    %2716 = vmatpush1.msra.mxu0 0.0
    %2717 = vmatprep.subr.mxu0 0.0
    %2718 = vmatpush1.msra.mxu0 0.0
    %2719 = vmatprep.subr.mxu0 0.0
    %2720 = vmatpush1.msra.mxu0 0.0
    %2721 = vmatprep.subr.mxu0 0.0
    %2722 = vmatpush1.msra.mxu0 0.0
    %2723 = vmatprep.subr.mxu0 0.0
    %2724 = vmatpush1.msra.mxu0 0.0
    %2725 = vmatprep.subr.mxu0 0.0
    %2726 = vmatpush1.msra.mxu0 0.0
    %2727 = vmatprep.subr.mxu0 0.0
    %2728 = vmatpush1.msra.mxu0 0.0
    %2729 = vmatprep.subr.mxu0 0.0
    %2730 = vmatpush1.msra.mxu0 0.0
    %2731 = vmatprep.subr.mxu0 0.0
    %2732 = vmatpush1.msra.mxu0 0.0
    %2733 = vmatprep.subr.mxu0 0.0
    %2734 = vmatpush1.msra.mxu0 0.0
    %2735 = vmatprep.subr.mxu0 0.0
    %2736 = vmatpush1.msra.mxu0 0.0
    %2737 = vmatprep.mubr.f32.mxu0 0.0
    %2738 = vmatmul.mubr.f32.gmra.mrb[0].mxu0 %v2671
    %v2739 = vpop.f32.mrb[0].mxu0
    %v2740 = vadd.f32 0.0, %v2739
    %v2741 = vpop.f32.mrb[0].mxu0
    %2742 = vdwg.mxu0
    %v2744 = vsel %vm2500, %v2583, 0
    %2746 = vmatprep.subr.mxu0 0.0
    %2747 = vmatpush1.msra.mxu0 %v1536
    %2748 = vmatprep.subr.mxu0 0.0
    %2749 = vmatpush1.msra.mxu0 0.0
    %2750 = vmatprep.subr.mxu0 0.0
    %2751 = vmatpush1.msra.mxu0 0.0
    %2752 = vmatprep.subr.mxu0 0.0
    %2753 = vmatpush1.msra.mxu0 0.0
    %2754 = vmatprep.subr.mxu0 0.0
    %2755 = vmatpush1.msra.mxu0 0.0
    %2756 = vmatprep.subr.mxu0 0.0
    %2757 = vmatpush1.msra.mxu0 0.0
    %2758 = vmatprep.subr.mxu0 0.0
    %2759 = vmatpush1.msra.mxu0 0.0
    %2760 = vmatprep.subr.mxu0 0.0
    %2761 = vmatpush1.msra.mxu0 0.0
    %2762 = vmatprep.subr.mxu0 0.0
    %2763 = vmatpush1.msra.mxu0 0.0
    %2764 = vmatprep.subr.mxu0 0.0
    %2765 = vmatpush1.msra.mxu0 0.0
    %2766 = vmatprep.subr.mxu0 0.0
    %2767 = vmatpush1.msra.mxu0 0.0
    %2768 = vmatprep.subr.mxu0 0.0
    %2769 = vmatpush1.msra.mxu0 0.0
    %2770 = vmatprep.subr.mxu0 0.0
    %2771 = vmatpush1.msra.mxu0 0.0
    %2772 = vmatprep.subr.mxu0 0.0
    %2773 = vmatpush1.msra.mxu0 0.0
    %2774 = vmatprep.subr.mxu0 0.0
    %2775 = vmatpush1.msra.mxu0 0.0
    %2776 = vmatprep.subr.mxu0 0.0
    %2777 = vmatpush1.msra.mxu0 0.0
    %2778 = vmatprep.subr.mxu0 0.0
    %2779 = vmatpush1.msra.mxu0 0.0
    %2780 = vmatprep.subr.mxu0 0.0
    %2781 = vmatpush1.msra.mxu0 0.0
    %2782 = vmatprep.subr.mxu0 0.0
    %2783 = vmatpush1.msra.mxu0 0.0
    %2784 = vmatprep.subr.mxu0 0.0
    %2785 = vmatpush1.msra.mxu0 0.0
    %2786 = vmatprep.subr.mxu0 0.0
    %2787 = vmatpush1.msra.mxu0 0.0
    %2788 = vmatprep.subr.mxu0 0.0
    %2789 = vmatpush1.msra.mxu0 0.0
    %2790 = vmatprep.subr.mxu0 0.0
    %2791 = vmatpush1.msra.mxu0 0.0
    %2792 = vmatprep.subr.mxu0 0.0
    %2793 = vmatpush1.msra.mxu0 0.0
    %2794 = vmatprep.subr.mxu0 0.0
    %2795 = vmatpush1.msra.mxu0 0.0
    %2796 = vmatprep.subr.mxu0 0.0
    %2797 = vmatpush1.msra.mxu0 0.0
    %2798 = vmatprep.subr.mxu0 0.0
    %2799 = vmatpush1.msra.mxu0 0.0
    %2800 = vmatprep.subr.mxu0 0.0
    %2801 = vmatpush1.msra.mxu0 0.0
    %2802 = vmatprep.subr.mxu0 0.0
    %2803 = vmatpush1.msra.mxu0 0.0
    %2804 = vmatprep.subr.mxu0 0.0
    %2805 = vmatpush1.msra.mxu0 0.0
    %2806 = vmatprep.subr.mxu0 0.0
    %2807 = vmatpush1.msra.mxu0 0.0
    %2808 = vmatprep.subr.mxu0 0.0
    %2809 = vmatpush1.msra.mxu0 0.0
    %2810 = vmatprep.mubr.f32.mxu0 0.0
    %2811 = vmatmul.mubr.f32.gmra.mrb[0].mxu0 %v2744
    %v2812 = vpop.f32.mrb[0].mxu0
    %v2813 = vadd.f32 0.0, %v2812
    %v2814 = vpop.f32.mrb[0].mxu0
    %2815 = vdwg.mxu0
    %v2817 = vsel %vm2500, %v2584, 0
    %2819 = vmatprep.subr.mxu0 0.0
    %2820 = vmatpush1.msra.mxu0 %v1606
    %2821 = vmatprep.subr.mxu0 0.0
    %2822 = vmatpush1.msra.mxu0 0.0
    %2823 = vmatprep.subr.mxu0 0.0
    %2824 = vmatpush1.msra.mxu0 0.0
    %2825 = vmatprep.subr.mxu0 0.0
    %2826 = vmatpush1.msra.mxu0 0.0
    %2827 = vmatprep.subr.mxu0 0.0
    %2828 = vmatpush1.msra.mxu0 0.0
    %2829 = vmatprep.subr.mxu0 0.0
    %2830 = vmatpush1.msra.mxu0 0.0
    %2831 = vmatprep.subr.mxu0 0.0
    %2832 = vmatpush1.msra.mxu0 0.0
    %2833 = vmatprep.subr.mxu0 0.0
    %2834 = vmatpush1.msra.mxu0 0.0
    %2835 = vmatprep.subr.mxu0 0.0
    %2836 = vmatpush1.msra.mxu0 0.0
    %2837 = vmatprep.subr.mxu0 0.0
    %2838 = vmatpush1.msra.mxu0 0.0
    %2839 = vmatprep.subr.mxu0 0.0
    %2840 = vmatpush1.msra.mxu0 0.0
    %2841 = vmatprep.subr.mxu0 0.0
    %2842 = vmatpush1.msra.mxu0 0.0
    %2843 = vmatprep.subr.mxu0 0.0
    %2844 = vmatpush1.msra.mxu0 0.0
    %2845 = vmatprep.subr.mxu0 0.0
    %2846 = vmatpush1.msra.mxu0 0.0
    %2847 = vmatprep.subr.mxu0 0.0
    %2848 = vmatpush1.msra.mxu0 0.0
    %2849 = vmatprep.subr.mxu0 0.0
    %2850 = vmatpush1.msra.mxu0 0.0
    %2851 = vmatprep.subr.mxu0 0.0
    %2852 = vmatpush1.msra.mxu0 0.0
    %2853 = vmatprep.subr.mxu0 0.0
    %2854 = vmatpush1.msra.mxu0 0.0
    %2855 = vmatprep.subr.mxu0 0.0
    %2856 = vmatpush1.msra.mxu0 0.0
    %2857 = vmatprep.subr.mxu0 0.0
    %2858 = vmatpush1.msra.mxu0 0.0
    %2859 = vmatprep.subr.mxu0 0.0
    %2860 = vmatpush1.msra.mxu0 0.0
    %2861 = vmatprep.subr.mxu0 0.0
    %2862 = vmatpush1.msra.mxu0 0.0
    %2863 = vmatprep.subr.mxu0 0.0
    %2864 = vmatpush1.msra.mxu0 0.0
    %2865 = vmatprep.subr.mxu0 0.0
    %2866 = vmatpush1.msra.mxu0 0.0
    %2867 = vmatprep.subr.mxu0 0.0
    %2868 = vmatpush1.msra.mxu0 0.0
    %2869 = vmatprep.subr.mxu0 0.0
    %2870 = vmatpush1.msra.mxu0 0.0
    %2871 = vmatprep.subr.mxu0 0.0
    %2872 = vmatpush1.msra.mxu0 0.0
    %2873 = vmatprep.subr.mxu0 0.0
    %2874 = vmatpush1.msra.mxu0 0.0
    %2875 = vmatprep.subr.mxu0 0.0
    %2876 = vmatpush1.msra.mxu0 0.0
    %2877 = vmatprep.subr.mxu0 0.0
    %2878 = vmatpush1.msra.mxu0 0.0
    %2879 = vmatprep.subr.mxu0 0.0
    %2880 = vmatpush1.msra.mxu0 0.0
    %2881 = vmatprep.subr.mxu0 0.0
    %2882 = vmatpush1.msra.mxu0 0.0
    %2883 = vmatprep.mubr.f32.mxu0 0.0
    %2884 = vmatmul.mubr.f32.gmra.mrb[0].mxu0 %v2817
    %v2885 = vpop.f32.mrb[0].mxu0
    %v2886 = vadd.f32 0.0, %v2885
    %v2887 = vpop.f32.mrb[0].mxu0
    %2888 = vdwg.mxu0
    %v2890 = vsel %vm2500, %v2585, 0
    %2892 = vmatprep.subr.mxu0 0.0
    %2893 = vmatpush1.msra.mxu0 %v1679
    %2894 = vmatprep.subr.mxu0 0.0
    %2895 = vmatpush1.msra.mxu0 0.0
    %2896 = vmatprep.subr.mxu0 0.0
    %2897 = vmatpush1.msra.mxu0 0.0
    %2898 = vmatprep.subr.mxu0 0.0
    %2899 = vmatpush1.msra.mxu0 0.0
    %2900 = vmatprep.subr.mxu0 0.0
    %2901 = vmatpush1.msra.mxu0 0.0
    %2902 = vmatprep.subr.mxu0 0.0
    %2903 = vmatpush1.msra.mxu0 0.0
    %2904 = vmatprep.subr.mxu0 0.0
    %2905 = vmatpush1.msra.mxu0 0.0
    %2906 = vmatprep.subr.mxu0 0.0
    %2907 = vmatpush1.msra.mxu0 0.0
    %2908 = vmatprep.subr.mxu0 0.0
    %2909 = vmatpush1.msra.mxu0 0.0
    %2910 = vmatprep.subr.mxu0 0.0
    %2911 = vmatpush1.msra.mxu0 0.0
    %2912 = vmatprep.subr.mxu0 0.0
    %2913 = vmatpush1.msra.mxu0 0.0
    %2914 = vmatprep.subr.mxu0 0.0
    %2915 = vmatpush1.msra.mxu0 0.0
    %2916 = vmatprep.subr.mxu0 0.0
    %2917 = vmatpush1.msra.mxu0 0.0
    %2918 = vmatprep.subr.mxu0 0.0
    %2919 = vmatpush1.msra.mxu0 0.0
    %2920 = vmatprep.subr.mxu0 0.0
    %2921 = vmatpush1.msra.mxu0 0.0
    %2922 = vmatprep.subr.mxu0 0.0
    %2923 = vmatpush1.msra.mxu0 0.0
    %2924 = vmatprep.subr.mxu0 0.0
    %2925 = vmatpush1.msra.mxu0 0.0
    %2926 = vmatprep.subr.mxu0 0.0
    %2927 = vmatpush1.msra.mxu0 0.0
    %2928 = vmatprep.subr.mxu0 0.0
    %2929 = vmatpush1.msra.mxu0 0.0
    %2930 = vmatprep.subr.mxu0 0.0
    %2931 = vmatpush1.msra.mxu0 0.0
    %2932 = vmatprep.subr.mxu0 0.0
    %2933 = vmatpush1.msra.mxu0 0.0
    %2934 = vmatprep.subr.mxu0 0.0
    %2935 = vmatpush1.msra.mxu0 0.0
    %2936 = vmatprep.subr.mxu0 0.0
    %2937 = vmatpush1.msra.mxu0 0.0
    %2938 = vmatprep.subr.mxu0 0.0
    %2939 = vmatpush1.msra.mxu0 0.0
    %2940 = vmatprep.subr.mxu0 0.0
    %2941 = vmatpush1.msra.mxu0 0.0
    %2942 = vmatprep.subr.mxu0 0.0
    %2943 = vmatpush1.msra.mxu0 0.0
    %2944 = vmatprep.subr.mxu0 0.0
    %2945 = vmatpush1.msra.mxu0 0.0
    %2946 = vmatprep.subr.mxu0 0.0
    %2947 = vmatpush1.msra.mxu0 0.0
    %2948 = vmatprep.subr.mxu0 0.0
    %2949 = vmatpush1.msra.mxu0 0.0
    %2950 = vmatprep.subr.mxu0 0.0
    %2951 = vmatpush1.msra.mxu0 0.0
    %2952 = vmatprep.subr.mxu0 0.0
    %2953 = vmatpush1.msra.mxu0 0.0
    %2954 = vmatprep.subr.mxu0 0.0
    %2955 = vmatpush1.msra.mxu0 0.0
    %2956 = vmatprep.mubr.f32.mxu0 0.0
    %2957 = vmatmul.mubr.f32.gmra.mrb[0].mxu0 %v2890
    %v2958 = vpop.f32.mrb[0].mxu0
    %v2959 = vadd.f32 0.0, %v2958
    %v2960 = vpop.f32.mrb[0].mxu0
    %2961 = vdwg.mxu0
    %v2963 = vsel %vm2500, %v2586, 0
    %2965 = vmatprep.subr.mxu0 0.0
    %2966 = vmatpush1.msra.mxu0 %v1749
    %2967 = vmatprep.subr.mxu0 0.0
    %2968 = vmatpush1.msra.mxu0 0.0
    %2969 = vmatprep.subr.mxu0 0.0
    %2970 = vmatpush1.msra.mxu0 0.0
    %2971 = vmatprep.subr.mxu0 0.0
    %2972 = vmatpush1.msra.mxu0 0.0
    %2973 = vmatprep.subr.mxu0 0.0
    %2974 = vmatpush1.msra.mxu0 0.0
    %2975 = vmatprep.subr.mxu0 0.0
    %2976 = vmatpush1.msra.mxu0 0.0
    %2977 = vmatprep.subr.mxu0 0.0
    %2978 = vmatpush1.msra.mxu0 0.0
    %2979 = vmatprep.subr.mxu0 0.0
    %2980 = vmatpush1.msra.mxu0 0.0
    %2981 = vmatprep.subr.mxu0 0.0
    %2982 = vmatpush1.msra.mxu0 0.0
    %2983 = vmatprep.subr.mxu0 0.0
    %2984 = vmatpush1.msra.mxu0 0.0
    %2985 = vmatprep.subr.mxu0 0.0
    %2986 = vmatpush1.msra.mxu0 0.0
    %2987 = vmatprep.subr.mxu0 0.0
    %2988 = vmatpush1.msra.mxu0 0.0
    %2989 = vmatprep.subr.mxu0 0.0
    %2990 = vmatpush1.msra.mxu0 0.0
    %2991 = vmatprep.subr.mxu0 0.0
    %2992 = vmatpush1.msra.mxu0 0.0
    %2993 = vmatprep.subr.mxu0 0.0
    %2994 = vmatpush1.msra.mxu0 0.0
    %2995 = vmatprep.subr.mxu0 0.0
    %2996 = vmatpush1.msra.mxu0 0.0
    %2997 = vmatprep.subr.mxu0 0.0
    %2998 = vmatpush1.msra.mxu0 0.0
    %2999 = vmatprep.subr.mxu0 0.0
    %3000 = vmatpush1.msra.mxu0 0.0
    %3001 = vmatprep.subr.mxu0 0.0
    %3002 = vmatpush1.msra.mxu0 0.0
    %3003 = vmatprep.subr.mxu0 0.0
    %3004 = vmatpush1.msra.mxu0 0.0
    %3005 = vmatprep.subr.mxu0 0.0
    %3006 = vmatpush1.msra.mxu0 0.0
    %3007 = vmatprep.subr.mxu0 0.0
    %3008 = vmatpush1.msra.mxu0 0.0
    %3009 = vmatprep.subr.mxu0 0.0
    %3010 = vmatpush1.msra.mxu0 0.0
    %3011 = vmatprep.subr.mxu0 0.0
    %3012 = vmatpush1.msra.mxu0 0.0
    %3013 = vmatprep.subr.mxu0 0.0
    %3014 = vmatpush1.msra.mxu0 0.0
    %3015 = vmatprep.subr.mxu0 0.0
    %3016 = vmatpush1.msra.mxu0 0.0
    %3017 = vmatprep.subr.mxu0 0.0
    %3018 = vmatpush1.msra.mxu0 0.0
    %3019 = vmatprep.subr.mxu0 0.0
    %3020 = vmatpush1.msra.mxu0 0.0
    %3021 = vmatprep.subr.mxu0 0.0
    %3022 = vmatpush1.msra.mxu0 0.0
    %3023 = vmatprep.subr.mxu0 0.0
    %3024 = vmatpush1.msra.mxu0 0.0
    %3025 = vmatprep.subr.mxu0 0.0
    %3026 = vmatpush1.msra.mxu0 0.0
    %3027 = vmatprep.subr.mxu0 0.0
    %3028 = vmatpush1.msra.mxu0 0.0
    %3029 = vmatprep.mubr.f32.mxu0 0.0
    %3030 = vmatmul.mubr.f32.gmra.mrb[0].mxu0 %v2963
    %v3031 = vpop.f32.mrb[0].mxu0
    %v3032 = vadd.f32 0.0, %v3031
    %v3033 = vpop.f32.mrb[0].mxu0
    %3034 = vdwg.mxu0
    %v3036 = vsel %vm2500, %v2587, 0
    %3038 = vmatprep.subr.mxu0 0.0
    %3039 = vmatpush1.msra.mxu0 %v1819
    %3040 = vmatprep.subr.mxu0 0.0
    %3041 = vmatpush1.msra.mxu0 0.0
    %3042 = vmatprep.subr.mxu0 0.0
    %3043 = vmatpush1.msra.mxu0 0.0
    %3044 = vmatprep.subr.mxu0 0.0
    %3045 = vmatpush1.msra.mxu0 0.0
    %3046 = vmatprep.subr.mxu0 0.0
    %3047 = vmatpush1.msra.mxu0 0.0
    %3048 = vmatprep.subr.mxu0 0.0
    %3049 = vmatpush1.msra.mxu0 0.0
    %3050 = vmatprep.subr.mxu0 0.0
    %3051 = vmatpush1.msra.mxu0 0.0
    %3052 = vmatprep.subr.mxu0 0.0
    %3053 = vmatpush1.msra.mxu0 0.0
    %3054 = vmatprep.subr.mxu0 0.0
    %3055 = vmatpush1.msra.mxu0 0.0
    %3056 = vmatprep.subr.mxu0 0.0
    %3057 = vmatpush1.msra.mxu0 0.0
    %3058 = vmatprep.subr.mxu0 0.0
    %3059 = vmatpush1.msra.mxu0 0.0
    %3060 = vmatprep.subr.mxu0 0.0
    %3061 = vmatpush1.msra.mxu0 0.0
    %3062 = vmatprep.subr.mxu0 0.0
    %3063 = vmatpush1.msra.mxu0 0.0
    %3064 = vmatprep.subr.mxu0 0.0
    %3065 = vmatpush1.msra.mxu0 0.0
    %3066 = vmatprep.subr.mxu0 0.0
    %3067 = vmatpush1.msra.mxu0 0.0
    %3068 = vmatprep.subr.mxu0 0.0
    %3069 = vmatpush1.msra.mxu0 0.0
    %3070 = vmatprep.subr.mxu0 0.0
    %3071 = vmatpush1.msra.mxu0 0.0
    %3072 = vmatprep.subr.mxu0 0.0
    %3073 = vmatpush1.msra.mxu0 0.0
    %3074 = vmatprep.subr.mxu0 0.0
    %3075 = vmatpush1.msra.mxu0 0.0
    %3076 = vmatprep.subr.mxu0 0.0
    %3077 = vmatpush1.msra.mxu0 0.0
    %3078 = vmatprep.subr.mxu0 0.0
    %3079 = vmatpush1.msra.mxu0 0.0
    %3080 = vmatprep.subr.mxu0 0.0
    %3081 = vmatpush1.msra.mxu0 0.0
    %3082 = vmatprep.subr.mxu0 0.0
    %3083 = vmatpush1.msra.mxu0 0.0
    %3084 = vmatprep.subr.mxu0 0.0
    %3085 = vmatpush1.msra.mxu0 0.0
    %3086 = vmatprep.subr.mxu0 0.0
    %3087 = vmatpush1.msra.mxu0 0.0
    %3088 = vmatprep.subr.mxu0 0.0
    %3089 = vmatpush1.msra.mxu0 0.0
    %3090 = vmatprep.subr.mxu0 0.0
    %3091 = vmatpush1.msra.mxu0 0.0
    %3092 = vmatprep.subr.mxu0 0.0
    %3093 = vmatpush1.msra.mxu0 0.0
    %3094 = vmatprep.subr.mxu0 0.0
    %3095 = vmatpush1.msra.mxu0 0.0
    %3096 = vmatprep.subr.mxu0 0.0
    %3097 = vmatpush1.msra.mxu0 0.0
    %3098 = vmatprep.subr.mxu0 0.0
    %3099 = vmatpush1.msra.mxu0 0.0
    %3100 = vmatprep.subr.mxu0 0.0
    %3101 = vmatpush1.msra.mxu0 0.0
    %3102 = vmatprep.mubr.f32.mxu0 0.0
    %3103 = vmatmul.mubr.f32.gmra.mrb[0].mxu0 %v3036
    %v3104 = vpop.f32.mrb[0].mxu0
    %v3105 = vadd.f32 0.0, %v3104
    %v3106 = vpop.f32.mrb[0].mxu0
    %3107 = vdwg.mxu0
    %v3109 = vsel %vm2500, %v2588, 0
    %3111 = vmatprep.subr.mxu0 0.0
    %3112 = vmatpush1.msra.mxu0 %v1889
    %3113 = vmatprep.subr.mxu0 0.0
    %3114 = vmatpush1.msra.mxu0 0.0
    %3115 = vmatprep.subr.mxu0 0.0
    %3116 = vmatpush1.msra.mxu0 0.0
    %3117 = vmatprep.subr.mxu0 0.0
    %3118 = vmatpush1.msra.mxu0 0.0
    %3119 = vmatprep.subr.mxu0 0.0
    %3120 = vmatpush1.msra.mxu0 0.0
    %3121 = vmatprep.subr.mxu0 0.0
    %3122 = vmatpush1.msra.mxu0 0.0
    %3123 = vmatprep.subr.mxu0 0.0
    %3124 = vmatpush1.msra.mxu0 0.0
    %3125 = vmatprep.subr.mxu0 0.0
    %3126 = vmatpush1.msra.mxu0 0.0
    %3127 = vmatprep.subr.mxu0 0.0
    %3128 = vmatpush1.msra.mxu0 0.0
    %3129 = vmatprep.subr.mxu0 0.0
    %3130 = vmatpush1.msra.mxu0 0.0
    %3131 = vmatprep.subr.mxu0 0.0
    %3132 = vmatpush1.msra.mxu0 0.0
    %3133 = vmatprep.subr.mxu0 0.0
    %3134 = vmatpush1.msra.mxu0 0.0
    %3135 = vmatprep.subr.mxu0 0.0
    %3136 = vmatpush1.msra.mxu0 0.0
    %3137 = vmatprep.subr.mxu0 0.0
    %3138 = vmatpush1.msra.mxu0 0.0
    %3139 = vmatprep.subr.mxu0 0.0
    %3140 = vmatpush1.msra.mxu0 0.0
    %3141 = vmatprep.subr.mxu0 0.0
    %3142 = vmatpush1.msra.mxu0 0.0
    %3143 = vmatprep.subr.mxu0 0.0
    %3144 = vmatpush1.msra.mxu0 0.0
    %3145 = vmatprep.subr.mxu0 0.0
    %3146 = vmatpush1.msra.mxu0 0.0
    %3147 = vmatprep.subr.mxu0 0.0
    %3148 = vmatpush1.msra.mxu0 0.0
    %3149 = vmatprep.subr.mxu0 0.0
    %3150 = vmatpush1.msra.mxu0 0.0
    %3151 = vmatprep.subr.mxu0 0.0
    %3152 = vmatpush1.msra.mxu0 0.0
    %3153 = vmatprep.subr.mxu0 0.0
    %3154 = vmatpush1.msra.mxu0 0.0
    %3155 = vmatprep.subr.mxu0 0.0
    %3156 = vmatpush1.msra.mxu0 0.0
    %3157 = vmatprep.subr.mxu0 0.0
    %3158 = vmatpush1.msra.mxu0 0.0
    %3159 = vmatprep.subr.mxu0 0.0
    %3160 = vmatpush1.msra.mxu0 0.0
    %3161 = vmatprep.subr.mxu0 0.0
    %3162 = vmatpush1.msra.mxu0 0.0
    %3163 = vmatprep.subr.mxu0 0.0
    %3164 = vmatpush1.msra.mxu0 0.0
    %3165 = vmatprep.subr.mxu0 0.0
    %3166 = vmatpush1.msra.mxu0 0.0
    %3167 = vmatprep.subr.mxu0 0.0
    %3168 = vmatpush1.msra.mxu0 0.0
    %3169 = vmatprep.subr.mxu0 0.0
    %3170 = vmatpush1.msra.mxu0 0.0
    %3171 = vmatprep.subr.mxu0 0.0
    %3172 = vmatpush1.msra.mxu0 0.0
    %3173 = vmatprep.subr.mxu0 0.0
    %3174 = vmatpush1.msra.mxu0 0.0
    %3175 = vmatprep.mubr.f32.mxu0 0.0
    %3176 = vmatmul.mubr.f32.gmra.mrb[0].mxu0 %v3109
    %v3177 = vpop.f32.mrb[0].mxu0
    %v3178 = vadd.f32 0.0, %v3177
    %v3179 = vpop.f32.mrb[0].mxu0
    %3180 = vdwg.mxu0
    %v3181 = vld [vmem:[#allocation13] sm:$0xff]
    %v3182 = vld [vmem:[#allocation13 + $0x8] sm:$0xff]
    %v3183 = vld [vmem:[#allocation13 + $0x10] sm:$0xff]
    %v3184 = vld [vmem:[#allocation13 + $0x18] sm:$0xff]
    %v3185 = vld [vmem:[#allocation13 + $0x20] sm:$0xff]
    %v3186 = vld [vmem:[#allocation13 + $0x28] sm:$0xff]
    %v3187 = vld [vmem:[#allocation13 + $0x30] sm:$0xff]
    %v3188 = vld [vmem:[#allocation13 + $0x38] sm:$0xff]
    %v3189 = vld [vmem:[#allocation13 + $0x40] sm:$0xff]
    %v3190 = vld [vmem:[#allocation13 + $0x48] sm:$0xff]
    %v3191 = vld [vmem:[#allocation13 + $0x50] sm:$0xff]
    %v3192 = vld [vmem:[#allocation13 + $0x58] sm:$0xff]
    %v3193 = vld [vmem:[#allocation13 + $0x60] sm:$0xff]
    %v3194 = vld [vmem:[#allocation13 + $0x68] sm:$0xff]
    %v3195 = vld [vmem:[#allocation13 + $0x70] sm:$0xff]
    %v3196 = vld [vmem:[#allocation13 + $0x78] sm:$0xff]
    %v3198 = vsel %vm153, %v2667, 0
    %3200 = vmatprep.subr.mxu0 0.0
    %3201 = vmatpush1.msra.mxu0 %v3181
    %3202 = vmatprep.subr.mxu0 0.0
    %3203 = vmatpush1.msra.mxu0 %v3182
    %3204 = vmatprep.subr.mxu0 0.0
    %3205 = vmatpush1.msra.mxu0 %v3183
    %3206 = vmatprep.subr.mxu0 0.0
    %3207 = vmatpush1.msra.mxu0 %v3184
    %3208 = vmatprep.subr.mxu0 0.0
    %3209 = vmatpush1.msra.mxu0 0.0
    %3210 = vmatprep.subr.mxu0 0.0
    %3211 = vmatpush1.msra.mxu0 0.0
    %3212 = vmatprep.subr.mxu0 0.0
    %3213 = vmatpush1.msra.mxu0 0.0
    %3214 = vmatprep.subr.mxu0 0.0
    %3215 = vmatpush1.msra.mxu0 0.0
    %3216 = vmatprep.subr.mxu0 0.0
    %3217 = vmatpush1.msra.mxu0 0.0
    %3218 = vmatprep.subr.mxu0 0.0
    %3219 = vmatpush1.msra.mxu0 0.0
    %3220 = vmatprep.subr.mxu0 0.0
    %3221 = vmatpush1.msra.mxu0 0.0
    %3222 = vmatprep.subr.mxu0 0.0
    %3223 = vmatpush1.msra.mxu0 0.0
    %3224 = vmatprep.subr.mxu0 0.0
    %3225 = vmatpush1.msra.mxu0 0.0
    %3226 = vmatprep.subr.mxu0 0.0
    %3227 = vmatpush1.msra.mxu0 0.0
    %3228 = vmatprep.subr.mxu0 0.0
    %3229 = vmatpush1.msra.mxu0 0.0
    %3230 = vmatprep.subr.mxu0 0.0
    %3231 = vmatpush1.msra.mxu0 0.0
    %3232 = vmatprep.subr.mxu0 0.0
    %3233 = vmatpush1.msra.mxu0 0.0
    %3234 = vmatprep.subr.mxu0 0.0
    %3235 = vmatpush1.msra.mxu0 0.0
    %3236 = vmatprep.subr.mxu0 0.0
    %3237 = vmatpush1.msra.mxu0 0.0
    %3238 = vmatprep.subr.mxu0 0.0
    %3239 = vmatpush1.msra.mxu0 0.0
    %3240 = vmatprep.subr.mxu0 0.0
    %3241 = vmatpush1.msra.mxu0 0.0
    %3242 = vmatprep.subr.mxu0 0.0
    %3243 = vmatpush1.msra.mxu0 0.0
    %3244 = vmatprep.subr.mxu0 0.0
    %3245 = vmatpush1.msra.mxu0 0.0
    %3246 = vmatprep.subr.mxu0 0.0
    %3247 = vmatpush1.msra.mxu0 0.0
    %3248 = vmatprep.subr.mxu0 0.0
    %3249 = vmatpush1.msra.mxu0 0.0
    %3250 = vmatprep.subr.mxu0 0.0
    %3251 = vmatpush1.msra.mxu0 0.0
    %3252 = vmatprep.subr.mxu0 0.0
    %3253 = vmatpush1.msra.mxu0 0.0
    %3254 = vmatprep.subr.mxu0 0.0
    %3255 = vmatpush1.msra.mxu0 0.0
    %3256 = vmatprep.subr.mxu0 0.0
    %3257 = vmatpush1.msra.mxu0 0.0
    %3258 = vmatprep.subr.mxu0 0.0
    %3259 = vmatpush1.msra.mxu0 0.0
    %3260 = vmatprep.subr.mxu0 0.0
    %3261 = vmatpush1.msra.mxu0 0.0
    %3262 = vmatprep.subr.mxu0 0.0
    %3263 = vmatpush1.msra.mxu0 0.0
    %3264 = vmatprep.mubr.f32.mxu0 0.0
    %3265 = vmatmul.mubr.f32.gmra.mrb[0].mxu0 %v3198
    %v3266 = vpop.f32.mrb[0].mxu0
    %v3267 = vadd.f32 0.0, %v3266
    %v3268 = vpop.f32.mrb[0].mxu0
    %3269 = vdwg.mxu0
    %v3271 = vsel %vm153, %v2740, 0
    %3273 = vmatprep.subr.mxu0 0.0
    %3274 = vmatpush1.msra.mxu0 %v3185
    %3275 = vmatprep.subr.mxu0 0.0
    %3276 = vmatpush1.msra.mxu0 %v3186
    %3277 = vmatprep.subr.mxu0 0.0
    %3278 = vmatpush1.msra.mxu0 %v3187
    %3279 = vmatprep.subr.mxu0 0.0
    %3280 = vmatpush1.msra.mxu0 %v3188
    %3281 = vmatprep.subr.mxu0 0.0
    %3282 = vmatpush1.msra.mxu0 0.0
    %3283 = vmatprep.subr.mxu0 0.0
    %3284 = vmatpush1.msra.mxu0 0.0
    %3285 = vmatprep.subr.mxu0 0.0
    %3286 = vmatpush1.msra.mxu0 0.0
    %3287 = vmatprep.subr.mxu0 0.0
    %3288 = vmatpush1.msra.mxu0 0.0
    %3289 = vmatprep.subr.mxu0 0.0
    %3290 = vmatpush1.msra.mxu0 0.0
    %3291 = vmatprep.subr.mxu0 0.0
    %3292 = vmatpush1.msra.mxu0 0.0
    %3293 = vmatprep.subr.mxu0 0.0
    %3294 = vmatpush1.msra.mxu0 0.0
    %3295 = vmatprep.subr.mxu0 0.0
    %3296 = vmatpush1.msra.mxu0 0.0
    %3297 = vmatprep.subr.mxu0 0.0
    %3298 = vmatpush1.msra.mxu0 0.0
    %3299 = vmatprep.subr.mxu0 0.0
    %3300 = vmatpush1.msra.mxu0 0.0
    %3301 = vmatprep.subr.mxu0 0.0
    %3302 = vmatpush1.msra.mxu0 0.0
    %3303 = vmatprep.subr.mxu0 0.0
    %3304 = vmatpush1.msra.mxu0 0.0
    %3305 = vmatprep.subr.mxu0 0.0
    %3306 = vmatpush1.msra.mxu0 0.0
    %3307 = vmatprep.subr.mxu0 0.0
    %3308 = vmatpush1.msra.mxu0 0.0
    %3309 = vmatprep.subr.mxu0 0.0
    %3310 = vmatpush1.msra.mxu0 0.0
    %3311 = vmatprep.subr.mxu0 0.0
    %3312 = vmatpush1.msra.mxu0 0.0
    %3313 = vmatprep.subr.mxu0 0.0
    %3314 = vmatpush1.msra.mxu0 0.0
    %3315 = vmatprep.subr.mxu0 0.0
    %3316 = vmatpush1.msra.mxu0 0.0
    %3317 = vmatprep.subr.mxu0 0.0
    %3318 = vmatpush1.msra.mxu0 0.0
    %3319 = vmatprep.subr.mxu0 0.0
    %3320 = vmatpush1.msra.mxu0 0.0
    %3321 = vmatprep.subr.mxu0 0.0
    %3322 = vmatpush1.msra.mxu0 0.0
    %3323 = vmatprep.subr.mxu0 0.0
    %3324 = vmatpush1.msra.mxu0 0.0
    %3325 = vmatprep.subr.mxu0 0.0
    %3326 = vmatpush1.msra.mxu0 0.0
    %3327 = vmatprep.subr.mxu0 0.0
    %3328 = vmatpush1.msra.mxu0 0.0
    %3329 = vmatprep.subr.mxu0 0.0
    %3330 = vmatpush1.msra.mxu0 0.0
    %3331 = vmatprep.subr.mxu0 0.0
    %3332 = vmatpush1.msra.mxu0 0.0
    %3333 = vmatprep.subr.mxu0 0.0
    %3334 = vmatpush1.msra.mxu0 0.0
    %3335 = vmatprep.subr.mxu0 0.0
    %3336 = vmatpush1.msra.mxu0 0.0
    %3337 = vmatprep.mubr.f32.mxu0 0.0
    %3338 = vmatmul.mubr.f32.gmra.mrb[0].mxu0 %v3271
    %v3339 = vpop.f32.mrb[0].mxu0
    %v3340 = vadd.f32 0.0, %v3339
    %v3341 = vpop.f32.mrb[0].mxu0
    %3342 = vdwg.mxu0
    %v3344 = vsel %vm153, %v2813, 0
    %3346 = vmatprep.subr.mxu0 0.0
    %3347 = vmatpush1.msra.mxu0 %v3189
    %3348 = vmatprep.subr.mxu0 0.0
    %3349 = vmatpush1.msra.mxu0 %v3190
    %3350 = vmatprep.subr.mxu0 0.0
    %3351 = vmatpush1.msra.mxu0 %v3191
    %3352 = vmatprep.subr.mxu0 0.0
    %3353 = vmatpush1.msra.mxu0 %v3192
    %3354 = vmatprep.subr.mxu0 0.0
    %3355 = vmatpush1.msra.mxu0 0.0
    %3356 = vmatprep.subr.mxu0 0.0
    %3357 = vmatpush1.msra.mxu0 0.0
    %3358 = vmatprep.subr.mxu0 0.0
    %3359 = vmatpush1.msra.mxu0 0.0
    %3360 = vmatprep.subr.mxu0 0.0
    %3361 = vmatpush1.msra.mxu0 0.0
    %3362 = vmatprep.subr.mxu0 0.0
    %3363 = vmatpush1.msra.mxu0 0.0
    %3364 = vmatprep.subr.mxu0 0.0
    %3365 = vmatpush1.msra.mxu0 0.0
    %3366 = vmatprep.subr.mxu0 0.0
    %3367 = vmatpush1.msra.mxu0 0.0
    %3368 = vmatprep.subr.mxu0 0.0
    %3369 = vmatpush1.msra.mxu0 0.0
    %3370 = vmatprep.subr.mxu0 0.0
    %3371 = vmatpush1.msra.mxu0 0.0
    %3372 = vmatprep.subr.mxu0 0.0
    %3373 = vmatpush1.msra.mxu0 0.0
    %3374 = vmatprep.subr.mxu0 0.0
    %3375 = vmatpush1.msra.mxu0 0.0
    %3376 = vmatprep.subr.mxu0 0.0
    %3377 = vmatpush1.msra.mxu0 0.0
    %3378 = vmatprep.subr.mxu0 0.0
    %3379 = vmatpush1.msra.mxu0 0.0
    %3380 = vmatprep.subr.mxu0 0.0
    %3381 = vmatpush1.msra.mxu0 0.0
    %3382 = vmatprep.subr.mxu0 0.0
    %3383 = vmatpush1.msra.mxu0 0.0
    %3384 = vmatprep.subr.mxu0 0.0
    %3385 = vmatpush1.msra.mxu0 0.0
    %3386 = vmatprep.subr.mxu0 0.0
    %3387 = vmatpush1.msra.mxu0 0.0
    %3388 = vmatprep.subr.mxu0 0.0
    %3389 = vmatpush1.msra.mxu0 0.0
    %3390 = vmatprep.subr.mxu0 0.0
    %3391 = vmatpush1.msra.mxu0 0.0
    %3392 = vmatprep.subr.mxu0 0.0
    %3393 = vmatpush1.msra.mxu0 0.0
    %3394 = vmatprep.subr.mxu0 0.0
    %3395 = vmatpush1.msra.mxu0 0.0
    %3396 = vmatprep.subr.mxu0 0.0
    %3397 = vmatpush1.msra.mxu0 0.0
    %3398 = vmatprep.subr.mxu0 0.0
    %3399 = vmatpush1.msra.mxu0 0.0
    %3400 = vmatprep.subr.mxu0 0.0
    %3401 = vmatpush1.msra.mxu0 0.0
    %3402 = vmatprep.subr.mxu0 0.0
    %3403 = vmatpush1.msra.mxu0 0.0
    %3404 = vmatprep.subr.mxu0 0.0
    %3405 = vmatpush1.msra.mxu0 0.0
    %3406 = vmatprep.subr.mxu0 0.0
    %3407 = vmatpush1.msra.mxu0 0.0
    %3408 = vmatprep.subr.mxu0 0.0
    %3409 = vmatpush1.msra.mxu0 0.0
    %3410 = vmatprep.mubr.f32.mxu0 0.0
    %3411 = vmatmul.mubr.f32.gmra.mrb[0].mxu0 %v3344
    %v3412 = vpop.f32.mrb[0].mxu0
    %v3413 = vadd.f32 0.0, %v3412
    %v3414 = vpop.f32.mrb[0].mxu0
    %3415 = vdwg.mxu0
    %v3417 = vsel %vm153, %v2886, 0
    %3419 = vmatprep.subr.mxu0 0.0
    %3420 = vmatpush1.msra.mxu0 %v3193
    %3421 = vmatprep.subr.mxu0 0.0
    %3422 = vmatpush1.msra.mxu0 %v3194
    %3423 = vmatprep.subr.mxu0 0.0
    %3424 = vmatpush1.msra.mxu0 %v3195
    %3425 = vmatprep.subr.mxu0 0.0
    %3426 = vmatpush1.msra.mxu0 %v3196
    %3427 = vmatprep.subr.mxu0 0.0
    %3428 = vmatpush1.msra.mxu0 0.0
    %3429 = vmatprep.subr.mxu0 0.0
    %3430 = vmatpush1.msra.mxu0 0.0
    %3431 = vmatprep.subr.mxu0 0.0
    %3432 = vmatpush1.msra.mxu0 0.0
    %3433 = vmatprep.subr.mxu0 0.0
    %3434 = vmatpush1.msra.mxu0 0.0
    %3435 = vmatprep.subr.mxu0 0.0
    %3436 = vmatpush1.msra.mxu0 0.0
    %3437 = vmatprep.subr.mxu0 0.0
    %3438 = vmatpush1.msra.mxu0 0.0
    %3439 = vmatprep.subr.mxu0 0.0
    %3440 = vmatpush1.msra.mxu0 0.0
    %3441 = vmatprep.subr.mxu0 0.0
    %3442 = vmatpush1.msra.mxu0 0.0
    %3443 = vmatprep.subr.mxu0 0.0
    %3444 = vmatpush1.msra.mxu0 0.0
    %3445 = vmatprep.subr.mxu0 0.0
    %3446 = vmatpush1.msra.mxu0 0.0
    %3447 = vmatprep.subr.mxu0 0.0
    %3448 = vmatpush1.msra.mxu0 0.0
    %3449 = vmatprep.subr.mxu0 0.0
    %3450 = vmatpush1.msra.mxu0 0.0
    %3451 = vmatprep.subr.mxu0 0.0
    %3452 = vmatpush1.msra.mxu0 0.0
    %3453 = vmatprep.subr.mxu0 0.0
    %3454 = vmatpush1.msra.mxu0 0.0
    %3455 = vmatprep.subr.mxu0 0.0
    %3456 = vmatpush1.msra.mxu0 0.0
    %3457 = vmatprep.subr.mxu0 0.0
    %3458 = vmatpush1.msra.mxu0 0.0
    %3459 = vmatprep.subr.mxu0 0.0
    %3460 = vmatpush1.msra.mxu0 0.0
    %3461 = vmatprep.subr.mxu0 0.0
    %3462 = vmatpush1.msra.mxu0 0.0
    %3463 = vmatprep.subr.mxu0 0.0
    %3464 = vmatpush1.msra.mxu0 0.0
    %3465 = vmatprep.subr.mxu0 0.0
    %3466 = vmatpush1.msra.mxu0 0.0
    %3467 = vmatprep.subr.mxu0 0.0
    %3468 = vmatpush1.msra.mxu0 0.0
    %3469 = vmatprep.subr.mxu0 0.0
    %3470 = vmatpush1.msra.mxu0 0.0
    %3471 = vmatprep.subr.mxu0 0.0
    %3472 = vmatpush1.msra.mxu0 0.0
    %3473 = vmatprep.subr.mxu0 0.0
    %3474 = vmatpush1.msra.mxu0 0.0
    %3475 = vmatprep.subr.mxu0 0.0
    %3476 = vmatpush1.msra.mxu0 0.0
    %3477 = vmatprep.subr.mxu0 0.0
    %3478 = vmatpush1.msra.mxu0 0.0
    %3479 = vmatprep.subr.mxu0 0.0
    %3480 = vmatpush1.msra.mxu0 0.0
    %3481 = vmatprep.subr.mxu0 0.0
    %3482 = vmatpush1.msra.mxu0 0.0
    %3483 = vmatprep.mubr.f32.mxu0 0.0
    %3484 = vmatmul.mubr.f32.gmra.mrb[0].mxu0 %v3417
    %v3485 = vpop.f32.mrb[0].mxu0
    %v3486 = vadd.f32 0.0, %v3485
    %v3487 = vpop.f32.mrb[0].mxu0
    %3488 = vdwg.mxu0
    %v3490 = vsel %vm153, %v2959, 0
    %3492 = vmatprep.subr.mxu0 0.0
    %3493 = vmatpush1.msra.mxu0 %v3181
    %3494 = vmatprep.subr.mxu0 0.0
    %3495 = vmatpush1.msra.mxu0 %v3182
    %3496 = vmatprep.subr.mxu0 0.0
    %3497 = vmatpush1.msra.mxu0 %v3183
    %3498 = vmatprep.subr.mxu0 0.0
    %3499 = vmatpush1.msra.mxu0 %v3184
    %3500 = vmatprep.subr.mxu0 0.0
    %3501 = vmatpush1.msra.mxu0 0.0
    %3502 = vmatprep.subr.mxu0 0.0
    %3503 = vmatpush1.msra.mxu0 0.0
    %3504 = vmatprep.subr.mxu0 0.0
    %3505 = vmatpush1.msra.mxu0 0.0
    %3506 = vmatprep.subr.mxu0 0.0
    %3507 = vmatpush1.msra.mxu0 0.0
    %3508 = vmatprep.subr.mxu0 0.0
    %3509 = vmatpush1.msra.mxu0 0.0
    %3510 = vmatprep.subr.mxu0 0.0
    %3511 = vmatpush1.msra.mxu0 0.0
    %3512 = vmatprep.subr.mxu0 0.0
    %3513 = vmatpush1.msra.mxu0 0.0
    %3514 = vmatprep.subr.mxu0 0.0
    %3515 = vmatpush1.msra.mxu0 0.0
    %3516 = vmatprep.subr.mxu0 0.0
    %3517 = vmatpush1.msra.mxu0 0.0
    %3518 = vmatprep.subr.mxu0 0.0
    %3519 = vmatpush1.msra.mxu0 0.0
    %3520 = vmatprep.subr.mxu0 0.0
    %3521 = vmatpush1.msra.mxu0 0.0
    %3522 = vmatprep.subr.mxu0 0.0
    %3523 = vmatpush1.msra.mxu0 0.0
    %3524 = vmatprep.subr.mxu0 0.0
    %3525 = vmatpush1.msra.mxu0 0.0
    %3526 = vmatprep.subr.mxu0 0.0
    %3527 = vmatpush1.msra.mxu0 0.0
    %3528 = vmatprep.subr.mxu0 0.0
    %3529 = vmatpush1.msra.mxu0 0.0
    %3530 = vmatprep.subr.mxu0 0.0
    %3531 = vmatpush1.msra.mxu0 0.0
    %3532 = vmatprep.subr.mxu0 0.0
    %3533 = vmatpush1.msra.mxu0 0.0
    %3534 = vmatprep.subr.mxu0 0.0
    %3535 = vmatpush1.msra.mxu0 0.0
    %3536 = vmatprep.subr.mxu0 0.0
    %3537 = vmatpush1.msra.mxu0 0.0
    %3538 = vmatprep.subr.mxu0 0.0
    %3539 = vmatpush1.msra.mxu0 0.0
    %3540 = vmatprep.subr.mxu0 0.0
    %3541 = vmatpush1.msra.mxu0 0.0
    %3542 = vmatprep.subr.mxu0 0.0
    %3543 = vmatpush1.msra.mxu0 0.0
    %3544 = vmatprep.subr.mxu0 0.0
    %3545 = vmatpush1.msra.mxu0 0.0
    %3546 = vmatprep.subr.mxu0 0.0
    %3547 = vmatpush1.msra.mxu0 0.0
    %3548 = vmatprep.subr.mxu0 0.0
    %3549 = vmatpush1.msra.mxu0 0.0
    %3550 = vmatprep.subr.mxu0 0.0
    %3551 = vmatpush1.msra.mxu0 0.0
    %3552 = vmatprep.subr.mxu0 0.0
    %3553 = vmatpush1.msra.mxu0 0.0
    %3554 = vmatprep.subr.mxu0 0.0
    %3555 = vmatpush1.msra.mxu0 0.0
    %3556 = vmatprep.mubr.f32.mxu0 0.0
    %3557 = vmatmul.mubr.f32.gmra.mrb[0].mxu0 %v3490
    %v3558 = vpop.f32.mrb[0].mxu0
    %v3559 = vadd.f32 0.0, %v3558
    %v3560 = vpop.f32.mrb[0].mxu0
    %3561 = vdwg.mxu0
    %v3563 = vsel %vm153, %v3032, 0
    %3565 = vmatprep.subr.mxu0 0.0
    %3566 = vmatpush1.msra.mxu0 %v3185
    %3567 = vmatprep.subr.mxu0 0.0
    %3568 = vmatpush1.msra.mxu0 %v3186
    %3569 = vmatprep.subr.mxu0 0.0
    %3570 = vmatpush1.msra.mxu0 %v3187
    %3571 = vmatprep.subr.mxu0 0.0
    %3572 = vmatpush1.msra.mxu0 %v3188
    %3573 = vmatprep.subr.mxu0 0.0
    %3574 = vmatpush1.msra.mxu0 0.0
    %3575 = vmatprep.subr.mxu0 0.0
    %3576 = vmatpush1.msra.mxu0 0.0
    %3577 = vmatprep.subr.mxu0 0.0
    %3578 = vmatpush1.msra.mxu0 0.0
    %3579 = vmatprep.subr.mxu0 0.0
    %3580 = vmatpush1.msra.mxu0 0.0
    %3581 = vmatprep.subr.mxu0 0.0
    %3582 = vmatpush1.msra.mxu0 0.0
    %3583 = vmatprep.subr.mxu0 0.0
    %3584 = vmatpush1.msra.mxu0 0.0
    %3585 = vmatprep.subr.mxu0 0.0
    %3586 = vmatpush1.msra.mxu0 0.0
    %3587 = vmatprep.subr.mxu0 0.0
    %3588 = vmatpush1.msra.mxu0 0.0
    %3589 = vmatprep.subr.mxu0 0.0
    %3590 = vmatpush1.msra.mxu0 0.0
    %3591 = vmatprep.subr.mxu0 0.0
    %3592 = vmatpush1.msra.mxu0 0.0
    %3593 = vmatprep.subr.mxu0 0.0
    %3594 = vmatpush1.msra.mxu0 0.0
    %3595 = vmatprep.subr.mxu0 0.0
    %3596 = vmatpush1.msra.mxu0 0.0
    %3597 = vmatprep.subr.mxu0 0.0
    %3598 = vmatpush1.msra.mxu0 0.0
    %3599 = vmatprep.subr.mxu0 0.0
    %3600 = vmatpush1.msra.mxu0 0.0
    %3601 = vmatprep.subr.mxu0 0.0
    %3602 = vmatpush1.msra.mxu0 0.0
    %3603 = vmatprep.subr.mxu0 0.0
    %3604 = vmatpush1.msra.mxu0 0.0
    %3605 = vmatprep.subr.mxu0 0.0
    %3606 = vmatpush1.msra.mxu0 0.0
    %3607 = vmatprep.subr.mxu0 0.0
    %3608 = vmatpush1.msra.mxu0 0.0
    %3609 = vmatprep.subr.mxu0 0.0
    %3610 = vmatpush1.msra.mxu0 0.0
    %3611 = vmatprep.subr.mxu0 0.0
    %3612 = vmatpush1.msra.mxu0 0.0
    %3613 = vmatprep.subr.mxu0 0.0
    %3614 = vmatpush1.msra.mxu0 0.0
    %3615 = vmatprep.subr.mxu0 0.0
    %3616 = vmatpush1.msra.mxu0 0.0
    %3617 = vmatprep.subr.mxu0 0.0
    %3618 = vmatpush1.msra.mxu0 0.0
    %3619 = vmatprep.subr.mxu0 0.0
    %3620 = vmatpush1.msra.mxu0 0.0
    %3621 = vmatprep.subr.mxu0 0.0
    %3622 = vmatpush1.msra.mxu0 0.0
    %3623 = vmatprep.subr.mxu0 0.0
    %3624 = vmatpush1.msra.mxu0 0.0
    %3625 = vmatprep.subr.mxu0 0.0
    %3626 = vmatpush1.msra.mxu0 0.0
    %3627 = vmatprep.subr.mxu0 0.0
    %3628 = vmatpush1.msra.mxu0 0.0
    %3629 = vmatprep.mubr.f32.mxu0 0.0
    %3630 = vmatmul.mubr.f32.gmra.mrb[0].mxu0 %v3563
    %v3631 = vpop.f32.mrb[0].mxu0
    %v3632 = vadd.f32 0.0, %v3631
    %v3633 = vpop.f32.mrb[0].mxu0
    %3634 = vdwg.mxu0
    %v3636 = vsel %vm153, %v3105, 0
    %3638 = vmatprep.subr.mxu0 0.0
    %3639 = vmatpush1.msra.mxu0 %v3189
    %3640 = vmatprep.subr.mxu0 0.0
    %3641 = vmatpush1.msra.mxu0 %v3190
    %3642 = vmatprep.subr.mxu0 0.0
    %3643 = vmatpush1.msra.mxu0 %v3191
    %3644 = vmatprep.subr.mxu0 0.0
    %3645 = vmatpush1.msra.mxu0 %v3192
    %3646 = vmatprep.subr.mxu0 0.0
    %3647 = vmatpush1.msra.mxu0 0.0
    %3648 = vmatprep.subr.mxu0 0.0
    %3649 = vmatpush1.msra.mxu0 0.0
    %3650 = vmatprep.subr.mxu0 0.0
    %3651 = vmatpush1.msra.mxu0 0.0
    %3652 = vmatprep.subr.mxu0 0.0
    %3653 = vmatpush1.msra.mxu0 0.0
    %3654 = vmatprep.subr.mxu0 0.0
    %3655 = vmatpush1.msra.mxu0 0.0
    %3656 = vmatprep.subr.mxu0 0.0
    %3657 = vmatpush1.msra.mxu0 0.0
    %3658 = vmatprep.subr.mxu0 0.0
    %3659 = vmatpush1.msra.mxu0 0.0
    %3660 = vmatprep.subr.mxu0 0.0
    %3661 = vmatpush1.msra.mxu0 0.0
    %3662 = vmatprep.subr.mxu0 0.0
    %3663 = vmatpush1.msra.mxu0 0.0
    %3664 = vmatprep.subr.mxu0 0.0
    %3665 = vmatpush1.msra.mxu0 0.0
    %3666 = vmatprep.subr.mxu0 0.0
    %3667 = vmatpush1.msra.mxu0 0.0
    %3668 = vmatprep.subr.mxu0 0.0
    %3669 = vmatpush1.msra.mxu0 0.0
    %3670 = vmatprep.subr.mxu0 0.0
    %3671 = vmatpush1.msra.mxu0 0.0
    %3672 = vmatprep.subr.mxu0 0.0
    %3673 = vmatpush1.msra.mxu0 0.0
    %3674 = vmatprep.subr.mxu0 0.0
    %3675 = vmatpush1.msra.mxu0 0.0
    %3676 = vmatprep.subr.mxu0 0.0
    %3677 = vmatpush1.msra.mxu0 0.0
    %3678 = vmatprep.subr.mxu0 0.0
    %3679 = vmatpush1.msra.mxu0 0.0
    %3680 = vmatprep.subr.mxu0 0.0
    %3681 = vmatpush1.msra.mxu0 0.0
    %3682 = vmatprep.subr.mxu0 0.0
    %3683 = vmatpush1.msra.mxu0 0.0
    %3684 = vmatprep.subr.mxu0 0.0
    %3685 = vmatpush1.msra.mxu0 0.0
    %3686 = vmatprep.subr.mxu0 0.0
    %3687 = vmatpush1.msra.mxu0 0.0
    %3688 = vmatprep.subr.mxu0 0.0
    %3689 = vmatpush1.msra.mxu0 0.0
    %3690 = vmatprep.subr.mxu0 0.0
    %3691 = vmatpush1.msra.mxu0 0.0
    %3692 = vmatprep.subr.mxu0 0.0
    %3693 = vmatpush1.msra.mxu0 0.0
    %3694 = vmatprep.subr.mxu0 0.0
    %3695 = vmatpush1.msra.mxu0 0.0
    %3696 = vmatprep.subr.mxu0 0.0
    %3697 = vmatpush1.msra.mxu0 0.0
    %3698 = vmatprep.subr.mxu0 0.0
    %3699 = vmatpush1.msra.mxu0 0.0
    %3700 = vmatprep.subr.mxu0 0.0
    %3701 = vmatpush1.msra.mxu0 0.0
    %3702 = vmatprep.mubr.f32.mxu0 0.0
    %3703 = vmatmul.mubr.f32.gmra.mrb[0].mxu0 %v3636
    %v3704 = vpop.f32.mrb[0].mxu0
    %v3705 = vadd.f32 0.0, %v3704
    %v3706 = vpop.f32.mrb[0].mxu0
    %3707 = vdwg.mxu0
    %v3709 = vsel %vm153, %v3178, 0
    %3711 = vmatprep.subr.mxu0 0.0
    %3712 = vmatpush1.msra.mxu0 %v3193
    %3713 = vmatprep.subr.mxu0 0.0
    %3714 = vmatpush1.msra.mxu0 %v3194
    %3715 = vmatprep.subr.mxu0 0.0
    %3716 = vmatpush1.msra.mxu0 %v3195
    %3717 = vmatprep.subr.mxu0 0.0
    %3718 = vmatpush1.msra.mxu0 %v3196
    %3719 = vmatprep.subr.mxu0 0.0
    %3720 = vmatpush1.msra.mxu0 0.0
    %3721 = vmatprep.subr.mxu0 0.0
    %3722 = vmatpush1.msra.mxu0 0.0
    %3723 = vmatprep.subr.mxu0 0.0
    %3724 = vmatpush1.msra.mxu0 0.0
    %3725 = vmatprep.subr.mxu0 0.0
    %3726 = vmatpush1.msra.mxu0 0.0
    %3727 = vmatprep.subr.mxu0 0.0
    %3728 = vmatpush1.msra.mxu0 0.0
    %3729 = vmatprep.subr.mxu0 0.0
    %3730 = vmatpush1.msra.mxu0 0.0
    %3731 = vmatprep.subr.mxu0 0.0
    %3732 = vmatpush1.msra.mxu0 0.0
    %3733 = vmatprep.subr.mxu0 0.0
    %3734 = vmatpush1.msra.mxu0 0.0
    %3735 = vmatprep.subr.mxu0 0.0
    %3736 = vmatpush1.msra.mxu0 0.0
    %3737 = vmatprep.subr.mxu0 0.0
    %3738 = vmatpush1.msra.mxu0 0.0
    %3739 = vmatprep.subr.mxu0 0.0
    %3740 = vmatpush1.msra.mxu0 0.0
    %3741 = vmatprep.subr.mxu0 0.0
    %3742 = vmatpush1.msra.mxu0 0.0
    %3743 = vmatprep.subr.mxu0 0.0
    %3744 = vmatpush1.msra.mxu0 0.0
    %3745 = vmatprep.subr.mxu0 0.0
    %3746 = vmatpush1.msra.mxu0 0.0
    %3747 = vmatprep.subr.mxu0 0.0
    %3748 = vmatpush1.msra.mxu0 0.0
    %3749 = vmatprep.subr.mxu0 0.0
    %3750 = vmatpush1.msra.mxu0 0.0
    %3751 = vmatprep.subr.mxu0 0.0
    %3752 = vmatpush1.msra.mxu0 0.0
    %3753 = vmatprep.subr.mxu0 0.0
    %3754 = vmatpush1.msra.mxu0 0.0
    %3755 = vmatprep.subr.mxu0 0.0
    %3756 = vmatpush1.msra.mxu0 0.0
    %3757 = vmatprep.subr.mxu0 0.0
    %3758 = vmatpush1.msra.mxu0 0.0
    %3759 = vmatprep.subr.mxu0 0.0
    %3760 = vmatpush1.msra.mxu0 0.0
    %3761 = vmatprep.subr.mxu0 0.0
    %3762 = vmatpush1.msra.mxu0 0.0
    %3763 = vmatprep.subr.mxu0 0.0
    %3764 = vmatpush1.msra.mxu0 0.0
    %3765 = vmatprep.subr.mxu0 0.0
    %3766 = vmatpush1.msra.mxu0 0.0
    %3767 = vmatprep.subr.mxu0 0.0
    %3768 = vmatpush1.msra.mxu0 0.0
    %3769 = vmatprep.subr.mxu0 0.0
    %3770 = vmatpush1.msra.mxu0 0.0
    %3771 = vmatprep.subr.mxu0 0.0
    %3772 = vmatpush1.msra.mxu0 0.0
    %3773 = vmatprep.subr.mxu0 0.0
    %3774 = vmatpush1.msra.mxu0 0.0
    %3775 = vmatprep.mubr.f32.mxu0 0.0
    %3776 = vmatmul.mubr.f32.gmra.mrb[0].mxu0 %v3709
    %v3777 = vpop.f32.mrb[0].mxu0
    %v3778 = vadd.f32 0.0, %v3777
    %v3779 = vpop.f32.mrb[0].mxu0
    %3780 = vdwg.mxu0
    %v3781 = vsel %vm153, %v3267, 0.0
    %v3782 = vsel %vm153, %v3340, 0.0
    %v3783 = vadd.f32 %v3781, %v3782
    %v3784 = vsel %vm153, %v3413, 0.0
    %v3785 = vadd.f32 %v3783, %v3784
    %v3786 = vsel %vm153, %v3486, 0.0
    %v3787 = vadd.f32 %v3785, %v3786
    %v3788 = vsel %vm153, %v3559, 0.0
    %v3789 = vsel %vm153, %v3632, 0.0
    %v3790 = vadd.f32 %v3788, %v3789
    %v3791 = vsel %vm153, %v3705, 0.0
    %v3792 = vadd.f32 %v3790, %v3791
    %v3793 = vsel %vm153, %v3778, 0.0
    %v3794 = vadd.f32 %v3792, %v3793
    %v3795 = vadd.f32 %v3787, %v131
    %v3796 = vadd.f32 %v3794, %v132
    %v3797 = vsel %vm153, %v3795, 0.0
    %3798 = vadd.xlane.f32.xlu0 %v3797
    %v3799 = vpop.xlane.xlu0 %3798
    %v3800 = vsel %vm153, %v3796, 0.0
    %3801 = vadd.xlane.f32.xlu0 %v3800
    %v3802 = vpop.xlane.xlu0 %3801
    %v3803 = vrcp.pop 32.0
    %v3804 = vmul.f32 %v3799, %v3803
    %v3805 = vmul.f32 %v3802, %v3803
    %v3806 = vsub.f32 %v3795, %v3804
    %v3807 = vsub.f32 %v3796, %v3805
    %v3808 = vmul.f32 %v3806, %v3806
    %v3809 = vmul.f32 %v3807, %v3807
    %v3810 = vsel %vm153, %v3808, 0.0
    %3811 = vadd.xlane.f32.xlu0 %v3810
    %v3812 = vpop.xlane.xlu0 %3811
    %v3813 = vsel %vm153, %v3809, 0.0
    %3814 = vadd.xlane.f32.xlu0 %v3813
    %v3815 = vpop.xlane.xlu0 %3814
    %v3816 = vmul.f32 %v3812, %v3803
    %v3817 = vmul.f32 %v3815, %v3803
    %v3818 = vadd.f32 %v3816, 1e-06
    %v3819 = vadd.f32 %v3817, 1e-06
    %v3820 = vrsqrt.pop %v3818
    %v3821 = vrsqrt.pop %v3819
    %v3822 = vmul.f32 %v3806, %v3820
    %v3823 = vmul.f32 %v3807, %v3821
    %v3824 = vld [vmem:[%s7] sm:$0x1]
    %v3826 = vlaneseq
    %v3827 = vshrl.u32 %v3826, 7
    %v3828 = vsub.s32 0, %v3827
    %v3829 = vrot.slane %v3824, %v3828
    %v3831 = vmul.f32 %v3822, %v3829
    %v3832 = vmul.f32 %v3823, %v3829
    %v3833 = vld [vmem:[%s8] sm:$0x1]
    %v3835 = vlaneseq
    %v3836 = vshrl.u32 %v3835, 7
    %v3837 = vsub.s32 0, %v3836
    %v3838 = vrot.slane %v3833, %v3837
    %v3840 = vadd.f32 %v3831, %v3838
    %v3841 = vadd.f32 %v3832, %v3838
    %3842 = vst.msk [vmem:[#allocation14] sm:$0xff] %vm153, %v3840
    %3843 = vst.msk [vmem:[#allocation14 + $0x8] sm:$0xff] %vm153, %v3841
    // Predicated region
    $region66: #{tpu_custom_call.1} parent=1 // pred_check
      _
    $region67: #{tpu_custom_call.1} parent=1 // pred_check_branch
      %3845 = sbr.rel (0) target = $region69
    $region68: #{tpu_custom_call.1} parent=1 // pred_region
      %s3847 = ssub.s32 256, 256
      %3848 = vsyncadd [#allocation4], %s3847
      %s3849 = sshll.u32 [#allocation14], 4
      %s3850 = int_to_ptr.vmem [resolvable:$true] %s3849
      %3855 = dma.vmem_to_hbm [thread:$0]  %s3850, 256, %s9, [#allocation4], 128, 128, 8
    $region69: #{tpu_custom_call.1} parent=1 // pred_fallthru
      _
    // Predicated region
    $region70: #{tpu_custom_call.1} parent=1 // pred_check
      _
    $region71: #{tpu_custom_call.1} parent=1 // pred_check_branch
      %3857 = sbr.rel (0) target = $region73
    $region72: #{tpu_custom_call.1} parent=1 // pred_region
      %s3859 = ssub.s32 1024, 1024
      %3860 = vsyncadd [#allocation16], %s3859
      %s3861 = sshll.u32 [#allocation15], 4
      %s3862 = int_to_ptr.vmem [resolvable:$true] %s3861
      %3867 = dma.vmem_to_hbm [thread:$0]  %s3862, 1024, %s10, [#allocation16], 128, 128, 8
    $region73: #{tpu_custom_call.1} parent=1 // pred_fallthru
      _
    // Predicated region
    $region74: #{tpu_custom_call.1} parent=1 // pred_check
      _
    $region75: #{tpu_custom_call.1} parent=1 // pred_check_branch
      %3869 = sbr.rel (0) target = $region77
    $region76: #{tpu_custom_call.1} parent=1 // pred_region
      %3870 = dma.done [#allocation4], 256
    $region77: #{tpu_custom_call.1} parent=1 // pred_fallthru
      _
    // Predicated region
    $region78: #{tpu_custom_call.1} parent=1 // pred_check
      _
    $region79: #{tpu_custom_call.1} parent=1 // pred_check_branch
      %3872 = sbr.rel (0) target = $region81
    $region80: #{tpu_custom_call.1} parent=1 // pred_region
      %3873 = dma.done [#allocation16], 1024
    $region81: #{tpu_custom_call.1} parent=1 // pred_fallthru
      _
    %3874 = vsyncpa [#allocation3], 1
    %3875 = vsyncpa [#allocation6], 1
    %3876 = vsyncpa [#allocation9], 1
    %3877 = vsyncpa [#allocation12], 1
    %3878 = vsyncpa [#allocation4], 1
    %3879 = vsyncpa [#allocation16], 1

</llo_original>
